<compile_context>
chip_gen: v7x
topology: tpu7x:2x2x1
jax: 0.10.0
libtpu: 0.0.40
codegen_flags: <defaults>
</compile_context>

<pallas_src>
import functools

import jax
import jax.numpy as jnp
from jax import lax
from jax.experimental import pallas as pl
from jax.experimental.pallas import tpu as pltpu


def _round_up(x, m):
    return -(-x // m) * m


# --------------------------------------------------------------------------
# Fused residual-block kernel: one batch element per grid step.
# Refs: xph, w1, b1, w2, b2, [wsc, bsc,] out, y_scratch
# --------------------------------------------------------------------------
def _residual_block_kernel(*refs, stride, identity_shortcut, wo_valid):
    if identity_shortcut:
        (xph_ref, w1_ref, b1_ref, w2_ref, b2_ref, o_ref, y_ref) = refs
        wsc_ref = bsc_ref = None
    else:
        (xph_ref, w1_ref, b1_ref, w2_ref, b2_ref, wsc_ref, bsc_ref,
         o_ref, y_ref) = refs

    s = stride
    _, Ho, Wop, Cpo = o_ref.shape            # Wop is a multiple of 8 (padded)
    Cpi = xph_ref.shape[-1]                  # multiple of 128 (padded)
    Wyp = y_ref.shape[1]
    mm_dtype = w1_ref.dtype                  # f32 or bf16 (MXU operand dtype)

    # ---- conv1 (stride s, BN scale pre-folded into w1) + bias + ReLU -------
    # Phase split: xph[p*s+q, i, j, c] == xpad[s*i+p, s*j+q, c], so the tap
    # (kh, kw) of output (i, j) is a contiguous unit-stride slice of one phase.
    acc1 = None
    for kh in range(3):
        p, dh = kh % s, kh // s
        for kw in range(3):
            q, dw = kw % s, kw // s
            patch = xph_ref[p * s + q, dh:dh + Ho, dw:dw + Wop, :]
            patch = patch.reshape(Ho * Wop, Cpi).astype(mm_dtype)
            t = jnp.dot(patch, w1_ref[kh, kw],
                        preferred_element_type=jnp.float32)
            acc1 = t if acc1 is None else acc1 + t
    out1 = jnp.maximum(acc1 + b1_ref[...], 0.0)          # (Ho*Wop, Cpo) f32

    # Stage out1 in VMEM with a 1-pixel zero halo for conv2 (padding=1); the
    # intermediate never touches HBM.  Zero only the border strips (row 0,
    # row Ho+1, col 0, cols >= wo_valid+1); the interior is fully overwritten.
    y_ref[0:1, :, :] = jnp.zeros((1, Wyp, Cpo), jnp.float32)
    y_ref[Ho + 1:Ho + 2, :, :] = jnp.zeros((1, Wyp, Cpo), jnp.float32)
    y_ref[:, 0:1, :] = jnp.zeros((Ho + 2, 1, Cpo), jnp.float32)
    y_ref[:, wo_valid + 1:Wyp, :] = jnp.zeros(
        (Ho + 2, Wyp - wo_valid - 1, Cpo), jnp.float32)
    y_ref[1:Ho + 1, 1:wo_valid + 1, :] = (
        out1.reshape(Ho, Wop, Cpo)[:, :wo_valid, :])

    # ---- conv2 (stride 1, BN scale pre-folded into w2) + bias --------------
    acc2 = None
    for kh in range(3):
        for kw in range(3):
            patch = y_ref[kh:kh + Ho, kw:kw + Wop, :]
            patch = patch.reshape(Ho * Wop, Cpo).astype(mm_dtype)
            t = jnp.dot(patch, w2_ref[kh, kw],
                        preferred_element_type=jnp.float32)
            acc2 = t if acc2 is None else acc2 + t
    main = acc2 + b2_ref[...]

    # ---- shortcut -----------------------------------------------------------
    # x[s*i, s*j] == xpad[s*i + 1, s*j + 1]  ->  phase (1%s, 1%s), offset 1//s.
    p, dh = 1 % s, 1 // s
    q, dw = 1 % s, 1 // s
    xs = xph_ref[p * s + q, dh:dh + Ho, dw:dw + Wop, :].reshape(Ho * Wop, Cpi)
    if identity_shortcut:
        sc = xs                                           # Cin==Cout, stride==1
    else:
        sc = jnp.dot(xs.astype(mm_dtype), wsc_ref[...],
                     preferred_element_type=jnp.float32) + bsc_ref[...]

    out = jnp.maximum(main + sc, 0.0)
    o_ref[0] = out.reshape(Ho, Wop, Cpo).astype(o_ref.dtype)


# --------------------------------------------------------------------------
# Wrapper
# --------------------------------------------------------------------------
@functools.partial(jax.jit, static_argnames=("stride", "use_bf16"))
def residual_block_forward(x_nchw, params, stride=1, use_bf16=False):
    x = jnp.transpose(x_nchw, (0, 2, 3, 1)).astype(jnp.float32)   # NCHW -> NHWC
    N, H, W, Cin = x.shape
    s = int(stride)
    w1, w2 = params["w1"], params["w2"]
    Cout = w1.shape[-1]
    identity = (s == 1) and (Cin == Cout)

    # Lane-dense channel padding (channels live on the 128-lane axis).
    LANE = 128
    Cpi = _round_up(Cin, LANE)
    Cpo = _round_up(Cout, LANE)

    Ho = -(-H // s)                     # = floor((H-1)/s) + 1
    Wo = -(-W // s)
    Wop = _round_up(Wo, 8)              # padded output width -> tile-aligned
    halo = 2 // s                       # max kernel-row offset after phase split
    Hps = max(Ho + halo, -(-(H + 2) // s))
    Wps = max(Wop + halo, -(-(W + 2) // s))

    mm_dtype = jnp.bfloat16 if use_bf16 else jnp.float32

    # Fold eval-mode BN scale into the conv weights, pad channels, cast.
    w1f = jnp.pad((w1 * params["s1"]).astype(jnp.float32),
                  ((0, 0), (0, 0), (0, Cpi - Cin), (0, Cpo - Cout))).astype(mm_dtype)
    w2f = jnp.pad((w2 * params["s2"]).astype(jnp.float32),
                  ((0, 0), (0, 0), (0, Cpo - Cout), (0, Cpo - Cout))).astype(mm_dtype)
    b1 = jnp.pad(params["b1"].astype(jnp.float32), (0, Cpo - Cout)).reshape(1, Cpo)
    b2 = jnp.pad(params["b2"].astype(jnp.float32), (0, Cpo - Cout)).reshape(1, Cpo)

    # Pad (conv padding=1 + alignment) and phase-split so the kernel never
    # needs strided loads:
    #   xph[n*s*s + p*s + q, i, j, c] = xpad[n, s*i + p, s*j + q, c]
    xpad = jnp.pad(x, ((0, 0), (1, s * Hps - H - 1), (1, s * Wps - W - 1),
                       (0, Cpi - Cin)))
    xph = (xpad.reshape(N, Hps, s, Wps, s, Cpi)
               .transpose(0, 2, 4, 1, 3, 5)
               .reshape(N * s * s, Hps, Wps, Cpi))

    kernel = functools.partial(_residual_block_kernel, stride=s,
                               identity_shortcut=identity, wo_valid=Wo)

    # NOTE: weight/bias index maps are constant across the grid; a shallower
    # pipeline (pl.Buffered(1)) would save their second VMEM buffer on v7x.
    in_specs = [
        pl.BlockSpec((s * s, Hps, Wps, Cpi), lambda n: (n, 0, 0, 0)),
        pl.BlockSpec((3, 3, Cpi, Cpo), lambda n: (0, 0, 0, 0)),
        pl.BlockSpec((1, Cpo), lambda n: (0, 0)),
        pl.BlockSpec((3, 3, Cpo, Cpo), lambda n: (0, 0, 0, 0)),
        pl.BlockSpec((1, Cpo), lambda n: (0, 0)),
    ]
    args = [xph, w1f, b1, w2f, b2]
    if not identity:
        wscf = jnp.pad((params["wsc"] * params["ssc"]).astype(jnp.float32),
                       ((0, Cpi - Cin), (0, Cpo - Cout))).astype(mm_dtype)
        bsc = jnp.pad(params["bsc"].astype(jnp.float32),
                      (0, Cpo - Cout)).reshape(1, Cpo)
        in_specs += [pl.BlockSpec((Cpi, Cpo), lambda n: (0, 0)),
                     pl.BlockSpec((1, Cpo), lambda n: (0, 0))]
        args += [wscf, bsc]

    Wyp = _round_up(Wop + 2, 8)         # halo'd staging buffer width

    out = pl.pallas_call(
        kernel,
        out_shape=jax.ShapeDtypeStruct((N, Ho, Wop, Cpo), jnp.float32),
        grid=(N,),
        in_specs=in_specs,
        out_specs=pl.BlockSpec((1, Ho, Wop, Cpo), lambda n: (n, 0, 0, 0)),
        scratch_shapes=[pltpu.VMEM((Ho + 2, Wyp, Cpo), jnp.float32)],  # out1+halo
        compiler_params=pltpu.CompilerParams(
            dimension_semantics=("parallel",),
            vmem_limit_bytes=32 * 1024 * 1024),
    )(*args)

    out = out[:, :, :Wo, :Cout]                            # drop padded cols/chans
    return jnp.transpose(out, (0, 3, 1, 2))                # NHWC -> NCHW


# --------------------------------------------------------------------------
# Deterministic parameter init (eval-mode BN folded into scale/bias)
# --------------------------------------------------------------------------
def make_params(key, in_channels, out_channels, stride):
    eps = 1e-5
    keys = jax.random.split(key, 6)

    def folded_bn(k):
        kg, kb, km, kv = jax.random.split(k, 4)
        gamma = jax.random.uniform(kg, (out_channels,), minval=0.5, maxval=1.5)
        beta = 0.1 * jax.random.normal(kb, (out_channels,))
        mean = 0.1 * jax.random.normal(km, (out_channels,))
        var = jax.random.uniform(kv, (out_channels,), minval=0.5, maxval=1.5)
        scale = gamma / jnp.sqrt(var + eps)
        bias = beta - mean * scale
        return scale.astype(jnp.float32), bias.astype(jnp.float32)

    w1 = 0.1 * jax.random.normal(keys[0], (3, 3, in_channels, out_channels), jnp.float32)
    w2 = 0.1 * jax.random.normal(keys[1], (3, 3, out_channels, out_channels), jnp.float32)
    s1, b1 = folded_bn(keys[2])
    s2, b2 = folded_bn(keys[3])
    p = dict(w1=w1, w2=w2, s1=s1, b1=b1, s2=s2, b2=b2)
    if stride != 1 or in_channels != out_channels:
        p["wsc"] = 0.1 * jax.random.normal(keys[4], (in_channels, out_channels), jnp.float32)
        ssc, bsc = folded_bn(keys[5])
        p["ssc"], p["bsc"] = ssc, bsc
    return p


# --------------------------------------------------------------------------
# Pure-JAX reference (same eval-mode BN semantics) for validation
# --------------------------------------------------------------------------
def ref_residual_block(x_nchw, params, stride):
    x = jnp.transpose(x_nchw, (0, 2, 3, 1)).astype(jnp.float32)
    dn = ("NHWC", "HWIO", "NHWC")

    def conv3(v, w, s):
        return lax.conv_general_dilated(v, w, (s, s), ((1, 1), (1, 1)),
                                        dimension_numbers=dn)

    y = conv3(x, params["w1"], stride) * params["s1"] + params["b1"]
    y = jnp.maximum(y, 0.0)
    z = conv3(y, params["w2"], 1) * params["s2"] + params["b2"]

    Cin, Cout = x.shape[-1], params["w1"].shape[-1]
    if stride != 1 or Cin != Cout:
        sc = lax.conv_general_dilated(x, params["wsc"][None, None],
                                      (stride, stride), ((0, 0), (0, 0)),
                                      dimension_numbers=dn)
        sc = sc * params["ssc"] + params["bsc"]
    else:
        sc = x
    out = jnp.maximum(z + sc, 0.0)
    return jnp.transpose(out, (0, 3, 1, 2))


if __name__ == "__main__":
    key = jax.random.PRNGKey(0)
    k1, k2, k3, k4 = jax.random.split(key, 4)

    # ---- config 1: projection shortcut (stride=2, Cin != Cout), f32 --------
    N, Cin, Cout, H, W, stride = 2, 4, 8, 16, 16, 2
    params = make_params(k1, Cin, Cout, stride)
    x = jax.random.normal(k2, (N, Cin, H, W), jnp.float32)     # PyTorch NCHW input

    out = jax.block_until_ready(residual_block_forward(x, params, stride=stride))
    ref = ref_residual_block(x, params, stride)
    assert out.shape == ref.shape == (N, Cout, H // stride, W // stride), out.shape
    err = float(jnp.max(jnp.abs(out - ref)))
    assert err < 1e-3, f"projection-shortcut max abs error {err}"

    # ---- config 2: identity shortcut (stride=1, Cin == Cout), f32 ----------
    params2 = make_params(k3, 8, 8, 1)
    x2 = jax.random.normal(k4, (N, 8, H, W), jnp.float32)

    out2 = jax.block_until_ready(residual_block_forward(x2, params2, stride=1))
    ref2 = ref_residual_block(x2, params2, 1)
    assert out2.shape == ref2.shape == (N, 8, H, W), out2.shape
    err2 = float(jnp.max(jnp.abs(out2 - ref2)))
    assert err2 < 1e-3, f"identity-shortcut max abs error {err2}"

    # ---- config 3: bf16 MXU path (v6e/v7x optimization); looser tolerance --
    out3 = jax.block_until_ready(
        residual_block_forward(x, params, stride=stride, use_bf16=True))
    err3 = float(jnp.max(jnp.abs(out3 - ref)))
    assert out3.shape == ref.shape, out3.shape
    assert err3 < 1e-1, f"bf16 path max abs error {err3}"    # bf16 matmul ~1e-2 accuracy

    print("KERNEL_OK")
</pallas_src>

<mosaic_0001>
module attributes {stable_mosaic.version = 11 : i64} {
  func.func @_residual_block_kernel(%arg0: i32, %arg1: memref<4x9x9x128xf32, #tpu.memory_space<vmem>>, %arg2: memref<3x3x128x128xf32, #tpu.memory_space<vmem>>, %arg3: memref<1x128xf32, #tpu.memory_space<vmem>>, %arg4: memref<3x3x128x128xf32, #tpu.memory_space<vmem>>, %arg5: memref<1x128xf32, #tpu.memory_space<vmem>>, %arg6: memref<128x128xf32, #tpu.memory_space<vmem>>, %arg7: memref<1x128xf32, #tpu.memory_space<vmem>>, %arg8: memref<1x8x8x128xf32, #tpu.memory_space<vmem>>, %arg9: memref<10x16x128xf32, #tpu.memory_space<vmem>>) attributes {dimension_semantics = [#tpu.dimension_semantics<parallel>], iteration_bounds = array<i64: 2>, scalar_prefetch = 0 : i64, scratch_operands = 1 : i64, tpu.core_type = #tpu.core_type<tc>, window_params = [{transform_indices = @transform_0, window_bounds = array<i64: 4, 9, 9, 128>}, {pipeline_mode = #tpu.pipeline_mode<synchronous>, transform_indices = @transform_1, window_bounds = array<i64: 3, 3, 128, 128>}, {pipeline_mode = #tpu.pipeline_mode<synchronous>, transform_indices = @transform_2, window_bounds = array<i64: 1, 128>}, {pipeline_mode = #tpu.pipeline_mode<synchronous>, transform_indices = @transform_3, window_bounds = array<i64: 3, 3, 128, 128>}, {pipeline_mode = #tpu.pipeline_mode<synchronous>, transform_indices = @transform_4, window_bounds = array<i64: 1, 128>}, {pipeline_mode = #tpu.pipeline_mode<synchronous>, transform_indices = @transform_5, window_bounds = array<i64: 128, 128>}, {pipeline_mode = #tpu.pipeline_mode<synchronous>, transform_indices = @transform_6, window_bounds = array<i64: 1, 128>}, {transform_indices = @transform_7, window_bounds = array<i64: 1, 8, 8, 128>}]} {
    %c0 = arith.constant 0 : index
    %c0_0 = arith.constant 0 : index
    %c0_1 = arith.constant 0 : index
    %c0_2 = arith.constant 0 : index
    %0 = vector.load %arg1[%c0, %c0_0, %c0_1, %c0_2] : memref<4x9x9x128xf32, #tpu.memory_space<vmem>>, vector<1x8x8x128xf32>
    %1 = vector.shape_cast %0 : vector<1x8x8x128xf32> to vector<8x8x128xf32>
    %2 = vector.shape_cast %1 : vector<8x8x128xf32> to vector<64x128xf32>
    %c0_3 = arith.constant 0 : index
    %c0_4 = arith.constant 0 : index
    %c0_5 = arith.constant 0 : index
    %c0_6 = arith.constant 0 : index
    %3 = vector.load %arg2[%c0_3, %c0_4, %c0_5, %c0_6] : memref<3x3x128x128xf32, #tpu.memory_space<vmem>>, vector<1x1x128x128xf32>
    %4 = vector.shape_cast %3 : vector<1x1x128x128xf32> to vector<128x128xf32>
    %cst = arith.constant dense<0.000000e+00> : vector<64x128xf32>
    %5 = tpu.matmul %2, %4, %cst {dimension_numbers = #tpu.dot_dimension_numbers<[1], [0], [0], [1], [0, 0, 1, 1], [], []>} : vector<64x128xf32>, vector<128x128xf32>, vector<64x128xf32> -> vector<64x128xf32>
    %c1 = arith.constant 1 : index
    %c0_7 = arith.constant 0 : index
    %c0_8 = arith.constant 0 : index
    %c0_9 = arith.constant 0 : index
    %6 = vector.load %arg1[%c1, %c0_7, %c0_8, %c0_9] : memref<4x9x9x128xf32, #tpu.memory_space<vmem>>, vector<1x8x8x128xf32>
    %7 = vector.shape_cast %6 : vector<1x8x8x128xf32> to vector<8x8x128xf32>
    %8 = vector.shape_cast %7 : vector<8x8x128xf32> to vector<64x128xf32>
    %c0_10 = arith.constant 0 : index
    %c1_11 = arith.constant 1 : index
    %c0_12 = arith.constant 0 : index
    %c0_13 = arith.constant 0 : index
    %9 = vector.load %arg2[%c0_10, %c1_11, %c0_12, %c0_13] : memref<3x3x128x128xf32, #tpu.memory_space<vmem>>, vector<1x1x128x128xf32>
    %10 = vector.shape_cast %9 : vector<1x1x128x128xf32> to vector<128x128xf32>
    %cst_14 = arith.constant dense<0.000000e+00> : vector<64x128xf32>
    %11 = tpu.matmul %8, %10, %cst_14 {dimension_numbers = #tpu.dot_dimension_numbers<[1], [0], [0], [1], [0, 0, 1, 1], [], []>} : vector<64x128xf32>, vector<128x128xf32>, vector<64x128xf32> -> vector<64x128xf32>
    %12 = arith.addf %5, %11 : vector<64x128xf32>
    %c0_15 = arith.constant 0 : index
    %c0_16 = arith.constant 0 : index
    %c1_17 = arith.constant 1 : index
    %c0_18 = arith.constant 0 : index
    %13 = vector.load %arg1[%c0_15, %c0_16, %c1_17, %c0_18] : memref<4x9x9x128xf32, #tpu.memory_space<vmem>>, vector<1x8x8x128xf32>
    %14 = vector.shape_cast %13 : vector<1x8x8x128xf32> to vector<8x8x128xf32>
    %15 = vector.shape_cast %14 : vector<8x8x128xf32> to vector<64x128xf32>
    %c0_19 = arith.constant 0 : index
    %c2 = arith.constant 2 : index
    %c0_20 = arith.constant 0 : index
    %c0_21 = arith.constant 0 : index
    %16 = vector.load %arg2[%c0_19, %c2, %c0_20, %c0_21] : memref<3x3x128x128xf32, #tpu.memory_space<vmem>>, vector<1x1x128x128xf32>
    %17 = vector.shape_cast %16 : vector<1x1x128x128xf32> to vector<128x128xf32>
    %cst_22 = arith.constant dense<0.000000e+00> : vector<64x128xf32>
    %18 = tpu.matmul %15, %17, %cst_22 {dimension_numbers = #tpu.dot_dimension_numbers<[1], [0], [0], [1], [0, 0, 1, 1], [], []>} : vector<64x128xf32>, vector<128x128xf32>, vector<64x128xf32> -> vector<64x128xf32>
    %19 = arith.addf %12, %18 : vector<64x128xf32>
    %c2_23 = arith.constant 2 : index
    %c0_24 = arith.constant 0 : index
    %c0_25 = arith.constant 0 : index
    %c0_26 = arith.constant 0 : index
    %20 = vector.load %arg1[%c2_23, %c0_24, %c0_25, %c0_26] : memref<4x9x9x128xf32, #tpu.memory_space<vmem>>, vector<1x8x8x128xf32>
    %21 = vector.shape_cast %20 : vector<1x8x8x128xf32> to vector<8x8x128xf32>
    %22 = vector.shape_cast %21 : vector<8x8x128xf32> to vector<64x128xf32>
    %c1_27 = arith.constant 1 : index
    %c0_28 = arith.constant 0 : index
    %c0_29 = arith.constant 0 : index
    %c0_30 = arith.constant 0 : index
    %23 = vector.load %arg2[%c1_27, %c0_28, %c0_29, %c0_30] : memref<3x3x128x128xf32, #tpu.memory_space<vmem>>, vector<1x1x128x128xf32>
    %24 = vector.shape_cast %23 : vector<1x1x128x128xf32> to vector<128x128xf32>
    %cst_31 = arith.constant dense<0.000000e+00> : vector<64x128xf32>
    %25 = tpu.matmul %22, %24, %cst_31 {dimension_numbers = #tpu.dot_dimension_numbers<[1], [0], [0], [1], [0, 0, 1, 1], [], []>} : vector<64x128xf32>, vector<128x128xf32>, vector<64x128xf32> -> vector<64x128xf32>
    %26 = arith.addf %19, %25 : vector<64x128xf32>
    %c3 = arith.constant 3 : index
    %c0_32 = arith.constant 0 : index
    %c0_33 = arith.constant 0 : index
    %c0_34 = arith.constant 0 : index
    %27 = vector.load %arg1[%c3, %c0_32, %c0_33, %c0_34] : memref<4x9x9x128xf32, #tpu.memory_space<vmem>>, vector<1x8x8x128xf32>
    %28 = vector.shape_cast %27 : vector<1x8x8x128xf32> to vector<8x8x128xf32>
    %29 = vector.shape_cast %28 : vector<8x8x128xf32> to vector<64x128xf32>
    %c1_35 = arith.constant 1 : index
    %c1_36 = arith.constant 1 : index
    %c0_37 = arith.constant 0 : index
    %c0_38 = arith.constant 0 : index
    %30 = vector.load %arg2[%c1_35, %c1_36, %c0_37, %c0_38] : memref<3x3x128x128xf32, #tpu.memory_space<vmem>>, vector<1x1x128x128xf32>
    %31 = vector.shape_cast %30 : vector<1x1x128x128xf32> to vector<128x128xf32>
    %cst_39 = arith.constant dense<0.000000e+00> : vector<64x128xf32>
    %32 = tpu.matmul %29, %31, %cst_39 {dimension_numbers = #tpu.dot_dimension_numbers<[1], [0], [0], [1], [0, 0, 1, 1], [], []>} : vector<64x128xf32>, vector<128x128xf32>, vector<64x128xf32> -> vector<64x128xf32>
    %33 = arith.addf %26, %32 : vector<64x128xf32>
    %c2_40 = arith.constant 2 : index
    %c0_41 = arith.constant 0 : index
    %c1_42 = arith.constant 1 : index
    %c0_43 = arith.constant 0 : index
    %34 = vector.load %arg1[%c2_40, %c0_41, %c1_42, %c0_43] : memref<4x9x9x128xf32, #tpu.memory_space<vmem>>, vector<1x8x8x128xf32>
    %35 = vector.shape_cast %34 : vector<1x8x8x128xf32> to vector<8x8x128xf32>
    %36 = vector.shape_cast %35 : vector<8x8x128xf32> to vector<64x128xf32>
    %c1_44 = arith.constant 1 : index
    %c2_45 = arith.constant 2 : index
    %c0_46 = arith.constant 0 : index
    %c0_47 = arith.constant 0 : index
    %37 = vector.load %arg2[%c1_44, %c2_45, %c0_46, %c0_47] : memref<3x3x128x128xf32, #tpu.memory_space<vmem>>, vector<1x1x128x128xf32>
    %38 = vector.shape_cast %37 : vector<1x1x128x128xf32> to vector<128x128xf32>
    %cst_48 = arith.constant dense<0.000000e+00> : vector<64x128xf32>
    %39 = tpu.matmul %36, %38, %cst_48 {dimension_numbers = #tpu.dot_dimension_numbers<[1], [0], [0], [1], [0, 0, 1, 1], [], []>} : vector<64x128xf32>, vector<128x128xf32>, vector<64x128xf32> -> vector<64x128xf32>
    %40 = arith.addf %33, %39 : vector<64x128xf32>
    %c0_49 = arith.constant 0 : index
    %c1_50 = arith.constant 1 : index
    %c0_51 = arith.constant 0 : index
    %c0_52 = arith.constant 0 : index
    %41 = vector.load %arg1[%c0_49, %c1_50, %c0_51, %c0_52] : memref<4x9x9x128xf32, #tpu.memory_space<vmem>>, vector<1x8x8x128xf32>
    %42 = vector.shape_cast %41 : vector<1x8x8x128xf32> to vector<8x8x128xf32>
    %43 = vector.shape_cast %42 : vector<8x8x128xf32> to vector<64x128xf32>
    %c2_53 = arith.constant 2 : index
    %c0_54 = arith.constant 0 : index
    %c0_55 = arith.constant 0 : index
    %c0_56 = arith.constant 0 : index
    %44 = vector.load %arg2[%c2_53, %c0_54, %c0_55, %c0_56] : memref<3x3x128x128xf32, #tpu.memory_space<vmem>>, vector<1x1x128x128xf32>
    %45 = vector.shape_cast %44 : vector<1x1x128x128xf32> to vector<128x128xf32>
    %cst_57 = arith.constant dense<0.000000e+00> : vector<64x128xf32>
    %46 = tpu.matmul %43, %45, %cst_57 {dimension_numbers = #tpu.dot_dimension_numbers<[1], [0], [0], [1], [0, 0, 1, 1], [], []>} : vector<64x128xf32>, vector<128x128xf32>, vector<64x128xf32> -> vector<64x128xf32>
    %47 = arith.addf %40, %46 : vector<64x128xf32>
    %c1_58 = arith.constant 1 : index
    %c1_59 = arith.constant 1 : index
    %c0_60 = arith.constant 0 : index
    %c0_61 = arith.constant 0 : index
    %48 = vector.load %arg1[%c1_58, %c1_59, %c0_60, %c0_61] : memref<4x9x9x128xf32, #tpu.memory_space<vmem>>, vector<1x8x8x128xf32>
    %49 = vector.shape_cast %48 : vector<1x8x8x128xf32> to vector<8x8x128xf32>
    %50 = vector.shape_cast %49 : vector<8x8x128xf32> to vector<64x128xf32>
    %c2_62 = arith.constant 2 : index
    %c1_63 = arith.constant 1 : index
    %c0_64 = arith.constant 0 : index
    %c0_65 = arith.constant 0 : index
    %51 = vector.load %arg2[%c2_62, %c1_63, %c0_64, %c0_65] : memref<3x3x128x128xf32, #tpu.memory_space<vmem>>, vector<1x1x128x128xf32>
    %52 = vector.shape_cast %51 : vector<1x1x128x128xf32> to vector<128x128xf32>
    %cst_66 = arith.constant dense<0.000000e+00> : vector<64x128xf32>
    %53 = tpu.matmul %50, %52, %cst_66 {dimension_numbers = #tpu.dot_dimension_numbers<[1], [0], [0], [1], [0, 0, 1, 1], [], []>} : vector<64x128xf32>, vector<128x128xf32>, vector<64x128xf32> -> vector<64x128xf32>
    %54 = arith.addf %47, %53 : vector<64x128xf32>
    %c0_67 = arith.constant 0 : index
    %c1_68 = arith.constant 1 : index
    %c1_69 = arith.constant 1 : index
    %c0_70 = arith.constant 0 : index
    %55 = vector.load %arg1[%c0_67, %c1_68, %c1_69, %c0_70] : memref<4x9x9x128xf32, #tpu.memory_space<vmem>>, vector<1x8x8x128xf32>
    %56 = vector.shape_cast %55 : vector<1x8x8x128xf32> to vector<8x8x128xf32>
    %57 = vector.shape_cast %56 : vector<8x8x128xf32> to vector<64x128xf32>
    %c2_71 = arith.constant 2 : index
    %c2_72 = arith.constant 2 : index
    %c0_73 = arith.constant 0 : index
    %c0_74 = arith.constant 0 : index
    %58 = vector.load %arg2[%c2_71, %c2_72, %c0_73, %c0_74] : memref<3x3x128x128xf32, #tpu.memory_space<vmem>>, vector<1x1x128x128xf32>
    %59 = vector.shape_cast %58 : vector<1x1x128x128xf32> to vector<128x128xf32>
    %cst_75 = arith.constant dense<0.000000e+00> : vector<64x128xf32>
    %60 = tpu.matmul %57, %59, %cst_75 {dimension_numbers = #tpu.dot_dimension_numbers<[1], [0], [0], [1], [0, 0, 1, 1], [], []>} : vector<64x128xf32>, vector<128x128xf32>, vector<64x128xf32> -> vector<64x128xf32>
    %61 = arith.addf %54, %60 : vector<64x128xf32>
    %c0_76 = arith.constant 0 : index
    %c0_77 = arith.constant 0 : index
    %62 = vector.load %arg3[%c0_76, %c0_77] : memref<1x128xf32, #tpu.memory_space<vmem>>, vector<1x128xf32>
    %63 = vector.broadcast %62 : vector<1x128xf32> to vector<64x128xf32>
    %64 = arith.addf %61, %63 : vector<64x128xf32>
    %cst_78 = arith.constant 0.000000e+00 : f32
    %65 = vector.broadcast %cst_78 : f32 to vector<64x128xf32>
    %66 = arith.maximumf %64, %65 : vector<64x128xf32>
    %cst_79 = arith.constant 0.000000e+00 : f32
    %67 = vector.broadcast %cst_79 : f32 to vector<1x16x128xf32>
    %c0_80 = arith.constant 0 : index
    %c0_81 = arith.constant 0 : index
    %c0_82 = arith.constant 0 : index
    %68 = vector.load %arg9[%c0_80, %c0_81, %c0_82] : memref<10x16x128xf32, #tpu.memory_space<vmem>>, vector<1x16x128xf32>
    tpu.vector_store %arg9[%c0_80, %c0_81, %c0_82], %67 {strides = array<i32>} : memref<10x16x128xf32, #tpu.memory_space<vmem>>, vector<1x16x128xf32>,
    %cst_83 = arith.constant 0.000000e+00 : f32
    %69 = vector.broadcast %cst_83 : f32 to vector<1x16x128xf32>
    %c9 = arith.constant 9 : index
    %c0_84 = arith.constant 0 : index
    %c0_85 = arith.constant 0 : index
    %70 = vector.load %arg9[%c9, %c0_84, %c0_85] : memref<10x16x128xf32, #tpu.memory_space<vmem>>, vector<1x16x128xf32>
    tpu.vector_store %arg9[%c9, %c0_84, %c0_85], %69 {strides = array<i32>} : memref<10x16x128xf32, #tpu.memory_space<vmem>>, vector<1x16x128xf32>,
    %cst_86 = arith.constant 0.000000e+00 : f32
    %71 = vector.broadcast %cst_86 : f32 to vector<10x1x128xf32>
    %c0_87 = arith.constant 0 : index
    %c0_88 = arith.constant 0 : index
    %c0_89 = arith.constant 0 : index
    %72 = vector.load %arg9[%c0_87, %c0_88, %c0_89] : memref<10x16x128xf32, #tpu.memory_space<vmem>>, vector<10x1x128xf32>
    tpu.vector_store %arg9[%c0_87, %c0_88, %c0_89], %71 {strides = array<i32>} : memref<10x16x128xf32, #tpu.memory_space<vmem>>, vector<10x1x128xf32>,
    %cst_90 = arith.constant 0.000000e+00 : f32
    %73 = vector.broadcast %cst_90 : f32 to vector<10x7x128xf32>
    %c0_91 = arith.constant 0 : index
    %c9_92 = arith.constant 9 : index
    %c0_93 = arith.constant 0 : index
    %74 = vector.load %arg9[%c0_91, %c9_92, %c0_93] : memref<10x16x128xf32, #tpu.memory_space<vmem>>, vector<10x7x128xf32>
    tpu.vector_store %arg9[%c0_91, %c9_92, %c0_93], %73 {strides = array<i32>} : memref<10x16x128xf32, #tpu.memory_space<vmem>>, vector<10x7x128xf32>,
    %75 = vector.shape_cast %66 : vector<64x128xf32> to vector<8x8x128xf32>
    %c1_94 = arith.constant 1 : index
    %c1_95 = arith.constant 1 : index
    %c0_96 = arith.constant 0 : index
    %76 = vector.load %arg9[%c1_94, %c1_95, %c0_96] : memref<10x16x128xf32, #tpu.memory_space<vmem>>, vector<8x8x128xf32>
    tpu.vector_store %arg9[%c1_94, %c1_95, %c0_96], %75 {strides = array<i32>} : memref<10x16x128xf32, #tpu.memory_space<vmem>>, vector<8x8x128xf32>,
    %c0_97 = arith.constant 0 : index
    %c0_98 = arith.constant 0 : index
    %c0_99 = arith.constant 0 : index
    %77 = vector.load %arg9[%c0_97, %c0_98, %c0_99] : memref<10x16x128xf32, #tpu.memory_space<vmem>>, vector<8x8x128xf32>
    %78 = vector.shape_cast %77 : vector<8x8x128xf32> to vector<64x128xf32>
    %c0_100 = arith.constant 0 : index
    %c0_101 = arith.constant 0 : index
    %c0_102 = arith.constant 0 : index
    %c0_103 = arith.constant 0 : index
    %79 = vector.load %arg4[%c0_100, %c0_101, %c0_102, %c0_103] : memref<3x3x128x128xf32, #tpu.memory_space<vmem>>, vector<1x1x128x128xf32>
    %80 = vector.shape_cast %79 : vector<1x1x128x128xf32> to vector<128x128xf32>
    %cst_104 = arith.constant dense<0.000000e+00> : vector<64x128xf32>
    %81 = tpu.matmul %78, %80, %cst_104 {dimension_numbers = #tpu.dot_dimension_numbers<[1], [0], [0], [1], [0, 0, 1, 1], [], []>} : vector<64x128xf32>, vector<128x128xf32>, vector<64x128xf32> -> vector<64x128xf32>
    %c0_105 = arith.constant 0 : index
    %c1_106 = arith.constant 1 : index
    %c0_107 = arith.constant 0 : index
    %82 = vector.load %arg9[%c0_105, %c1_106, %c0_107] : memref<10x16x128xf32, #tpu.memory_space<vmem>>, vector<8x8x128xf32>
    %83 = vector.shape_cast %82 : vector<8x8x128xf32> to vector<64x128xf32>
    %c0_108 = arith.constant 0 : index
    %c1_109 = arith.constant 1 : index
    %c0_110 = arith.constant 0 : index
    %c0_111 = arith.constant 0 : index
    %84 = vector.load %arg4[%c0_108, %c1_109, %c0_110, %c0_111] : memref<3x3x128x128xf32, #tpu.memory_space<vmem>>, vector<1x1x128x128xf32>
    %85 = vector.shape_cast %84 : vector<1x1x128x128xf32> to vector<128x128xf32>
    %cst_112 = arith.constant dense<0.000000e+00> : vector<64x128xf32>
    %86 = tpu.matmul %83, %85, %cst_112 {dimension_numbers = #tpu.dot_dimension_numbers<[1], [0], [0], [1], [0, 0, 1, 1], [], []>} : vector<64x128xf32>, vector<128x128xf32>, vector<64x128xf32> -> vector<64x128xf32>
    %87 = arith.addf %81, %86 : vector<64x128xf32>
    %c0_113 = arith.constant 0 : index
    %c2_114 = arith.constant 2 : index
    %c0_115 = arith.constant 0 : index
    %88 = vector.load %arg9[%c0_113, %c2_114, %c0_115] : memref<10x16x128xf32, #tpu.memory_space<vmem>>, vector<8x8x128xf32>
    %89 = vector.shape_cast %88 : vector<8x8x128xf32> to vector<64x128xf32>
    %c0_116 = arith.constant 0 : index
    %c2_117 = arith.constant 2 : index
    %c0_118 = arith.constant 0 : index
    %c0_119 = arith.constant 0 : index
    %90 = vector.load %arg4[%c0_116, %c2_117, %c0_118, %c0_119] : memref<3x3x128x128xf32, #tpu.memory_space<vmem>>, vector<1x1x128x128xf32>
    %91 = vector.shape_cast %90 : vector<1x1x128x128xf32> to vector<128x128xf32>
    %cst_120 = arith.constant dense<0.000000e+00> : vector<64x128xf32>
    %92 = tpu.matmul %89, %91, %cst_120 {dimension_numbers = #tpu.dot_dimension_numbers<[1], [0], [0], [1], [0, 0, 1, 1], [], []>} : vector<64x128xf32>, vector<128x128xf32>, vector<64x128xf32> -> vector<64x128xf32>
    %93 = arith.addf %87, %92 : vector<64x128xf32>
    %c1_121 = arith.constant 1 : index
    %c0_122 = arith.constant 0 : index
    %c0_123 = arith.constant 0 : index
    %94 = vector.load %arg9[%c1_121, %c0_122, %c0_123] : memref<10x16x128xf32, #tpu.memory_space<vmem>>, vector<8x8x128xf32>
    %95 = vector.shape_cast %94 : vector<8x8x128xf32> to vector<64x128xf32>
    %c1_124 = arith.constant 1 : index
    %c0_125 = arith.constant 0 : index
    %c0_126 = arith.constant 0 : index
    %c0_127 = arith.constant 0 : index
    %96 = vector.load %arg4[%c1_124, %c0_125, %c0_126, %c0_127] : memref<3x3x128x128xf32, #tpu.memory_space<vmem>>, vector<1x1x128x128xf32>
    %97 = vector.shape_cast %96 : vector<1x1x128x128xf32> to vector<128x128xf32>
    %cst_128 = arith.constant dense<0.000000e+00> : vector<64x128xf32>
    %98 = tpu.matmul %95, %97, %cst_128 {dimension_numbers = #tpu.dot_dimension_numbers<[1], [0], [0], [1], [0, 0, 1, 1], [], []>} : vector<64x128xf32>, vector<128x128xf32>, vector<64x128xf32> -> vector<64x128xf32>
    %99 = arith.addf %93, %98 : vector<64x128xf32>
    %c1_129 = arith.constant 1 : index
    %c1_130 = arith.constant 1 : index
    %c0_131 = arith.constant 0 : index
    %100 = vector.load %arg9[%c1_129, %c1_130, %c0_131] : memref<10x16x128xf32, #tpu.memory_space<vmem>>, vector<8x8x128xf32>
    %101 = vector.shape_cast %100 : vector<8x8x128xf32> to vector<64x128xf32>
    %c1_132 = arith.constant 1 : index
    %c1_133 = arith.constant 1 : index
    %c0_134 = arith.constant 0 : index
    %c0_135 = arith.constant 0 : index
    %102 = vector.load %arg4[%c1_132, %c1_133, %c0_134, %c0_135] : memref<3x3x128x128xf32, #tpu.memory_space<vmem>>, vector<1x1x128x128xf32>
    %103 = vector.shape_cast %102 : vector<1x1x128x128xf32> to vector<128x128xf32>
    %cst_136 = arith.constant dense<0.000000e+00> : vector<64x128xf32>
    %104 = tpu.matmul %101, %103, %cst_136 {dimension_numbers = #tpu.dot_dimension_numbers<[1], [0], [0], [1], [0, 0, 1, 1], [], []>} : vector<64x128xf32>, vector<128x128xf32>, vector<64x128xf32> -> vector<64x128xf32>
    %105 = arith.addf %99, %104 : vector<64x128xf32>
    %c1_137 = arith.constant 1 : index
    %c2_138 = arith.constant 2 : index
    %c0_139 = arith.constant 0 : index
    %106 = vector.load %arg9[%c1_137, %c2_138, %c0_139] : memref<10x16x128xf32, #tpu.memory_space<vmem>>, vector<8x8x128xf32>
    %107 = vector.shape_cast %106 : vector<8x8x128xf32> to vector<64x128xf32>
    %c1_140 = arith.constant 1 : index
    %c2_141 = arith.constant 2 : index
    %c0_142 = arith.constant 0 : index
    %c0_143 = arith.constant 0 : index
    %108 = vector.load %arg4[%c1_140, %c2_141, %c0_142, %c0_143] : memref<3x3x128x128xf32, #tpu.memory_space<vmem>>, vector<1x1x128x128xf32>
    %109 = vector.shape_cast %108 : vector<1x1x128x128xf32> to vector<128x128xf32>
    %cst_144 = arith.constant dense<0.000000e+00> : vector<64x128xf32>
    %110 = tpu.matmul %107, %109, %cst_144 {dimension_numbers = #tpu.dot_dimension_numbers<[1], [0], [0], [1], [0, 0, 1, 1], [], []>} : vector<64x128xf32>, vector<128x128xf32>, vector<64x128xf32> -> vector<64x128xf32>
    %111 = arith.addf %105, %110 : vector<64x128xf32>
    %c2_145 = arith.constant 2 : index
    %c0_146 = arith.constant 0 : index
    %c0_147 = arith.constant 0 : index
    %112 = vector.load %arg9[%c2_145, %c0_146, %c0_147] : memref<10x16x128xf32, #tpu.memory_space<vmem>>, vector<8x8x128xf32>
    %113 = vector.shape_cast %112 : vector<8x8x128xf32> to vector<64x128xf32>
    %c2_148 = arith.constant 2 : index
    %c0_149 = arith.constant 0 : index
    %c0_150 = arith.constant 0 : index
    %c0_151 = arith.constant 0 : index
    %114 = vector.load %arg4[%c2_148, %c0_149, %c0_150, %c0_151] : memref<3x3x128x128xf32, #tpu.memory_space<vmem>>, vector<1x1x128x128xf32>
    %115 = vector.shape_cast %114 : vector<1x1x128x128xf32> to vector<128x128xf32>
    %cst_152 = arith.constant dense<0.000000e+00> : vector<64x128xf32>
    %116 = tpu.matmul %113, %115, %cst_152 {dimension_numbers = #tpu.dot_dimension_numbers<[1], [0], [0], [1], [0, 0, 1, 1], [], []>} : vector<64x128xf32>, vector<128x128xf32>, vector<64x128xf32> -> vector<64x128xf32>
    %117 = arith.addf %111, %116 : vector<64x128xf32>
    %c2_153 = arith.constant 2 : index
    %c1_154 = arith.constant 1 : index
    %c0_155 = arith.constant 0 : index
    %118 = vector.load %arg9[%c2_153, %c1_154, %c0_155] : memref<10x16x128xf32, #tpu.memory_space<vmem>>, vector<8x8x128xf32>
    %119 = vector.shape_cast %118 : vector<8x8x128xf32> to vector<64x128xf32>
    %c2_156 = arith.constant 2 : index
    %c1_157 = arith.constant 1 : index
    %c0_158 = arith.constant 0 : index
    %c0_159 = arith.constant 0 : index
    %120 = vector.load %arg4[%c2_156, %c1_157, %c0_158, %c0_159] : memref<3x3x128x128xf32, #tpu.memory_space<vmem>>, vector<1x1x128x128xf32>
    %121 = vector.shape_cast %120 : vector<1x1x128x128xf32> to vector<128x128xf32>
    %cst_160 = arith.constant dense<0.000000e+00> : vector<64x128xf32>
    %122 = tpu.matmul %119, %121, %cst_160 {dimension_numbers = #tpu.dot_dimension_numbers<[1], [0], [0], [1], [0, 0, 1, 1], [], []>} : vector<64x128xf32>, vector<128x128xf32>, vector<64x128xf32> -> vector<64x128xf32>
    %123 = arith.addf %117, %122 : vector<64x128xf32>
    %c2_161 = arith.constant 2 : index
    %c2_162 = arith.constant 2 : index
    %c0_163 = arith.constant 0 : index
    %124 = vector.load %arg9[%c2_161, %c2_162, %c0_163] : memref<10x16x128xf32, #tpu.memory_space<vmem>>, vector<8x8x128xf32>
    %125 = vector.shape_cast %124 : vector<8x8x128xf32> to vector<64x128xf32>
    %c2_164 = arith.constant 2 : index
    %c2_165 = arith.constant 2 : index
    %c0_166 = arith.constant 0 : index
    %c0_167 = arith.constant 0 : index
    %126 = vector.load %arg4[%c2_164, %c2_165, %c0_166, %c0_167] : memref<3x3x128x128xf32, #tpu.memory_space<vmem>>, vector<1x1x128x128xf32>
    %127 = vector.shape_cast %126 : vector<1x1x128x128xf32> to vector<128x128xf32>
    %cst_168 = arith.constant dense<0.000000e+00> : vector<64x128xf32>
    %128 = tpu.matmul %125, %127, %cst_168 {dimension_numbers = #tpu.dot_dimension_numbers<[1], [0], [0], [1], [0, 0, 1, 1], [], []>} : vector<64x128xf32>, vector<128x128xf32>, vector<64x128xf32> -> vector<64x128xf32>
    %129 = arith.addf %123, %128 : vector<64x128xf32>
    %c0_169 = arith.constant 0 : index
    %c0_170 = arith.constant 0 : index
    %130 = vector.load %arg5[%c0_169, %c0_170] : memref<1x128xf32, #tpu.memory_space<vmem>>, vector<1x128xf32>
    %131 = vector.broadcast %130 : vector<1x128xf32> to vector<64x128xf32>
    %132 = arith.addf %129, %131 : vector<64x128xf32>
    %c3_171 = arith.constant 3 : index
    %c0_172 = arith.constant 0 : index
    %c0_173 = arith.constant 0 : index
    %c0_174 = arith.constant 0 : index
    %133 = vector.load %arg1[%c3_171, %c0_172, %c0_173, %c0_174] : memref<4x9x9x128xf32, #tpu.memory_space<vmem>>, vector<1x8x8x128xf32>
    %134 = vector.shape_cast %133 : vector<1x8x8x128xf32> to vector<8x8x128xf32>
    %135 = vector.shape_cast %134 : vector<8x8x128xf32> to vector<64x128xf32>
    %c0_175 = arith.constant 0 : index
    %c0_176 = arith.constant 0 : index
    %136 = vector.load %arg6[%c0_175, %c0_176] : memref<128x128xf32, #tpu.memory_space<vmem>>, vector<128x128xf32>
    %cst_177 = arith.constant dense<0.000000e+00> : vector<64x128xf32>
    %137 = tpu.matmul %135, %136, %cst_177 {dimension_numbers = #tpu.dot_dimension_numbers<[1], [0], [0], [1], [0, 0, 1, 1], [], []>} : vector<64x128xf32>, vector<128x128xf32>, vector<64x128xf32> -> vector<64x128xf32>
    %c0_178 = arith.constant 0 : index
    %c0_179 = arith.constant 0 : index
    %138 = vector.load %arg7[%c0_178, %c0_179] : memref<1x128xf32, #tpu.memory_space<vmem>>, vector<1x128xf32>
    %139 = vector.broadcast %138 : vector<1x128xf32> to vector<64x128xf32>
    %140 = arith.addf %137, %139 : vector<64x128xf32>
    %141 = arith.addf %132, %140 : vector<64x128xf32>
    %cst_180 = arith.constant 0.000000e+00 : f32
    %142 = vector.broadcast %cst_180 : f32 to vector<64x128xf32>
    %143 = arith.maximumf %141, %142 : vector<64x128xf32>
    %144 = vector.shape_cast %143 : vector<64x128xf32> to vector<8x8x128xf32>
    %c0_181 = arith.constant 0 : index
    %c0_182 = arith.constant 0 : index
    %c0_183 = arith.constant 0 : index
    %c0_184 = arith.constant 0 : index
    %145 = vector.load %arg8[%c0_181, %c0_182, %c0_183, %c0_184] : memref<1x8x8x128xf32, #tpu.memory_space<vmem>>, vector<1x8x8x128xf32>
    %146 = vector.shape_cast %145 : vector<1x8x8x128xf32> to vector<8x8x128xf32>
    %147 = vector.shape_cast %144 : vector<8x8x128xf32> to vector<1x8x8x128xf32>
    tpu.vector_store %arg8[%c0_181, %c0_182, %c0_183, %c0_184], %147 {strides = array<i32>} : memref<1x8x8x128xf32, #tpu.memory_space<vmem>>, vector<1x8x8x128xf32>,
    return
  }
  func.func @transform_0(%arg0: i32) -> (i32, i32, i32, i32) {
    %c0_i32 = arith.constant 0 : i32
    %c0_i32_0 = arith.constant 0 : i32
    %c0_i32_1 = arith.constant 0 : i32
    %c0_i32_2 = arith.constant 0 : i32
    return %arg0, %c0_i32, %c0_i32_0, %c0_i32_1 : i32, i32, i32, i32
  }
  func.func @transform_1(%arg0: i32) -> (i32, i32, i32, i32) {
    %c0_i32 = arith.constant 0 : i32
    %c0_i32_0 = arith.constant 0 : i32
    %c0_i32_1 = arith.constant 0 : i32
    %c0_i32_2 = arith.constant 0 : i32
    %c0_i32_3 = arith.constant 0 : i32
    return %c0_i32, %c0_i32_0, %c0_i32_1, %c0_i32_2 : i32, i32, i32, i32
  }
  func.func @transform_2(%arg0: i32) -> (i32, i32) {
    %c0_i32 = arith.constant 0 : i32
    %c0_i32_0 = arith.constant 0 : i32
    %c0_i32_1 = arith.constant 0 : i32
    return %c0_i32, %c0_i32_0 : i32, i32
  }
  func.func @transform_3(%arg0: i32) -> (i32, i32, i32, i32) {
    %c0_i32 = arith.constant 0 : i32
    %c0_i32_0 = arith.constant 0 : i32
    %c0_i32_1 = arith.constant 0 : i32
    %c0_i32_2 = arith.constant 0 : i32
    %c0_i32_3 = arith.constant 0 : i32
    return %c0_i32, %c0_i32_0, %c0_i32_1, %c0_i32_2 : i32, i32, i32, i32
  }
  func.func @transform_4(%arg0: i32) -> (i32, i32) {
    %c0_i32 = arith.constant 0 : i32
    %c0_i32_0 = arith.constant 0 : i32
    %c0_i32_1 = arith.constant 0 : i32
    return %c0_i32, %c0_i32_0 : i32, i32
  }
  func.func @transform_5(%arg0: i32) -> (i32, i32) {
    %c0_i32 = arith.constant 0 : i32
    %c0_i32_0 = arith.constant 0 : i32
    %c0_i32_1 = arith.constant 0 : i32
    return %c0_i32, %c0_i32_0 : i32, i32
  }
  func.func @transform_6(%arg0: i32) -> (i32, i32) {
    %c0_i32 = arith.constant 0 : i32
    %c0_i32_0 = arith.constant 0 : i32
    %c0_i32_1 = arith.constant 0 : i32
    return %c0_i32, %c0_i32_0 : i32, i32
  }
  func.func @transform_7(%arg0: i32) -> (i32, i32, i32, i32) {
    %c0_i32 = arith.constant 0 : i32
    %c0_i32_0 = arith.constant 0 : i32
    %c0_i32_1 = arith.constant 0 : i32
    %c0_i32_2 = arith.constant 0 : i32
    return %arg0, %c0_i32, %c0_i32_0, %c0_i32_1 : i32, i32, i32, i32
  }
}

</mosaic_0001>

<llo_original>
// kernel: residual_block_forward.1
$region0: #{residual_block_forward.1}
  #allocation0 [shape = 'u32[]', space=smem, size = 0x4, offset = 0x4, fixed_abs, tag = 'smem constant byte address 0x4 - core index']
  #allocation1 [shape = 'u32[144,128]{1,0:T(1,128)}', space=vmem, size = 0x12000, scoped, tag = 'internal scratch']
  #allocation2 [shape = 'f32[10,16,128]{2,1,0:T(8,128)}', space=vmem, size = 0x14000, scoped, tag = 'scratch operand']
  %s0 = inlined_call_operand.vmem [shape: f32[8,9,9,128], index: 0, kind: input, shape index: {}]
  %s1 = inlined_call_operand.vmem [shape: f32[3,3,128,128], index: 1, kind: input, shape index: {}]
  %s2 = inlined_call_operand.vmem [shape: f32[1,128], index: 2, kind: input, shape index: {}]
  %s3 = inlined_call_operand.vmem [shape: f32[3,3,128,128], index: 3, kind: input, shape index: {}]
  %s4 = inlined_call_operand.vmem [shape: f32[1,128], index: 4, kind: input, shape index: {}]
  %s5 = inlined_call_operand.vmem [shape: f32[128,128], index: 5, kind: input, shape index: {}]
  %s6 = inlined_call_operand.vmem [shape: f32[1,128], index: 6, kind: input, shape index: {}]
  %s7 = inlined_call_operand.vmem [shape: f32[2,8,8,128], index: 7, kind: output, shape index: {}]
  %s8 = sld [smem:[#allocation0]]
  $region61: #{residual_block_forward.1} parent=0
    _
  %s10 = ssub.s32 1, %s8
  %s11 = scalar_select 0, %s10, %s8
  loop: start=0, step=1, limit=4
  $region2: #{residual_block_forward.1} parent=0 // loop_pre_header
    _
  $region3: #{residual_block_forward.1} parent=0 // loop_header
    %s13 = sphi 0, %s17
    %p14 = scmp.ge.s32.totalorder %s13, 4
    %s23 = sphi 0, %s25
    %s26 = sphi 0, %s23
    %s27 = sphi 0, %s26
    %s43 = sphi 0, %s27
    %s47 = sphi 0, %s47
    %s49 = sphi 0, %s47
    %s50 = sphi 0, %s49
    %s64 = sphi 0, %s50
    %s68 = sphi 0, %s68
    %s70 = sphi 0, %s68
    %s71 = sphi 0, %s70
    %s85 = sphi 0, %s71
    %s89 = sphi 0, %s89
    %s91 = sphi 0, %s89
    %s92 = sphi 0, %s91
    %s106 = sphi 0, %s92
    %s110 = sphi 0, %s110
    %s112 = sphi 0, %s110
    %s113 = sphi 0, %s112
    %s127 = sphi 0, %s113
    %s131 = sphi 0, %s131
    %s133 = sphi 0, %s131
    %s134 = sphi 0, %s133
    %s148 = sphi 0, %s134
    %s152 = sphi 0, %s152
    %s154 = sphi 0, %s152
    %s155 = sphi 0, %s154
    %s169 = sphi 0, %s155
    %s175 = sphi 0, %s177
    %s178 = sphi 0, %s175
    %s179 = sphi 0, %s178
    %s195 = sphi 0, %s179
  $region4: #{residual_block_forward.1} parent=0 // loop_header_branch
    %16 = sbr.rel (%p14) target = $region8
  $region5: #{residual_block_forward.1} parent=0 // loop_body
    %s18 = ssub.s32 %s13, 1
    %s19 = ssub.s32 %s13, 2
    %s20 = sadd.s32 %s13, 1
    %s21 = ssub.s32 %s13, %s20
    %p22 = scmp.eq.s32.totalorder %s21, 0
    %s24 = sadd.s32 %s23, 1
    %s25 = scalar_select %p22, %s23, %s24
    %p28 = pneg %p22
    %p29 = scmp.eq.s32.totalorder %s13, 1
    %p30 = por %p28, %p29
    %p31 = scmp.ne.s32.totalorder %s23, %s26
    %p32 = scmp.eq.s32.totalorder %s13, 0
    %p33 = por %p31, %p32
    %p34 = scmp.ne.s32.totalorder %s23, %s26
    %p35 = scmp.eq.s32.totalorder %s18, 1
    %p36 = por %p34, %p35
    %p37 = scmp.ne.s32.totalorder %s26, %s27
    %p38 = scmp.eq.s32.totalorder %s18, 0
    %p39 = por %p37, %p38
    %p40 = scmp.ne.s32.totalorder %s26, %s27
    %p41 = scmp.eq.s32.totalorder %s19, 1
    %p42 = por %p40, %p41
    %p44 = scmp.ne.s32.totalorder %s27, %s43
    %p45 = scmp.eq.s32.totalorder %s19, 0
    %p46 = por %p44, %p45
    %s48 = sadd.s32 %s47, 1
    %p51 = scmp.eq.s32.totalorder %s13, 1
    %p52 = scmp.ne.s32.totalorder %s47, %s49
    %p53 = scmp.eq.s32.totalorder %s13, 0
    %p54 = por %p52, %p53
    %p55 = scmp.ne.s32.totalorder %s47, %s49
    %p56 = scmp.eq.s32.totalorder %s18, 1
    %p57 = por %p55, %p56
    %p58 = scmp.ne.s32.totalorder %s49, %s50
    %p59 = scmp.eq.s32.totalorder %s18, 0
    %p60 = por %p58, %p59
    %p61 = scmp.ne.s32.totalorder %s49, %s50
    %p62 = scmp.eq.s32.totalorder %s19, 1
    %p63 = por %p61, %p62
    %p65 = scmp.ne.s32.totalorder %s50, %s64
    %p66 = scmp.eq.s32.totalorder %s19, 0
    %p67 = por %p65, %p66
    %s69 = sadd.s32 %s68, 1
    %p72 = scmp.eq.s32.totalorder %s13, 1
    %p73 = scmp.ne.s32.totalorder %s68, %s70
    %p74 = scmp.eq.s32.totalorder %s13, 0
    %p75 = por %p73, %p74
    %p76 = scmp.ne.s32.totalorder %s68, %s70
    %p77 = scmp.eq.s32.totalorder %s18, 1
    %p78 = por %p76, %p77
    %p79 = scmp.ne.s32.totalorder %s70, %s71
    %p80 = scmp.eq.s32.totalorder %s18, 0
    %p81 = por %p79, %p80
    %p82 = scmp.ne.s32.totalorder %s70, %s71
    %p83 = scmp.eq.s32.totalorder %s19, 1
    %p84 = por %p82, %p83
    %p86 = scmp.ne.s32.totalorder %s71, %s85
    %p87 = scmp.eq.s32.totalorder %s19, 0
    %p88 = por %p86, %p87
    %s90 = sadd.s32 %s89, 1
    %p93 = scmp.eq.s32.totalorder %s13, 1
    %p94 = scmp.ne.s32.totalorder %s89, %s91
    %p95 = scmp.eq.s32.totalorder %s13, 0
    %p96 = por %p94, %p95
    %p97 = scmp.ne.s32.totalorder %s89, %s91
    %p98 = scmp.eq.s32.totalorder %s18, 1
    %p99 = por %p97, %p98
    %p100 = scmp.ne.s32.totalorder %s91, %s92
    %p101 = scmp.eq.s32.totalorder %s18, 0
    %p102 = por %p100, %p101
    %p103 = scmp.ne.s32.totalorder %s91, %s92
    %p104 = scmp.eq.s32.totalorder %s19, 1
    %p105 = por %p103, %p104
    %p107 = scmp.ne.s32.totalorder %s92, %s106
    %p108 = scmp.eq.s32.totalorder %s19, 0
    %p109 = por %p107, %p108
    %s111 = sadd.s32 %s110, 1
    %p114 = scmp.eq.s32.totalorder %s13, 1
    %p115 = scmp.ne.s32.totalorder %s110, %s112
    %p116 = scmp.eq.s32.totalorder %s13, 0
    %p117 = por %p115, %p116
    %p118 = scmp.ne.s32.totalorder %s110, %s112
    %p119 = scmp.eq.s32.totalorder %s18, 1
    %p120 = por %p118, %p119
    %p121 = scmp.ne.s32.totalorder %s112, %s113
    %p122 = scmp.eq.s32.totalorder %s18, 0
    %p123 = por %p121, %p122
    %p124 = scmp.ne.s32.totalorder %s112, %s113
    %p125 = scmp.eq.s32.totalorder %s19, 1
    %p126 = por %p124, %p125
    %p128 = scmp.ne.s32.totalorder %s113, %s127
    %p129 = scmp.eq.s32.totalorder %s19, 0
    %p130 = por %p128, %p129
    %s132 = sadd.s32 %s131, 1
    %p135 = scmp.eq.s32.totalorder %s13, 1
    %p136 = scmp.ne.s32.totalorder %s131, %s133
    %p137 = scmp.eq.s32.totalorder %s13, 0
    %p138 = por %p136, %p137
    %p139 = scmp.ne.s32.totalorder %s131, %s133
    %p140 = scmp.eq.s32.totalorder %s18, 1
    %p141 = por %p139, %p140
    %p142 = scmp.ne.s32.totalorder %s133, %s134
    %p143 = scmp.eq.s32.totalorder %s18, 0
    %p144 = por %p142, %p143
    %p145 = scmp.ne.s32.totalorder %s133, %s134
    %p146 = scmp.eq.s32.totalorder %s19, 1
    %p147 = por %p145, %p146
    %p149 = scmp.ne.s32.totalorder %s134, %s148
    %p150 = scmp.eq.s32.totalorder %s19, 0
    %p151 = por %p149, %p150
    %s153 = sadd.s32 %s152, 1
    %p156 = scmp.eq.s32.totalorder %s13, 1
    %p157 = scmp.ne.s32.totalorder %s152, %s154
    %p158 = scmp.eq.s32.totalorder %s13, 0
    %p159 = por %p157, %p158
    %p160 = scmp.ne.s32.totalorder %s152, %s154
    %p161 = scmp.eq.s32.totalorder %s18, 1
    %p162 = por %p160, %p161
    %p163 = scmp.ne.s32.totalorder %s154, %s155
    %p164 = scmp.eq.s32.totalorder %s18, 0
    %p165 = por %p163, %p164
    %p166 = scmp.ne.s32.totalorder %s154, %s155
    %p167 = scmp.eq.s32.totalorder %s19, 1
    %p168 = por %p166, %p167
    %p170 = scmp.ne.s32.totalorder %s155, %s169
    %p171 = scmp.eq.s32.totalorder %s19, 0
    %p172 = por %p170, %p171
    %s173 = ssub.s32 %s13, %s20
    %p174 = scmp.eq.s32.totalorder %s173, 0
    %s176 = sadd.s32 %s175, 1
    %s177 = scalar_select %p174, %s175, %s176
    %p180 = pneg %p174
    %p181 = scmp.eq.s32.totalorder %s13, 1
    %p182 = por %p180, %p181
    %p183 = scmp.ne.s32.totalorder %s175, %s178
    %p184 = scmp.eq.s32.totalorder %s13, 0
    %p185 = por %p183, %p184
    %p186 = scmp.ne.s32.totalorder %s175, %s178
    %p187 = scmp.eq.s32.totalorder %s18, 1
    %p188 = por %p186, %p187
    %p189 = scmp.ne.s32.totalorder %s178, %s179
    %p190 = scmp.eq.s32.totalorder %s18, 0
    %p191 = por %p189, %p190
    %p192 = scmp.ne.s32.totalorder %s178, %s179
    %p193 = scmp.eq.s32.totalorder %s19, 1
    %p194 = por %p192, %p193
    %p196 = scmp.ne.s32.totalorder %s179, %s195
    %p197 = scmp.eq.s32.totalorder %s19, 0
    %p198 = por %p196, %p197
    %p199 = scmp.le.s32.totalorder 1, %s13
    %p200 = scmp.lt.s32.totalorder %s13, 3
    %p201 = pnand %p199, %p200
    %p202 = pneg %p201
    // Predicated region
    $region9: #{residual_block_forward.1} parent=5 // pred_check
      _
    $region10: #{residual_block_forward.1} parent=5 // pred_check_branch
      %204 = sbr.rel (%p201) target = $region12
    $region11: #{residual_block_forward.1} parent=5 // pred_region
      %s205 = ssub.s32 %s13, 1
      // Predicated region
      $region13: #{residual_block_forward.1} parent=11 // pred_check
        %p206 = pneg %p60
      $region14: #{residual_block_forward.1} parent=11 // pred_check_branch
        %208 = sbr.rel (%p206) target = $region16
      $region15: #{residual_block_forward.1} parent=11 // pred_region
        _
      $region16: #{residual_block_forward.1} parent=11 // pred_fallthru
        _
      // Predicated region
      $region17: #{residual_block_forward.1} parent=11 // pred_check
        %p209 = pneg %p81
      $region18: #{residual_block_forward.1} parent=11 // pred_check_branch
        %211 = sbr.rel (%p209) target = $region20
      $region19: #{residual_block_forward.1} parent=11 // pred_region
        _
      $region20: #{residual_block_forward.1} parent=11 // pred_fallthru
        _
      // Predicated region
      $region21: #{residual_block_forward.1} parent=11 // pred_check
        %p212 = pneg %p102
      $region22: #{residual_block_forward.1} parent=11 // pred_check_branch
        %214 = sbr.rel (%p212) target = $region24
      $region23: #{residual_block_forward.1} parent=11 // pred_region
        _
      $region24: #{residual_block_forward.1} parent=11 // pred_fallthru
        _
      // Predicated region
      $region25: #{residual_block_forward.1} parent=11 // pred_check
        %p215 = pneg %p123
      $region26: #{residual_block_forward.1} parent=11 // pred_check_branch
        %217 = sbr.rel (%p215) target = $region28
      $region27: #{residual_block_forward.1} parent=11 // pred_region
        _
      $region28: #{residual_block_forward.1} parent=11 // pred_fallthru
        _
      // Predicated region
      $region29: #{residual_block_forward.1} parent=11 // pred_check
        %p218 = pneg %p144
      $region30: #{residual_block_forward.1} parent=11 // pred_check_branch
        %220 = sbr.rel (%p218) target = $region32
      $region31: #{residual_block_forward.1} parent=11 // pred_region
        _
      $region32: #{residual_block_forward.1} parent=11 // pred_fallthru
        _
      // Predicated region
      $region33: #{residual_block_forward.1} parent=11 // pred_check
        %p221 = pneg %p165
      $region34: #{residual_block_forward.1} parent=11 // pred_check_branch
        %223 = sbr.rel (%p221) target = $region36
      $region35: #{residual_block_forward.1} parent=11 // pred_region
        _
      $region36: #{residual_block_forward.1} parent=11 // pred_fallthru
        _
    $region12: #{residual_block_forward.1} parent=5 // pred_fallthru
      _
    %p224 = scmp.lt.s32.totalorder %s13, 2
    // Predicated region
    $region37: #{residual_block_forward.1} parent=5 // pred_check
      %p225 = pneg %p224
    $region38: #{residual_block_forward.1} parent=5 // pred_check_branch
      %227 = sbr.rel (%p225) target = $region40
    $region39: #{residual_block_forward.1} parent=5 // pred_region
      // Predicated region
      $region41: #{residual_block_forward.1} parent=39 // pred_check
        %p228 = pneg %p33
      $region42: #{residual_block_forward.1} parent=39 // pred_check_branch
        %230 = sbr.rel (%p228) target = $region44
      $region43: #{residual_block_forward.1} parent=39 // pred_region
        %s231 = smul.u32 4, %s13
        %p232 = scmp.lt.s32.totalorder %s231, 7
        %s233 = scalar_select %p232, %s231, 7
        %s234 = smul.addr %s233, 18
        %s235 = smul.addr %s234, 8
        %s236 = scalar_lea.vmem %s0, %s235
        %s237 = smul.u32 4, %s13
      $region44: #{residual_block_forward.1} parent=39 // pred_fallthru
        _
    $region40: #{residual_block_forward.1} parent=5 // pred_fallthru
      _
    %p238 = scmp.le.s32.totalorder 1, %s13
    %p239 = scmp.lt.s32.totalorder %s13, 3
    %p240 = pnand %p238, %p239
    %p241 = pneg %p240
    // Predicated region
    $region45: #{residual_block_forward.1} parent=5 // pred_check
      _
    $region46: #{residual_block_forward.1} parent=5 // pred_check_branch
      %243 = sbr.rel (%p240) target = $region48
    $region47: #{residual_block_forward.1} parent=5 // pred_region
      %s244 = ssub.s32 %s13, 1
      %s245 = smul.u32 4, %s18
      %p246 = scmp.lt.s32.totalorder %s245, 7
      %s247 = scalar_select %p246, %s245, 7
      %s248 = smul.addr %s247, 18
      %s249 = smul.addr %s248, 8
      %s250 = scalar_lea.vmem %s0, %s249
      %p251 = pneg %p39
      %p252 = pneg %p36
      %p253 = pneg %p60
      %p254 = pneg %p57
      %p255 = pneg %p81
      %p256 = pneg %p78
      %p257 = pneg %p102
      %p258 = pneg %p99
      %p259 = pneg %p123
      %p260 = pneg %p120
      %p261 = pneg %p144
      %p262 = pneg %p141
      %p263 = pneg %p165
      %p264 = pneg %p162
      %p265 = pneg %p191
      %p266 = pneg %p188
      %p267 = scmp.lt.s32.totalorder %s18, 1
      %s268 = scalar_select %p267, %s18, 1
      %s269 = smul.addr %s268, 8
      %s270 = smul.addr %s269, 8
      %s271 = scalar_lea.vmem %s7, %s270
      %s272 = smul.u32 4, %s18
      %p273 = scmp.lt.s32.totalorder %s272, 7
      %s274 = scalar_select %p273, %s272, 7
      %s275 = smul.addr %s274, 18
      %s276 = smul.addr %s275, 8
      %s277 = scalar_lea.vmem %s0, %s276
      %s278 = smul.u32 4, %s18
      %p279 = scmp.lt.s32.totalorder %s18, 1
      %s280 = scalar_select %p279, %s18, 1
      %s281 = smul.addr %s280, 8
      %s282 = smul.addr %s281, 8
      %s283 = scalar_lea.vmem %s7, %s282
      %v284 = vld [vmem:[%s277] sm:$0xff]
      %v285 = vld [vmem:[%s277 + $0x10] sm:$0xff]
      %v286 = vld [vmem:[%s277 + $0x20] sm:$0xff]
      %v287 = vld [vmem:[%s277 + $0x30] sm:$0xff]
      %v288 = vld [vmem:[%s277 + $0x40] sm:$0xff]
      %v289 = vld [vmem:[%s277 + $0x50] sm:$0xff]
      %v290 = vld [vmem:[%s277 + $0x60] sm:$0xff]
      %v291 = vld [vmem:[%s277 + $0x70] sm:$0xff]
      %v292 = vld [vmem:[%s1] sm:$0xff]
      %v293 = vld [vmem:[%s1 + $0x8] sm:$0xff]
      %v294 = vld [vmem:[%s1 + $0x10] sm:$0xff]
      %v295 = vld [vmem:[%s1 + $0x18] sm:$0xff]
      %v296 = vld [vmem:[%s1 + $0x20] sm:$0xff]
      %v297 = vld [vmem:[%s1 + $0x28] sm:$0xff]
      %v298 = vld [vmem:[%s1 + $0x30] sm:$0xff]
      %v299 = vld [vmem:[%s1 + $0x38] sm:$0xff]
      %v300 = vld [vmem:[%s1 + $0x40] sm:$0xff]
      %v301 = vld [vmem:[%s1 + $0x48] sm:$0xff]
      %v302 = vld [vmem:[%s1 + $0x50] sm:$0xff]
      %v303 = vld [vmem:[%s1 + $0x58] sm:$0xff]
      %v304 = vld [vmem:[%s1 + $0x60] sm:$0xff]
      %v305 = vld [vmem:[%s1 + $0x68] sm:$0xff]
      %v306 = vld [vmem:[%s1 + $0x70] sm:$0xff]
      %v307 = vld [vmem:[%s1 + $0x78] sm:$0xff]
      %s308 = scalar_lea.vmem %s277, 144
      %v309 = vld [vmem:[%s308] sm:$0xff]
      %v310 = vld [vmem:[%s308 + $0x10] sm:$0xff]
      %v311 = vld [vmem:[%s308 + $0x20] sm:$0xff]
      %v312 = vld [vmem:[%s308 + $0x30] sm:$0xff]
      %v313 = vld [vmem:[%s308 + $0x40] sm:$0xff]
      %v314 = vld [vmem:[%s308 + $0x50] sm:$0xff]
      %v315 = vld [vmem:[%s308 + $0x60] sm:$0xff]
      %v316 = vld [vmem:[%s308 + $0x70] sm:$0xff]
      %s317 = scalar_lea.vmem %s1, 128
      %v318 = vld [vmem:[%s317] sm:$0xff]
      %v319 = vld [vmem:[%s317 + $0x8] sm:$0xff]
      %v320 = vld [vmem:[%s317 + $0x10] sm:$0xff]
      %v321 = vld [vmem:[%s317 + $0x18] sm:$0xff]
      %v322 = vld [vmem:[%s317 + $0x20] sm:$0xff]
      %v323 = vld [vmem:[%s317 + $0x28] sm:$0xff]
      %v324 = vld [vmem:[%s317 + $0x30] sm:$0xff]
      %v325 = vld [vmem:[%s317 + $0x38] sm:$0xff]
      %v326 = vld [vmem:[%s317 + $0x40] sm:$0xff]
      %v327 = vld [vmem:[%s317 + $0x48] sm:$0xff]
      %v328 = vld [vmem:[%s317 + $0x50] sm:$0xff]
      %v329 = vld [vmem:[%s317 + $0x58] sm:$0xff]
      %v330 = vld [vmem:[%s317 + $0x60] sm:$0xff]
      %v331 = vld [vmem:[%s317 + $0x68] sm:$0xff]
      %v332 = vld [vmem:[%s317 + $0x70] sm:$0xff]
      %v333 = vld [vmem:[%s317 + $0x78] sm:$0xff]
      %334 = vmatprep.subr.mxu0 0.0
      %335 = vmatpush1.msra.mxu0 %v318
      %336 = vmatprep.subr.mxu0 0.0
      %337 = vmatpush1.msra.mxu0 %v319
      %338 = vmatprep.subr.mxu0 0.0
      %339 = vmatpush1.msra.mxu0 %v320
      %340 = vmatprep.subr.mxu0 0.0
      %341 = vmatpush1.msra.mxu0 %v321
      %342 = vmatprep.subr.mxu0 0.0
      %343 = vmatpush1.msra.mxu0 %v322
      %344 = vmatprep.subr.mxu0 0.0
      %345 = vmatpush1.msra.mxu0 %v323
      %346 = vmatprep.subr.mxu0 0.0
      %347 = vmatpush1.msra.mxu0 %v324
      %348 = vmatprep.subr.mxu0 0.0
      %349 = vmatpush1.msra.mxu0 %v325
      %350 = vmatprep.subr.mxu0 0.0
      %351 = vmatpush1.msra.mxu0 %v326
      %352 = vmatprep.subr.mxu0 0.0
      %353 = vmatpush1.msra.mxu0 %v327
      %354 = vmatprep.subr.mxu0 0.0
      %355 = vmatpush1.msra.mxu0 %v328
      %356 = vmatprep.subr.mxu0 0.0
      %357 = vmatpush1.msra.mxu0 %v329
      %358 = vmatprep.subr.mxu0 0.0
      %359 = vmatpush1.msra.mxu0 %v330
      %360 = vmatprep.subr.mxu0 0.0
      %361 = vmatpush1.msra.mxu0 %v331
      %362 = vmatprep.subr.mxu0 0.0
      %363 = vmatpush1.msra.mxu0 %v332
      %364 = vmatprep.subr.mxu0 0.0
      %365 = vmatpush1.msra.mxu0 %v333
      %366 = vmatprep.subr.mxu0 0.0
      %367 = vmatpush1.msra.mxu0 0.0
      %368 = vmatprep.subr.mxu0 0.0
      %369 = vmatpush1.msra.mxu0 0.0
      %370 = vmatprep.subr.mxu0 0.0
      %371 = vmatpush1.msra.mxu0 0.0
      %372 = vmatprep.subr.mxu0 0.0
      %373 = vmatpush1.msra.mxu0 0.0
      %374 = vmatprep.subr.mxu0 0.0
      %375 = vmatpush1.msra.mxu0 0.0
      %376 = vmatprep.subr.mxu0 0.0
      %377 = vmatpush1.msra.mxu0 0.0
      %378 = vmatprep.subr.mxu0 0.0
      %379 = vmatpush1.msra.mxu0 0.0
      %380 = vmatprep.subr.mxu0 0.0
      %381 = vmatpush1.msra.mxu0 0.0
      %382 = vmatprep.subr.mxu0 0.0
      %383 = vmatpush1.msra.mxu0 0.0
      %384 = vmatprep.subr.mxu0 0.0
      %385 = vmatpush1.msra.mxu0 0.0
      %386 = vmatprep.subr.mxu0 0.0
      %387 = vmatpush1.msra.mxu0 0.0
      %388 = vmatprep.subr.mxu0 0.0
      %389 = vmatpush1.msra.mxu0 0.0
      %390 = vmatprep.subr.mxu0 0.0
      %391 = vmatpush1.msra.mxu0 0.0
      %392 = vmatprep.subr.mxu0 0.0
      %393 = vmatpush1.msra.mxu0 0.0
      %394 = vmatprep.subr.mxu0 0.0
      %395 = vmatpush1.msra.mxu0 0.0
      %396 = vmatprep.subr.mxu0 0.0
      %397 = vmatpush1.msra.mxu0 0.0
      %398 = vmatprep.mubr.f32.mxu0 0.0
      %399 = vmatmul.mubr.f32.gmra.mrb[0].mxu0 %v309
      %v400 = vpop.f32.mrb[0].mxu0
      %v401 = vadd.f32 0.0, %v400
      %v402 = vpop.f32.mrb[0].mxu0
      %403 = vmatprep.mubr.f32.mxu0 0.0
      %404 = vmatmul.mubr.f32.gmra.mrb[0].mxu0 %v310
      %v405 = vpop.f32.mrb[0].mxu0
      %v406 = vadd.f32 0.0, %v405
      %v407 = vpop.f32.mrb[0].mxu0
      %408 = vmatprep.mubr.f32.mxu0 0.0
      %409 = vmatmul.mubr.f32.gmra.mrb[0].mxu0 %v311
      %v410 = vpop.f32.mrb[0].mxu0
      %v411 = vadd.f32 0.0, %v410
      %v412 = vpop.f32.mrb[0].mxu0
      %413 = vmatprep.mubr.f32.mxu0 0.0
      %414 = vmatmul.mubr.f32.gmra.mrb[0].mxu0 %v312
      %v415 = vpop.f32.mrb[0].mxu0
      %v416 = vadd.f32 0.0, %v415
      %v417 = vpop.f32.mrb[0].mxu0
      %418 = vmatprep.mubr.f32.mxu0 0.0
      %419 = vmatmul.mubr.f32.gmra.mrb[0].mxu0 %v313
      %v420 = vpop.f32.mrb[0].mxu0
      %v421 = vadd.f32 0.0, %v420
      %v422 = vpop.f32.mrb[0].mxu0
      %423 = vmatprep.mubr.f32.mxu0 0.0
      %424 = vmatmul.mubr.f32.gmra.mrb[0].mxu0 %v314
      %v425 = vpop.f32.mrb[0].mxu0
      %v426 = vadd.f32 0.0, %v425
      %v427 = vpop.f32.mrb[0].mxu0
      %428 = vmatprep.mubr.f32.mxu0 0.0
      %429 = vmatmul.mubr.f32.gmra.mrb[0].mxu0 %v315
      %v430 = vpop.f32.mrb[0].mxu0
      %v431 = vadd.f32 0.0, %v430
      %v432 = vpop.f32.mrb[0].mxu0
      %433 = vmatprep.mubr.f32.mxu0 0.0
      %434 = vmatmul.mubr.f32.gmra.mrb[0].mxu0 %v316
      %v435 = vpop.f32.mrb[0].mxu0
      %v436 = vadd.f32 0.0, %v435
      %v437 = vpop.f32.mrb[0].mxu0
      %438 = vdwg.mxu0
      %439 = vmatprep.subr.mxu0 0.0
      %440 = vmatpush1.msra.mxu0 %v292
      %441 = vmatprep.subr.mxu0 0.0
      %442 = vmatpush1.msra.mxu0 %v293
      %443 = vmatprep.subr.mxu0 0.0
      %444 = vmatpush1.msra.mxu0 %v294
      %445 = vmatprep.subr.mxu0 0.0
      %446 = vmatpush1.msra.mxu0 %v295
      %447 = vmatprep.subr.mxu0 0.0
      %448 = vmatpush1.msra.mxu0 %v296
      %449 = vmatprep.subr.mxu0 0.0
      %450 = vmatpush1.msra.mxu0 %v297
      %451 = vmatprep.subr.mxu0 0.0
      %452 = vmatpush1.msra.mxu0 %v298
      %453 = vmatprep.subr.mxu0 0.0
      %454 = vmatpush1.msra.mxu0 %v299
      %455 = vmatprep.subr.mxu0 0.0
      %456 = vmatpush1.msra.mxu0 %v300
      %457 = vmatprep.subr.mxu0 0.0
      %458 = vmatpush1.msra.mxu0 %v301
      %459 = vmatprep.subr.mxu0 0.0
      %460 = vmatpush1.msra.mxu0 %v302
      %461 = vmatprep.subr.mxu0 0.0
      %462 = vmatpush1.msra.mxu0 %v303
      %463 = vmatprep.subr.mxu0 0.0
      %464 = vmatpush1.msra.mxu0 %v304
      %465 = vmatprep.subr.mxu0 0.0
      %466 = vmatpush1.msra.mxu0 %v305
      %467 = vmatprep.subr.mxu0 0.0
      %468 = vmatpush1.msra.mxu0 %v306
      %469 = vmatprep.subr.mxu0 0.0
      %470 = vmatpush1.msra.mxu0 %v307
      %471 = vmatprep.subr.mxu0 0.0
      %472 = vmatpush1.msra.mxu0 0.0
      %473 = vmatprep.subr.mxu0 0.0
      %474 = vmatpush1.msra.mxu0 0.0
      %475 = vmatprep.subr.mxu0 0.0
      %476 = vmatpush1.msra.mxu0 0.0
      %477 = vmatprep.subr.mxu0 0.0
      %478 = vmatpush1.msra.mxu0 0.0
      %479 = vmatprep.subr.mxu0 0.0
      %480 = vmatpush1.msra.mxu0 0.0
      %481 = vmatprep.subr.mxu0 0.0
      %482 = vmatpush1.msra.mxu0 0.0
      %483 = vmatprep.subr.mxu0 0.0
      %484 = vmatpush1.msra.mxu0 0.0
      %485 = vmatprep.subr.mxu0 0.0
      %486 = vmatpush1.msra.mxu0 0.0
      %487 = vmatprep.subr.mxu0 0.0
      %488 = vmatpush1.msra.mxu0 0.0
      %489 = vmatprep.subr.mxu0 0.0
      %490 = vmatpush1.msra.mxu0 0.0
      %491 = vmatprep.subr.mxu0 0.0
      %492 = vmatpush1.msra.mxu0 0.0
      %493 = vmatprep.subr.mxu0 0.0
      %494 = vmatpush1.msra.mxu0 0.0
      %495 = vmatprep.subr.mxu0 0.0
      %496 = vmatpush1.msra.mxu0 0.0
      %497 = vmatprep.subr.mxu0 0.0
      %498 = vmatpush1.msra.mxu0 0.0
      %499 = vmatprep.subr.mxu0 0.0
      %500 = vmatpush1.msra.mxu0 0.0
      %501 = vmatprep.subr.mxu0 0.0
      %502 = vmatpush1.msra.mxu0 0.0
      %503 = vmatprep.mubr.f32.mxu0 0.0
      %504 = vmatmul.mubr.f32.gmra.mrb[0].mxu0 %v284
      %v505 = vpop.f32.mrb[0].mxu0
      %v506 = vadd.f32 %v401, %v505
      %v507 = vpop.f32.mrb[0].mxu0
      %508 = vmatprep.mubr.f32.mxu0 0.0
      %509 = vmatmul.mubr.f32.gmra.mrb[0].mxu0 %v285
      %v510 = vpop.f32.mrb[0].mxu0
      %v511 = vadd.f32 %v406, %v510
      %v512 = vpop.f32.mrb[0].mxu0
      %513 = vmatprep.mubr.f32.mxu0 0.0
      %514 = vmatmul.mubr.f32.gmra.mrb[0].mxu0 %v286
      %v515 = vpop.f32.mrb[0].mxu0
      %v516 = vadd.f32 %v411, %v515
      %v517 = vpop.f32.mrb[0].mxu0
      %518 = vmatprep.mubr.f32.mxu0 0.0
      %519 = vmatmul.mubr.f32.gmra.mrb[0].mxu0 %v287
      %v520 = vpop.f32.mrb[0].mxu0
      %v521 = vadd.f32 %v416, %v520
      %v522 = vpop.f32.mrb[0].mxu0
      %523 = vmatprep.mubr.f32.mxu0 0.0
      %524 = vmatmul.mubr.f32.gmra.mrb[0].mxu0 %v288
      %v525 = vpop.f32.mrb[0].mxu0
      %v526 = vadd.f32 %v421, %v525
      %v527 = vpop.f32.mrb[0].mxu0
      %528 = vmatprep.mubr.f32.mxu0 0.0
      %529 = vmatmul.mubr.f32.gmra.mrb[0].mxu0 %v289
      %v530 = vpop.f32.mrb[0].mxu0
      %v531 = vadd.f32 %v426, %v530
      %v532 = vpop.f32.mrb[0].mxu0
      %533 = vmatprep.mubr.f32.mxu0 0.0
      %534 = vmatmul.mubr.f32.gmra.mrb[0].mxu0 %v290
      %v535 = vpop.f32.mrb[0].mxu0
      %v536 = vadd.f32 %v431, %v535
      %v537 = vpop.f32.mrb[0].mxu0
      %538 = vmatprep.mubr.f32.mxu0 0.0
      %539 = vmatmul.mubr.f32.gmra.mrb[0].mxu0 %v291
      %v540 = vpop.f32.mrb[0].mxu0
      %v541 = vadd.f32 %v436, %v540
      %v542 = vpop.f32.mrb[0].mxu0
      %543 = vdwg.mxu0
      %v544 = vld [vmem:[%s277 + $0x1] sm:$0xff]
      %v545 = vld [vmem:[%s277 + $0x11] sm:$0xff]
      %v546 = vld [vmem:[%s277 + $0x21] sm:$0xff]
      %v547 = vld [vmem:[%s277 + $0x31] sm:$0xff]
      %v548 = vld [vmem:[%s277 + $0x41] sm:$0xff]
      %v549 = vld [vmem:[%s277 + $0x51] sm:$0xff]
      %v550 = vld [vmem:[%s277 + $0x61] sm:$0xff]
      %v551 = vld [vmem:[%s277 + $0x71] sm:$0xff]
      %s552 = scalar_lea.vmem %s1, 256
      %v553 = vld [vmem:[%s552] sm:$0xff]
      %v554 = vld [vmem:[%s552 + $0x8] sm:$0xff]
      %v555 = vld [vmem:[%s552 + $0x10] sm:$0xff]
      %v556 = vld [vmem:[%s552 + $0x18] sm:$0xff]
      %v557 = vld [vmem:[%s552 + $0x20] sm:$0xff]
      %v558 = vld [vmem:[%s552 + $0x28] sm:$0xff]
      %v559 = vld [vmem:[%s552 + $0x30] sm:$0xff]
      %v560 = vld [vmem:[%s552 + $0x38] sm:$0xff]
      %v561 = vld [vmem:[%s552 + $0x40] sm:$0xff]
      %v562 = vld [vmem:[%s552 + $0x48] sm:$0xff]
      %v563 = vld [vmem:[%s552 + $0x50] sm:$0xff]
      %v564 = vld [vmem:[%s552 + $0x58] sm:$0xff]
      %v565 = vld [vmem:[%s552 + $0x60] sm:$0xff]
      %v566 = vld [vmem:[%s552 + $0x68] sm:$0xff]
      %v567 = vld [vmem:[%s552 + $0x70] sm:$0xff]
      %v568 = vld [vmem:[%s552 + $0x78] sm:$0xff]
      %569 = vmatprep.subr.mxu0 0.0
      %570 = vmatpush1.msra.mxu0 %v553
      %571 = vmatprep.subr.mxu0 0.0
      %572 = vmatpush1.msra.mxu0 %v554
      %573 = vmatprep.subr.mxu0 0.0
      %574 = vmatpush1.msra.mxu0 %v555
      %575 = vmatprep.subr.mxu0 0.0
      %576 = vmatpush1.msra.mxu0 %v556
      %577 = vmatprep.subr.mxu0 0.0
      %578 = vmatpush1.msra.mxu0 %v557
      %579 = vmatprep.subr.mxu0 0.0
      %580 = vmatpush1.msra.mxu0 %v558
      %581 = vmatprep.subr.mxu0 0.0
      %582 = vmatpush1.msra.mxu0 %v559
      %583 = vmatprep.subr.mxu0 0.0
      %584 = vmatpush1.msra.mxu0 %v560
      %585 = vmatprep.subr.mxu0 0.0
      %586 = vmatpush1.msra.mxu0 %v561
      %587 = vmatprep.subr.mxu0 0.0
      %588 = vmatpush1.msra.mxu0 %v562
      %589 = vmatprep.subr.mxu0 0.0
      %590 = vmatpush1.msra.mxu0 %v563
      %591 = vmatprep.subr.mxu0 0.0
      %592 = vmatpush1.msra.mxu0 %v564
      %593 = vmatprep.subr.mxu0 0.0
      %594 = vmatpush1.msra.mxu0 %v565
      %595 = vmatprep.subr.mxu0 0.0
      %596 = vmatpush1.msra.mxu0 %v566
      %597 = vmatprep.subr.mxu0 0.0
      %598 = vmatpush1.msra.mxu0 %v567
      %599 = vmatprep.subr.mxu0 0.0
      %600 = vmatpush1.msra.mxu0 %v568
      %601 = vmatprep.subr.mxu0 0.0
      %602 = vmatpush1.msra.mxu0 0.0
      %603 = vmatprep.subr.mxu0 0.0
      %604 = vmatpush1.msra.mxu0 0.0
      %605 = vmatprep.subr.mxu0 0.0
      %606 = vmatpush1.msra.mxu0 0.0
      %607 = vmatprep.subr.mxu0 0.0
      %608 = vmatpush1.msra.mxu0 0.0
      %609 = vmatprep.subr.mxu0 0.0
      %610 = vmatpush1.msra.mxu0 0.0
      %611 = vmatprep.subr.mxu0 0.0
      %612 = vmatpush1.msra.mxu0 0.0
      %613 = vmatprep.subr.mxu0 0.0
      %614 = vmatpush1.msra.mxu0 0.0
      %615 = vmatprep.subr.mxu0 0.0
      %616 = vmatpush1.msra.mxu0 0.0
      %617 = vmatprep.subr.mxu0 0.0
      %618 = vmatpush1.msra.mxu0 0.0
      %619 = vmatprep.subr.mxu0 0.0
      %620 = vmatpush1.msra.mxu0 0.0
      %621 = vmatprep.subr.mxu0 0.0
      %622 = vmatpush1.msra.mxu0 0.0
      %623 = vmatprep.subr.mxu0 0.0
      %624 = vmatpush1.msra.mxu0 0.0
      %625 = vmatprep.subr.mxu0 0.0
      %626 = vmatpush1.msra.mxu0 0.0
      %627 = vmatprep.subr.mxu0 0.0
      %628 = vmatpush1.msra.mxu0 0.0
      %629 = vmatprep.subr.mxu0 0.0
      %630 = vmatpush1.msra.mxu0 0.0
      %631 = vmatprep.subr.mxu0 0.0
      %632 = vmatpush1.msra.mxu0 0.0
      %633 = vmatprep.mubr.f32.mxu0 0.0
      %634 = vmatmul.mubr.f32.gmra.mrb[0].mxu0 %v544
      %v635 = vpop.f32.mrb[0].mxu0
      %v636 = vadd.f32 0.0, %v635
      %v637 = vpop.f32.mrb[0].mxu0
      %638 = vmatprep.mubr.f32.mxu0 0.0
      %639 = vmatmul.mubr.f32.gmra.mrb[0].mxu0 %v545
      %v640 = vpop.f32.mrb[0].mxu0
      %v641 = vadd.f32 0.0, %v640
      %v642 = vpop.f32.mrb[0].mxu0
      %643 = vmatprep.mubr.f32.mxu0 0.0
      %644 = vmatmul.mubr.f32.gmra.mrb[0].mxu0 %v546
      %v645 = vpop.f32.mrb[0].mxu0
      %v646 = vadd.f32 0.0, %v645
      %v647 = vpop.f32.mrb[0].mxu0
      %648 = vmatprep.mubr.f32.mxu0 0.0
      %649 = vmatmul.mubr.f32.gmra.mrb[0].mxu0 %v547
      %v650 = vpop.f32.mrb[0].mxu0
      %v651 = vadd.f32 0.0, %v650
      %v652 = vpop.f32.mrb[0].mxu0
      %653 = vmatprep.mubr.f32.mxu0 0.0
      %654 = vmatmul.mubr.f32.gmra.mrb[0].mxu0 %v548
      %v655 = vpop.f32.mrb[0].mxu0
      %v656 = vadd.f32 0.0, %v655
      %v657 = vpop.f32.mrb[0].mxu0
      %658 = vmatprep.mubr.f32.mxu0 0.0
      %659 = vmatmul.mubr.f32.gmra.mrb[0].mxu0 %v549
      %v660 = vpop.f32.mrb[0].mxu0
      %v661 = vadd.f32 0.0, %v660
      %v662 = vpop.f32.mrb[0].mxu0
      %663 = vmatprep.mubr.f32.mxu0 0.0
      %664 = vmatmul.mubr.f32.gmra.mrb[0].mxu0 %v550
      %v665 = vpop.f32.mrb[0].mxu0
      %v666 = vadd.f32 0.0, %v665
      %v667 = vpop.f32.mrb[0].mxu0
      %668 = vmatprep.mubr.f32.mxu0 0.0
      %669 = vmatmul.mubr.f32.gmra.mrb[0].mxu0 %v551
      %v670 = vpop.f32.mrb[0].mxu0
      %v671 = vadd.f32 0.0, %v670
      %v672 = vpop.f32.mrb[0].mxu0
      %673 = vdwg.mxu0
      %v674 = vadd.f32 %v506, %v636
      %v675 = vadd.f32 %v511, %v641
      %v676 = vadd.f32 %v516, %v646
      %v677 = vadd.f32 %v521, %v651
      %v678 = vadd.f32 %v526, %v656
      %v679 = vadd.f32 %v531, %v661
      %v680 = vadd.f32 %v536, %v666
      %v681 = vadd.f32 %v541, %v671
      %s682 = scalar_lea.vmem %s277, 288
      %v683 = vld [vmem:[%s682] sm:$0xff]
      %v684 = vld [vmem:[%s682 + $0x10] sm:$0xff]
      %v685 = vld [vmem:[%s682 + $0x20] sm:$0xff]
      %v686 = vld [vmem:[%s682 + $0x30] sm:$0xff]
      %v687 = vld [vmem:[%s682 + $0x40] sm:$0xff]
      %v688 = vld [vmem:[%s682 + $0x50] sm:$0xff]
      %v689 = vld [vmem:[%s682 + $0x60] sm:$0xff]
      %v690 = vld [vmem:[%s682 + $0x70] sm:$0xff]
      %s691 = scalar_lea.vmem %s1, 384
      %v692 = vld [vmem:[%s691] sm:$0xff]
      %v693 = vld [vmem:[%s691 + $0x8] sm:$0xff]
      %v694 = vld [vmem:[%s691 + $0x10] sm:$0xff]
      %v695 = vld [vmem:[%s691 + $0x18] sm:$0xff]
      %v696 = vld [vmem:[%s691 + $0x20] sm:$0xff]
      %v697 = vld [vmem:[%s691 + $0x28] sm:$0xff]
      %v698 = vld [vmem:[%s691 + $0x30] sm:$0xff]
      %v699 = vld [vmem:[%s691 + $0x38] sm:$0xff]
      %v700 = vld [vmem:[%s691 + $0x40] sm:$0xff]
      %v701 = vld [vmem:[%s691 + $0x48] sm:$0xff]
      %v702 = vld [vmem:[%s691 + $0x50] sm:$0xff]
      %v703 = vld [vmem:[%s691 + $0x58] sm:$0xff]
      %v704 = vld [vmem:[%s691 + $0x60] sm:$0xff]
      %v705 = vld [vmem:[%s691 + $0x68] sm:$0xff]
      %v706 = vld [vmem:[%s691 + $0x70] sm:$0xff]
      %v707 = vld [vmem:[%s691 + $0x78] sm:$0xff]
      %708 = vmatprep.subr.mxu0 0.0
      %709 = vmatpush1.msra.mxu0 %v692
      %710 = vmatprep.subr.mxu0 0.0
      %711 = vmatpush1.msra.mxu0 %v693
      %712 = vmatprep.subr.mxu0 0.0
      %713 = vmatpush1.msra.mxu0 %v694
      %714 = vmatprep.subr.mxu0 0.0
      %715 = vmatpush1.msra.mxu0 %v695
      %716 = vmatprep.subr.mxu0 0.0
      %717 = vmatpush1.msra.mxu0 %v696
      %718 = vmatprep.subr.mxu0 0.0
      %719 = vmatpush1.msra.mxu0 %v697
      %720 = vmatprep.subr.mxu0 0.0
      %721 = vmatpush1.msra.mxu0 %v698
      %722 = vmatprep.subr.mxu0 0.0
      %723 = vmatpush1.msra.mxu0 %v699
      %724 = vmatprep.subr.mxu0 0.0
      %725 = vmatpush1.msra.mxu0 %v700
      %726 = vmatprep.subr.mxu0 0.0
      %727 = vmatpush1.msra.mxu0 %v701
      %728 = vmatprep.subr.mxu0 0.0
      %729 = vmatpush1.msra.mxu0 %v702
      %730 = vmatprep.subr.mxu0 0.0
      %731 = vmatpush1.msra.mxu0 %v703
      %732 = vmatprep.subr.mxu0 0.0
      %733 = vmatpush1.msra.mxu0 %v704
      %734 = vmatprep.subr.mxu0 0.0
      %735 = vmatpush1.msra.mxu0 %v705
      %736 = vmatprep.subr.mxu0 0.0
      %737 = vmatpush1.msra.mxu0 %v706
      %738 = vmatprep.subr.mxu0 0.0
      %739 = vmatpush1.msra.mxu0 %v707
      %740 = vmatprep.subr.mxu0 0.0
      %741 = vmatpush1.msra.mxu0 0.0
      %742 = vmatprep.subr.mxu0 0.0
      %743 = vmatpush1.msra.mxu0 0.0
      %744 = vmatprep.subr.mxu0 0.0
      %745 = vmatpush1.msra.mxu0 0.0
      %746 = vmatprep.subr.mxu0 0.0
      %747 = vmatpush1.msra.mxu0 0.0
      %748 = vmatprep.subr.mxu0 0.0
      %749 = vmatpush1.msra.mxu0 0.0
      %750 = vmatprep.subr.mxu0 0.0
      %751 = vmatpush1.msra.mxu0 0.0
      %752 = vmatprep.subr.mxu0 0.0
      %753 = vmatpush1.msra.mxu0 0.0
      %754 = vmatprep.subr.mxu0 0.0
      %755 = vmatpush1.msra.mxu0 0.0
      %756 = vmatprep.subr.mxu0 0.0
      %757 = vmatpush1.msra.mxu0 0.0
      %758 = vmatprep.subr.mxu0 0.0
      %759 = vmatpush1.msra.mxu0 0.0
      %760 = vmatprep.subr.mxu0 0.0
      %761 = vmatpush1.msra.mxu0 0.0
      %762 = vmatprep.subr.mxu0 0.0
      %763 = vmatpush1.msra.mxu0 0.0
      %764 = vmatprep.subr.mxu0 0.0
      %765 = vmatpush1.msra.mxu0 0.0
      %766 = vmatprep.subr.mxu0 0.0
      %767 = vmatpush1.msra.mxu0 0.0
      %768 = vmatprep.subr.mxu0 0.0
      %769 = vmatpush1.msra.mxu0 0.0
      %770 = vmatprep.subr.mxu0 0.0
      %771 = vmatpush1.msra.mxu0 0.0
      %772 = vmatprep.mubr.f32.mxu0 0.0
      %773 = vmatmul.mubr.f32.gmra.mrb[0].mxu0 %v683
      %v774 = vpop.f32.mrb[0].mxu0
      %v775 = vadd.f32 0.0, %v774
      %v776 = vpop.f32.mrb[0].mxu0
      %777 = vmatprep.mubr.f32.mxu0 0.0
      %778 = vmatmul.mubr.f32.gmra.mrb[0].mxu0 %v684
      %v779 = vpop.f32.mrb[0].mxu0
      %v780 = vadd.f32 0.0, %v779
      %v781 = vpop.f32.mrb[0].mxu0
      %782 = vmatprep.mubr.f32.mxu0 0.0
      %783 = vmatmul.mubr.f32.gmra.mrb[0].mxu0 %v685
      %v784 = vpop.f32.mrb[0].mxu0
      %v785 = vadd.f32 0.0, %v784
      %v786 = vpop.f32.mrb[0].mxu0
      %787 = vmatprep.mubr.f32.mxu0 0.0
      %788 = vmatmul.mubr.f32.gmra.mrb[0].mxu0 %v686
      %v789 = vpop.f32.mrb[0].mxu0
      %v790 = vadd.f32 0.0, %v789
      %v791 = vpop.f32.mrb[0].mxu0
      %792 = vmatprep.mubr.f32.mxu0 0.0
      %793 = vmatmul.mubr.f32.gmra.mrb[0].mxu0 %v687
      %v794 = vpop.f32.mrb[0].mxu0
      %v795 = vadd.f32 0.0, %v794
      %v796 = vpop.f32.mrb[0].mxu0
      %797 = vmatprep.mubr.f32.mxu0 0.0
      %798 = vmatmul.mubr.f32.gmra.mrb[0].mxu0 %v688
      %v799 = vpop.f32.mrb[0].mxu0
      %v800 = vadd.f32 0.0, %v799
      %v801 = vpop.f32.mrb[0].mxu0
      %802 = vmatprep.mubr.f32.mxu0 0.0
      %803 = vmatmul.mubr.f32.gmra.mrb[0].mxu0 %v689
      %v804 = vpop.f32.mrb[0].mxu0
      %v805 = vadd.f32 0.0, %v804
      %v806 = vpop.f32.mrb[0].mxu0
      %807 = vmatprep.mubr.f32.mxu0 0.0
      %808 = vmatmul.mubr.f32.gmra.mrb[0].mxu0 %v690
      %v809 = vpop.f32.mrb[0].mxu0
      %v810 = vadd.f32 0.0, %v809
      %v811 = vpop.f32.mrb[0].mxu0
      %812 = vdwg.mxu0
      %v813 = vadd.f32 %v674, %v775
      %v814 = vadd.f32 %v675, %v780
      %v815 = vadd.f32 %v676, %v785
      %v816 = vadd.f32 %v677, %v790
      %v817 = vadd.f32 %v678, %v795
      %v818 = vadd.f32 %v679, %v800
      %v819 = vadd.f32 %v680, %v805
      %v820 = vadd.f32 %v681, %v810
      %s821 = scalar_lea.vmem %s277, 432
      %v822 = vld [vmem:[%s821] sm:$0xff]
      %v823 = vld [vmem:[%s821 + $0x10] sm:$0xff]
      %v824 = vld [vmem:[%s821 + $0x20] sm:$0xff]
      %v825 = vld [vmem:[%s821 + $0x30] sm:$0xff]
      %v826 = vld [vmem:[%s821 + $0x40] sm:$0xff]
      %v827 = vld [vmem:[%s821 + $0x50] sm:$0xff]
      %v828 = vld [vmem:[%s821 + $0x60] sm:$0xff]
      %v829 = vld [vmem:[%s821 + $0x70] sm:$0xff]
      %s830 = scalar_lea.vmem %s1, 512
      %v831 = vld [vmem:[%s830] sm:$0xff]
      %v832 = vld [vmem:[%s830 + $0x8] sm:$0xff]
      %v833 = vld [vmem:[%s830 + $0x10] sm:$0xff]
      %v834 = vld [vmem:[%s830 + $0x18] sm:$0xff]
      %v835 = vld [vmem:[%s830 + $0x20] sm:$0xff]
      %v836 = vld [vmem:[%s830 + $0x28] sm:$0xff]
      %v837 = vld [vmem:[%s830 + $0x30] sm:$0xff]
      %v838 = vld [vmem:[%s830 + $0x38] sm:$0xff]
      %v839 = vld [vmem:[%s830 + $0x40] sm:$0xff]
      %v840 = vld [vmem:[%s830 + $0x48] sm:$0xff]
      %v841 = vld [vmem:[%s830 + $0x50] sm:$0xff]
      %v842 = vld [vmem:[%s830 + $0x58] sm:$0xff]
      %v843 = vld [vmem:[%s830 + $0x60] sm:$0xff]
      %v844 = vld [vmem:[%s830 + $0x68] sm:$0xff]
      %v845 = vld [vmem:[%s830 + $0x70] sm:$0xff]
      %v846 = vld [vmem:[%s830 + $0x78] sm:$0xff]
      %847 = vmatprep.subr.mxu0 0.0
      %848 = vmatpush1.msra.mxu0 %v831
      %849 = vmatprep.subr.mxu0 0.0
      %850 = vmatpush1.msra.mxu0 %v832
      %851 = vmatprep.subr.mxu0 0.0
      %852 = vmatpush1.msra.mxu0 %v833
      %853 = vmatprep.subr.mxu0 0.0
      %854 = vmatpush1.msra.mxu0 %v834
      %855 = vmatprep.subr.mxu0 0.0
      %856 = vmatpush1.msra.mxu0 %v835
      %857 = vmatprep.subr.mxu0 0.0
      %858 = vmatpush1.msra.mxu0 %v836
      %859 = vmatprep.subr.mxu0 0.0
      %860 = vmatpush1.msra.mxu0 %v837
      %861 = vmatprep.subr.mxu0 0.0
      %862 = vmatpush1.msra.mxu0 %v838
      %863 = vmatprep.subr.mxu0 0.0
      %864 = vmatpush1.msra.mxu0 %v839
      %865 = vmatprep.subr.mxu0 0.0
      %866 = vmatpush1.msra.mxu0 %v840
      %867 = vmatprep.subr.mxu0 0.0
      %868 = vmatpush1.msra.mxu0 %v841
      %869 = vmatprep.subr.mxu0 0.0
      %870 = vmatpush1.msra.mxu0 %v842
      %871 = vmatprep.subr.mxu0 0.0
      %872 = vmatpush1.msra.mxu0 %v843
      %873 = vmatprep.subr.mxu0 0.0
      %874 = vmatpush1.msra.mxu0 %v844
      %875 = vmatprep.subr.mxu0 0.0
      %876 = vmatpush1.msra.mxu0 %v845
      %877 = vmatprep.subr.mxu0 0.0
      %878 = vmatpush1.msra.mxu0 %v846
      %879 = vmatprep.subr.mxu0 0.0
      %880 = vmatpush1.msra.mxu0 0.0
      %881 = vmatprep.subr.mxu0 0.0
      %882 = vmatpush1.msra.mxu0 0.0
      %883 = vmatprep.subr.mxu0 0.0
      %884 = vmatpush1.msra.mxu0 0.0
      %885 = vmatprep.subr.mxu0 0.0
      %886 = vmatpush1.msra.mxu0 0.0
      %887 = vmatprep.subr.mxu0 0.0
      %888 = vmatpush1.msra.mxu0 0.0
      %889 = vmatprep.subr.mxu0 0.0
      %890 = vmatpush1.msra.mxu0 0.0
      %891 = vmatprep.subr.mxu0 0.0
      %892 = vmatpush1.msra.mxu0 0.0
      %893 = vmatprep.subr.mxu0 0.0
      %894 = vmatpush1.msra.mxu0 0.0
      %895 = vmatprep.subr.mxu0 0.0
      %896 = vmatpush1.msra.mxu0 0.0
      %897 = vmatprep.subr.mxu0 0.0
      %898 = vmatpush1.msra.mxu0 0.0
      %899 = vmatprep.subr.mxu0 0.0
      %900 = vmatpush1.msra.mxu0 0.0
      %901 = vmatprep.subr.mxu0 0.0
      %902 = vmatpush1.msra.mxu0 0.0
      %903 = vmatprep.subr.mxu0 0.0
      %904 = vmatpush1.msra.mxu0 0.0
      %905 = vmatprep.subr.mxu0 0.0
      %906 = vmatpush1.msra.mxu0 0.0
      %907 = vmatprep.subr.mxu0 0.0
      %908 = vmatpush1.msra.mxu0 0.0
      %909 = vmatprep.subr.mxu0 0.0
      %910 = vmatpush1.msra.mxu0 0.0
      %911 = vmatprep.mubr.f32.mxu0 0.0
      %912 = vmatmul.mubr.f32.gmra.mrb[0].mxu0 %v822
      %v913 = vpop.f32.mrb[0].mxu0
      %v914 = vadd.f32 0.0, %v913
      %v915 = vpop.f32.mrb[0].mxu0
      %916 = vmatprep.mubr.f32.mxu0 0.0
      %917 = vmatmul.mubr.f32.gmra.mrb[0].mxu0 %v823
      %v918 = vpop.f32.mrb[0].mxu0
      %v919 = vadd.f32 0.0, %v918
      %v920 = vpop.f32.mrb[0].mxu0
      %921 = vmatprep.mubr.f32.mxu0 0.0
      %922 = vmatmul.mubr.f32.gmra.mrb[0].mxu0 %v824
      %v923 = vpop.f32.mrb[0].mxu0
      %v924 = vadd.f32 0.0, %v923
      %v925 = vpop.f32.mrb[0].mxu0
      %926 = vmatprep.mubr.f32.mxu0 0.0
      %927 = vmatmul.mubr.f32.gmra.mrb[0].mxu0 %v825
      %v928 = vpop.f32.mrb[0].mxu0
      %v929 = vadd.f32 0.0, %v928
      %v930 = vpop.f32.mrb[0].mxu0
      %931 = vmatprep.mubr.f32.mxu0 0.0
      %932 = vmatmul.mubr.f32.gmra.mrb[0].mxu0 %v826
      %v933 = vpop.f32.mrb[0].mxu0
      %v934 = vadd.f32 0.0, %v933
      %v935 = vpop.f32.mrb[0].mxu0
      %936 = vmatprep.mubr.f32.mxu0 0.0
      %937 = vmatmul.mubr.f32.gmra.mrb[0].mxu0 %v827
      %v938 = vpop.f32.mrb[0].mxu0
      %v939 = vadd.f32 0.0, %v938
      %v940 = vpop.f32.mrb[0].mxu0
      %941 = vmatprep.mubr.f32.mxu0 0.0
      %942 = vmatmul.mubr.f32.gmra.mrb[0].mxu0 %v828
      %v943 = vpop.f32.mrb[0].mxu0
      %v944 = vadd.f32 0.0, %v943
      %v945 = vpop.f32.mrb[0].mxu0
      %946 = vmatprep.mubr.f32.mxu0 0.0
      %947 = vmatmul.mubr.f32.gmra.mrb[0].mxu0 %v829
      %v948 = vpop.f32.mrb[0].mxu0
      %v949 = vadd.f32 0.0, %v948
      %v950 = vpop.f32.mrb[0].mxu0
      %951 = vdwg.mxu0
      %v952 = vadd.f32 %v813, %v914
      %v953 = vadd.f32 %v814, %v919
      %v954 = vadd.f32 %v815, %v924
      %v955 = vadd.f32 %v816, %v929
      %v956 = vadd.f32 %v817, %v934
      %v957 = vadd.f32 %v818, %v939
      %v958 = vadd.f32 %v819, %v944
      %v959 = vadd.f32 %v820, %v949
      %v960 = vld [vmem:[%s682 + $0x1] sm:$0xff]
      %v961 = vld [vmem:[%s682 + $0x11] sm:$0xff]
      %v962 = vld [vmem:[%s682 + $0x21] sm:$0xff]
      %v963 = vld [vmem:[%s682 + $0x31] sm:$0xff]
      %v964 = vld [vmem:[%s682 + $0x41] sm:$0xff]
      %v965 = vld [vmem:[%s682 + $0x51] sm:$0xff]
      %v966 = vld [vmem:[%s682 + $0x61] sm:$0xff]
      %v967 = vld [vmem:[%s682 + $0x71] sm:$0xff]
      %s968 = scalar_lea.vmem %s1, 640
      %v969 = vld [vmem:[%s968] sm:$0xff]
      %v970 = vld [vmem:[%s968 + $0x8] sm:$0xff]
      %v971 = vld [vmem:[%s968 + $0x10] sm:$0xff]
      %v972 = vld [vmem:[%s968 + $0x18] sm:$0xff]
      %v973 = vld [vmem:[%s968 + $0x20] sm:$0xff]
      %v974 = vld [vmem:[%s968 + $0x28] sm:$0xff]
      %v975 = vld [vmem:[%s968 + $0x30] sm:$0xff]
      %v976 = vld [vmem:[%s968 + $0x38] sm:$0xff]
      %v977 = vld [vmem:[%s968 + $0x40] sm:$0xff]
      %v978 = vld [vmem:[%s968 + $0x48] sm:$0xff]
      %v979 = vld [vmem:[%s968 + $0x50] sm:$0xff]
      %v980 = vld [vmem:[%s968 + $0x58] sm:$0xff]
      %v981 = vld [vmem:[%s968 + $0x60] sm:$0xff]
      %v982 = vld [vmem:[%s968 + $0x68] sm:$0xff]
      %v983 = vld [vmem:[%s968 + $0x70] sm:$0xff]
      %v984 = vld [vmem:[%s968 + $0x78] sm:$0xff]
      %985 = vmatprep.subr.mxu0 0.0
      %986 = vmatpush1.msra.mxu0 %v969
      %987 = vmatprep.subr.mxu0 0.0
      %988 = vmatpush1.msra.mxu0 %v970
      %989 = vmatprep.subr.mxu0 0.0
      %990 = vmatpush1.msra.mxu0 %v971
      %991 = vmatprep.subr.mxu0 0.0
      %992 = vmatpush1.msra.mxu0 %v972
      %993 = vmatprep.subr.mxu0 0.0
      %994 = vmatpush1.msra.mxu0 %v973
      %995 = vmatprep.subr.mxu0 0.0
      %996 = vmatpush1.msra.mxu0 %v974
      %997 = vmatprep.subr.mxu0 0.0
      %998 = vmatpush1.msra.mxu0 %v975
      %999 = vmatprep.subr.mxu0 0.0
      %1000 = vmatpush1.msra.mxu0 %v976
      %1001 = vmatprep.subr.mxu0 0.0
      %1002 = vmatpush1.msra.mxu0 %v977
      %1003 = vmatprep.subr.mxu0 0.0
      %1004 = vmatpush1.msra.mxu0 %v978
      %1005 = vmatprep.subr.mxu0 0.0
      %1006 = vmatpush1.msra.mxu0 %v979
      %1007 = vmatprep.subr.mxu0 0.0
      %1008 = vmatpush1.msra.mxu0 %v980
      %1009 = vmatprep.subr.mxu0 0.0
      %1010 = vmatpush1.msra.mxu0 %v981
      %1011 = vmatprep.subr.mxu0 0.0
      %1012 = vmatpush1.msra.mxu0 %v982
      %1013 = vmatprep.subr.mxu0 0.0
      %1014 = vmatpush1.msra.mxu0 %v983
      %1015 = vmatprep.subr.mxu0 0.0
      %1016 = vmatpush1.msra.mxu0 %v984
      %1017 = vmatprep.subr.mxu0 0.0
      %1018 = vmatpush1.msra.mxu0 0.0
      %1019 = vmatprep.subr.mxu0 0.0
      %1020 = vmatpush1.msra.mxu0 0.0
      %1021 = vmatprep.subr.mxu0 0.0
      %1022 = vmatpush1.msra.mxu0 0.0
      %1023 = vmatprep.subr.mxu0 0.0
      %1024 = vmatpush1.msra.mxu0 0.0
      %1025 = vmatprep.subr.mxu0 0.0
      %1026 = vmatpush1.msra.mxu0 0.0
      %1027 = vmatprep.subr.mxu0 0.0
      %1028 = vmatpush1.msra.mxu0 0.0
      %1029 = vmatprep.subr.mxu0 0.0
      %1030 = vmatpush1.msra.mxu0 0.0
      %1031 = vmatprep.subr.mxu0 0.0
      %1032 = vmatpush1.msra.mxu0 0.0
      %1033 = vmatprep.subr.mxu0 0.0
      %1034 = vmatpush1.msra.mxu0 0.0
      %1035 = vmatprep.subr.mxu0 0.0
      %1036 = vmatpush1.msra.mxu0 0.0
      %1037 = vmatprep.subr.mxu0 0.0
      %1038 = vmatpush1.msra.mxu0 0.0
      %1039 = vmatprep.subr.mxu0 0.0
      %1040 = vmatpush1.msra.mxu0 0.0
      %1041 = vmatprep.subr.mxu0 0.0
      %1042 = vmatpush1.msra.mxu0 0.0
      %1043 = vmatprep.subr.mxu0 0.0
      %1044 = vmatpush1.msra.mxu0 0.0
      %1045 = vmatprep.subr.mxu0 0.0
      %1046 = vmatpush1.msra.mxu0 0.0
      %1047 = vmatprep.subr.mxu0 0.0
      %1048 = vmatpush1.msra.mxu0 0.0
      %1049 = vmatprep.mubr.f32.mxu0 0.0
      %1050 = vmatmul.mubr.f32.gmra.mrb[0].mxu0 %v960
      %v1051 = vpop.f32.mrb[0].mxu0
      %v1052 = vadd.f32 0.0, %v1051
      %v1053 = vpop.f32.mrb[0].mxu0
      %1054 = vmatprep.mubr.f32.mxu0 0.0
      %1055 = vmatmul.mubr.f32.gmra.mrb[0].mxu0 %v961
      %v1056 = vpop.f32.mrb[0].mxu0
      %v1057 = vadd.f32 0.0, %v1056
      %v1058 = vpop.f32.mrb[0].mxu0
      %1059 = vmatprep.mubr.f32.mxu0 0.0
      %1060 = vmatmul.mubr.f32.gmra.mrb[0].mxu0 %v962
      %v1061 = vpop.f32.mrb[0].mxu0
      %v1062 = vadd.f32 0.0, %v1061
      %v1063 = vpop.f32.mrb[0].mxu0
      %1064 = vmatprep.mubr.f32.mxu0 0.0
      %1065 = vmatmul.mubr.f32.gmra.mrb[0].mxu0 %v963
      %v1066 = vpop.f32.mrb[0].mxu0
      %v1067 = vadd.f32 0.0, %v1066
      %v1068 = vpop.f32.mrb[0].mxu0
      %1069 = vmatprep.mubr.f32.mxu0 0.0
      %1070 = vmatmul.mubr.f32.gmra.mrb[0].mxu0 %v964
      %v1071 = vpop.f32.mrb[0].mxu0
      %v1072 = vadd.f32 0.0, %v1071
      %v1073 = vpop.f32.mrb[0].mxu0
      %1074 = vmatprep.mubr.f32.mxu0 0.0
      %1075 = vmatmul.mubr.f32.gmra.mrb[0].mxu0 %v965
      %v1076 = vpop.f32.mrb[0].mxu0
      %v1077 = vadd.f32 0.0, %v1076
      %v1078 = vpop.f32.mrb[0].mxu0
      %1079 = vmatprep.mubr.f32.mxu0 0.0
      %1080 = vmatmul.mubr.f32.gmra.mrb[0].mxu0 %v966
      %v1081 = vpop.f32.mrb[0].mxu0
      %v1082 = vadd.f32 0.0, %v1081
      %v1083 = vpop.f32.mrb[0].mxu0
      %1084 = vmatprep.mubr.f32.mxu0 0.0
      %1085 = vmatmul.mubr.f32.gmra.mrb[0].mxu0 %v967
      %v1086 = vpop.f32.mrb[0].mxu0
      %v1087 = vadd.f32 0.0, %v1086
      %v1088 = vpop.f32.mrb[0].mxu0
      %1089 = vdwg.mxu0
      %v1090 = vadd.f32 %v952, %v1052
      %v1091 = vadd.f32 %v953, %v1057
      %v1092 = vadd.f32 %v954, %v1062
      %v1093 = vadd.f32 %v955, %v1067
      %v1094 = vadd.f32 %v956, %v1072
      %v1095 = vadd.f32 %v957, %v1077
      %v1096 = vadd.f32 %v958, %v1082
      %v1097 = vadd.f32 %v959, %v1087
      %s1098 = scalar_lea.vmem %s277, 16
      %v1099 = vld [vmem:[%s1098] sm:$0xff]
      %v1100 = vld [vmem:[%s1098 + $0x10] sm:$0xff]
      %v1101 = vld [vmem:[%s1098 + $0x20] sm:$0xff]
      %v1102 = vld [vmem:[%s1098 + $0x30] sm:$0xff]
      %v1103 = vld [vmem:[%s1098 + $0x40] sm:$0xff]
      %v1104 = vld [vmem:[%s1098 + $0x50] sm:$0xff]
      %v1105 = vld [vmem:[%s1098 + $0x60] sm:$0xff]
      %v1106 = vld [vmem:[%s1098 + $0x70] sm:$0xff]
      %s1107 = scalar_lea.vmem %s1, 768
      %v1108 = vld [vmem:[%s1107] sm:$0xff]
      %v1109 = vld [vmem:[%s1107 + $0x8] sm:$0xff]
      %v1110 = vld [vmem:[%s1107 + $0x10] sm:$0xff]
      %v1111 = vld [vmem:[%s1107 + $0x18] sm:$0xff]
      %v1112 = vld [vmem:[%s1107 + $0x20] sm:$0xff]
      %v1113 = vld [vmem:[%s1107 + $0x28] sm:$0xff]
      %v1114 = vld [vmem:[%s1107 + $0x30] sm:$0xff]
      %v1115 = vld [vmem:[%s1107 + $0x38] sm:$0xff]
      %v1116 = vld [vmem:[%s1107 + $0x40] sm:$0xff]
      %v1117 = vld [vmem:[%s1107 + $0x48] sm:$0xff]
      %v1118 = vld [vmem:[%s1107 + $0x50] sm:$0xff]
      %v1119 = vld [vmem:[%s1107 + $0x58] sm:$0xff]
      %v1120 = vld [vmem:[%s1107 + $0x60] sm:$0xff]
      %v1121 = vld [vmem:[%s1107 + $0x68] sm:$0xff]
      %v1122 = vld [vmem:[%s1107 + $0x70] sm:$0xff]
      %v1123 = vld [vmem:[%s1107 + $0x78] sm:$0xff]
      %1124 = vmatprep.subr.mxu0 0.0
      %1125 = vmatpush1.msra.mxu0 %v1108
      %1126 = vmatprep.subr.mxu0 0.0
      %1127 = vmatpush1.msra.mxu0 %v1109
      %1128 = vmatprep.subr.mxu0 0.0
      %1129 = vmatpush1.msra.mxu0 %v1110
      %1130 = vmatprep.subr.mxu0 0.0
      %1131 = vmatpush1.msra.mxu0 %v1111
      %1132 = vmatprep.subr.mxu0 0.0
      %1133 = vmatpush1.msra.mxu0 %v1112
      %1134 = vmatprep.subr.mxu0 0.0
      %1135 = vmatpush1.msra.mxu0 %v1113
      %1136 = vmatprep.subr.mxu0 0.0
      %1137 = vmatpush1.msra.mxu0 %v1114
      %1138 = vmatprep.subr.mxu0 0.0
      %1139 = vmatpush1.msra.mxu0 %v1115
      %1140 = vmatprep.subr.mxu0 0.0
      %1141 = vmatpush1.msra.mxu0 %v1116
      %1142 = vmatprep.subr.mxu0 0.0
      %1143 = vmatpush1.msra.mxu0 %v1117
      %1144 = vmatprep.subr.mxu0 0.0
      %1145 = vmatpush1.msra.mxu0 %v1118
      %1146 = vmatprep.subr.mxu0 0.0
      %1147 = vmatpush1.msra.mxu0 %v1119
      %1148 = vmatprep.subr.mxu0 0.0
      %1149 = vmatpush1.msra.mxu0 %v1120
      %1150 = vmatprep.subr.mxu0 0.0
      %1151 = vmatpush1.msra.mxu0 %v1121
      %1152 = vmatprep.subr.mxu0 0.0
      %1153 = vmatpush1.msra.mxu0 %v1122
      %1154 = vmatprep.subr.mxu0 0.0
      %1155 = vmatpush1.msra.mxu0 %v1123
      %1156 = vmatprep.subr.mxu0 0.0
      %1157 = vmatpush1.msra.mxu0 0.0
      %1158 = vmatprep.subr.mxu0 0.0
      %1159 = vmatpush1.msra.mxu0 0.0
      %1160 = vmatprep.subr.mxu0 0.0
      %1161 = vmatpush1.msra.mxu0 0.0
      %1162 = vmatprep.subr.mxu0 0.0
      %1163 = vmatpush1.msra.mxu0 0.0
      %1164 = vmatprep.subr.mxu0 0.0
      %1165 = vmatpush1.msra.mxu0 0.0
      %1166 = vmatprep.subr.mxu0 0.0
      %1167 = vmatpush1.msra.mxu0 0.0
      %1168 = vmatprep.subr.mxu0 0.0
      %1169 = vmatpush1.msra.mxu0 0.0
      %1170 = vmatprep.subr.mxu0 0.0
      %1171 = vmatpush1.msra.mxu0 0.0
      %1172 = vmatprep.subr.mxu0 0.0
      %1173 = vmatpush1.msra.mxu0 0.0
      %1174 = vmatprep.subr.mxu0 0.0
      %1175 = vmatpush1.msra.mxu0 0.0
      %1176 = vmatprep.subr.mxu0 0.0
      %1177 = vmatpush1.msra.mxu0 0.0
      %1178 = vmatprep.subr.mxu0 0.0
      %1179 = vmatpush1.msra.mxu0 0.0
      %1180 = vmatprep.subr.mxu0 0.0
      %1181 = vmatpush1.msra.mxu0 0.0
      %1182 = vmatprep.subr.mxu0 0.0
      %1183 = vmatpush1.msra.mxu0 0.0
      %1184 = vmatprep.subr.mxu0 0.0
      %1185 = vmatpush1.msra.mxu0 0.0
      %1186 = vmatprep.subr.mxu0 0.0
      %1187 = vmatpush1.msra.mxu0 0.0
      %1188 = vmatprep.mubr.f32.mxu0 0.0
      %1189 = vmatmul.mubr.f32.gmra.mrb[0].mxu0 %v1099
      %v1190 = vpop.f32.mrb[0].mxu0
      %v1191 = vadd.f32 0.0, %v1190
      %v1192 = vpop.f32.mrb[0].mxu0
      %1193 = vmatprep.mubr.f32.mxu0 0.0
      %1194 = vmatmul.mubr.f32.gmra.mrb[0].mxu0 %v1100
      %v1195 = vpop.f32.mrb[0].mxu0
      %v1196 = vadd.f32 0.0, %v1195
      %v1197 = vpop.f32.mrb[0].mxu0
      %1198 = vmatprep.mubr.f32.mxu0 0.0
      %1199 = vmatmul.mubr.f32.gmra.mrb[0].mxu0 %v1101
      %v1200 = vpop.f32.mrb[0].mxu0
      %v1201 = vadd.f32 0.0, %v1200
      %v1202 = vpop.f32.mrb[0].mxu0
      %1203 = vmatprep.mubr.f32.mxu0 0.0
      %1204 = vmatmul.mubr.f32.gmra.mrb[0].mxu0 %v1102
      %v1205 = vpop.f32.mrb[0].mxu0
      %v1206 = vadd.f32 0.0, %v1205
      %v1207 = vpop.f32.mrb[0].mxu0
      %1208 = vmatprep.mubr.f32.mxu0 0.0
      %1209 = vmatmul.mubr.f32.gmra.mrb[0].mxu0 %v1103
      %v1210 = vpop.f32.mrb[0].mxu0
      %v1211 = vadd.f32 0.0, %v1210
      %v1212 = vpop.f32.mrb[0].mxu0
      %1213 = vmatprep.mubr.f32.mxu0 0.0
      %1214 = vmatmul.mubr.f32.gmra.mrb[0].mxu0 %v1104
      %v1215 = vpop.f32.mrb[0].mxu0
      %v1216 = vadd.f32 0.0, %v1215
      %v1217 = vpop.f32.mrb[0].mxu0
      %1218 = vmatprep.mubr.f32.mxu0 0.0
      %1219 = vmatmul.mubr.f32.gmra.mrb[0].mxu0 %v1105
      %v1220 = vpop.f32.mrb[0].mxu0
      %v1221 = vadd.f32 0.0, %v1220
      %v1222 = vpop.f32.mrb[0].mxu0
      %1223 = vmatprep.mubr.f32.mxu0 0.0
      %1224 = vmatmul.mubr.f32.gmra.mrb[0].mxu0 %v1106
      %v1225 = vpop.f32.mrb[0].mxu0
      %v1226 = vadd.f32 0.0, %v1225
      %v1227 = vpop.f32.mrb[0].mxu0
      %1228 = vdwg.mxu0
      %v1229 = vadd.f32 %v1090, %v1191
      %v1230 = vadd.f32 %v1091, %v1196
      %v1231 = vadd.f32 %v1092, %v1201
      %v1232 = vadd.f32 %v1093, %v1206
      %v1233 = vadd.f32 %v1094, %v1211
      %v1234 = vadd.f32 %v1095, %v1216
      %v1235 = vadd.f32 %v1096, %v1221
      %v1236 = vadd.f32 %v1097, %v1226
      %s1237 = scalar_lea.vmem %s277, 160
      %v1238 = vld [vmem:[%s1237] sm:$0xff]
      %v1239 = vld [vmem:[%s1237 + $0x10] sm:$0xff]
      %v1240 = vld [vmem:[%s1237 + $0x20] sm:$0xff]
      %v1241 = vld [vmem:[%s1237 + $0x30] sm:$0xff]
      %v1242 = vld [vmem:[%s1237 + $0x40] sm:$0xff]
      %v1243 = vld [vmem:[%s1237 + $0x50] sm:$0xff]
      %v1244 = vld [vmem:[%s1237 + $0x60] sm:$0xff]
      %v1245 = vld [vmem:[%s1237 + $0x70] sm:$0xff]
      %s1246 = scalar_lea.vmem %s1, 896
      %v1247 = vld [vmem:[%s1246] sm:$0xff]
      %v1248 = vld [vmem:[%s1246 + $0x8] sm:$0xff]
      %v1249 = vld [vmem:[%s1246 + $0x10] sm:$0xff]
      %v1250 = vld [vmem:[%s1246 + $0x18] sm:$0xff]
      %v1251 = vld [vmem:[%s1246 + $0x20] sm:$0xff]
      %v1252 = vld [vmem:[%s1246 + $0x28] sm:$0xff]
      %v1253 = vld [vmem:[%s1246 + $0x30] sm:$0xff]
      %v1254 = vld [vmem:[%s1246 + $0x38] sm:$0xff]
      %v1255 = vld [vmem:[%s1246 + $0x40] sm:$0xff]
      %v1256 = vld [vmem:[%s1246 + $0x48] sm:$0xff]
      %v1257 = vld [vmem:[%s1246 + $0x50] sm:$0xff]
      %v1258 = vld [vmem:[%s1246 + $0x58] sm:$0xff]
      %v1259 = vld [vmem:[%s1246 + $0x60] sm:$0xff]
      %v1260 = vld [vmem:[%s1246 + $0x68] sm:$0xff]
      %v1261 = vld [vmem:[%s1246 + $0x70] sm:$0xff]
      %v1262 = vld [vmem:[%s1246 + $0x78] sm:$0xff]
      %1263 = vmatprep.subr.mxu0 0.0
      %1264 = vmatpush1.msra.mxu0 %v1247
      %1265 = vmatprep.subr.mxu0 0.0
      %1266 = vmatpush1.msra.mxu0 %v1248
      %1267 = vmatprep.subr.mxu0 0.0
      %1268 = vmatpush1.msra.mxu0 %v1249
      %1269 = vmatprep.subr.mxu0 0.0
      %1270 = vmatpush1.msra.mxu0 %v1250
      %1271 = vmatprep.subr.mxu0 0.0
      %1272 = vmatpush1.msra.mxu0 %v1251
      %1273 = vmatprep.subr.mxu0 0.0
      %1274 = vmatpush1.msra.mxu0 %v1252
      %1275 = vmatprep.subr.mxu0 0.0
      %1276 = vmatpush1.msra.mxu0 %v1253
      %1277 = vmatprep.subr.mxu0 0.0
      %1278 = vmatpush1.msra.mxu0 %v1254
      %1279 = vmatprep.subr.mxu0 0.0
      %1280 = vmatpush1.msra.mxu0 %v1255
      %1281 = vmatprep.subr.mxu0 0.0
      %1282 = vmatpush1.msra.mxu0 %v1256
      %1283 = vmatprep.subr.mxu0 0.0
      %1284 = vmatpush1.msra.mxu0 %v1257
      %1285 = vmatprep.subr.mxu0 0.0
      %1286 = vmatpush1.msra.mxu0 %v1258
      %1287 = vmatprep.subr.mxu0 0.0
      %1288 = vmatpush1.msra.mxu0 %v1259
      %1289 = vmatprep.subr.mxu0 0.0
      %1290 = vmatpush1.msra.mxu0 %v1260
      %1291 = vmatprep.subr.mxu0 0.0
      %1292 = vmatpush1.msra.mxu0 %v1261
      %1293 = vmatprep.subr.mxu0 0.0
      %1294 = vmatpush1.msra.mxu0 %v1262
      %1295 = vmatprep.subr.mxu0 0.0
      %1296 = vmatpush1.msra.mxu0 0.0
      %1297 = vmatprep.subr.mxu0 0.0
      %1298 = vmatpush1.msra.mxu0 0.0
      %1299 = vmatprep.subr.mxu0 0.0
      %1300 = vmatpush1.msra.mxu0 0.0
      %1301 = vmatprep.subr.mxu0 0.0
      %1302 = vmatpush1.msra.mxu0 0.0
      %1303 = vmatprep.subr.mxu0 0.0
      %1304 = vmatpush1.msra.mxu0 0.0
      %1305 = vmatprep.subr.mxu0 0.0
      %1306 = vmatpush1.msra.mxu0 0.0
      %1307 = vmatprep.subr.mxu0 0.0
      %1308 = vmatpush1.msra.mxu0 0.0
      %1309 = vmatprep.subr.mxu0 0.0
      %1310 = vmatpush1.msra.mxu0 0.0
      %1311 = vmatprep.subr.mxu0 0.0
      %1312 = vmatpush1.msra.mxu0 0.0
      %1313 = vmatprep.subr.mxu0 0.0
      %1314 = vmatpush1.msra.mxu0 0.0
      %1315 = vmatprep.subr.mxu0 0.0
      %1316 = vmatpush1.msra.mxu0 0.0
      %1317 = vmatprep.subr.mxu0 0.0
      %1318 = vmatpush1.msra.mxu0 0.0
      %1319 = vmatprep.subr.mxu0 0.0
      %1320 = vmatpush1.msra.mxu0 0.0
      %1321 = vmatprep.subr.mxu0 0.0
      %1322 = vmatpush1.msra.mxu0 0.0
      %1323 = vmatprep.subr.mxu0 0.0
      %1324 = vmatpush1.msra.mxu0 0.0
      %1325 = vmatprep.subr.mxu0 0.0
      %1326 = vmatpush1.msra.mxu0 0.0
      %1327 = vmatprep.mubr.f32.mxu0 0.0
      %1328 = vmatmul.mubr.f32.gmra.mrb[0].mxu0 %v1238
      %v1329 = vpop.f32.mrb[0].mxu0
      %v1330 = vadd.f32 0.0, %v1329
      %v1331 = vpop.f32.mrb[0].mxu0
      %1332 = vmatprep.mubr.f32.mxu0 0.0
      %1333 = vmatmul.mubr.f32.gmra.mrb[0].mxu0 %v1239
      %v1334 = vpop.f32.mrb[0].mxu0
      %v1335 = vadd.f32 0.0, %v1334
      %v1336 = vpop.f32.mrb[0].mxu0
      %1337 = vmatprep.mubr.f32.mxu0 0.0
      %1338 = vmatmul.mubr.f32.gmra.mrb[0].mxu0 %v1240
      %v1339 = vpop.f32.mrb[0].mxu0
      %v1340 = vadd.f32 0.0, %v1339
      %v1341 = vpop.f32.mrb[0].mxu0
      %1342 = vmatprep.mubr.f32.mxu0 0.0
      %1343 = vmatmul.mubr.f32.gmra.mrb[0].mxu0 %v1241
      %v1344 = vpop.f32.mrb[0].mxu0
      %v1345 = vadd.f32 0.0, %v1344
      %v1346 = vpop.f32.mrb[0].mxu0
      %1347 = vmatprep.mubr.f32.mxu0 0.0
      %1348 = vmatmul.mubr.f32.gmra.mrb[0].mxu0 %v1242
      %v1349 = vpop.f32.mrb[0].mxu0
      %v1350 = vadd.f32 0.0, %v1349
      %v1351 = vpop.f32.mrb[0].mxu0
      %1352 = vmatprep.mubr.f32.mxu0 0.0
      %1353 = vmatmul.mubr.f32.gmra.mrb[0].mxu0 %v1243
      %v1354 = vpop.f32.mrb[0].mxu0
      %v1355 = vadd.f32 0.0, %v1354
      %v1356 = vpop.f32.mrb[0].mxu0
      %1357 = vmatprep.mubr.f32.mxu0 0.0
      %1358 = vmatmul.mubr.f32.gmra.mrb[0].mxu0 %v1244
      %v1359 = vpop.f32.mrb[0].mxu0
      %v1360 = vadd.f32 0.0, %v1359
      %v1361 = vpop.f32.mrb[0].mxu0
      %1362 = vmatprep.mubr.f32.mxu0 0.0
      %1363 = vmatmul.mubr.f32.gmra.mrb[0].mxu0 %v1245
      %v1364 = vpop.f32.mrb[0].mxu0
      %v1365 = vadd.f32 0.0, %v1364
      %v1366 = vpop.f32.mrb[0].mxu0
      %1367 = vdwg.mxu0
      %v1368 = vadd.f32 %v1229, %v1330
      %v1369 = vadd.f32 %v1230, %v1335
      %v1370 = vadd.f32 %v1231, %v1340
      %v1371 = vadd.f32 %v1232, %v1345
      %v1372 = vadd.f32 %v1233, %v1350
      %v1373 = vadd.f32 %v1234, %v1355
      %v1374 = vadd.f32 %v1235, %v1360
      %v1375 = vadd.f32 %v1236, %v1365
      %v1376 = vld [vmem:[%s1098 + $0x1] sm:$0xff]
      %v1377 = vld [vmem:[%s1098 + $0x11] sm:$0xff]
      %v1378 = vld [vmem:[%s1098 + $0x21] sm:$0xff]
      %v1379 = vld [vmem:[%s1098 + $0x31] sm:$0xff]
      %v1380 = vld [vmem:[%s1098 + $0x41] sm:$0xff]
      %v1381 = vld [vmem:[%s1098 + $0x51] sm:$0xff]
      %v1382 = vld [vmem:[%s1098 + $0x61] sm:$0xff]
      %v1383 = vld [vmem:[%s1098 + $0x71] sm:$0xff]
      %s1384 = scalar_lea.vmem %s1, 1024
      %v1385 = vld [vmem:[%s1384] sm:$0xff]
      %v1386 = vld [vmem:[%s1384 + $0x8] sm:$0xff]
      %v1387 = vld [vmem:[%s1384 + $0x10] sm:$0xff]
      %v1388 = vld [vmem:[%s1384 + $0x18] sm:$0xff]
      %v1389 = vld [vmem:[%s1384 + $0x20] sm:$0xff]
      %v1390 = vld [vmem:[%s1384 + $0x28] sm:$0xff]
      %v1391 = vld [vmem:[%s1384 + $0x30] sm:$0xff]
      %v1392 = vld [vmem:[%s1384 + $0x38] sm:$0xff]
      %v1393 = vld [vmem:[%s1384 + $0x40] sm:$0xff]
      %v1394 = vld [vmem:[%s1384 + $0x48] sm:$0xff]
      %v1395 = vld [vmem:[%s1384 + $0x50] sm:$0xff]
      %v1396 = vld [vmem:[%s1384 + $0x58] sm:$0xff]
      %v1397 = vld [vmem:[%s1384 + $0x60] sm:$0xff]
      %v1398 = vld [vmem:[%s1384 + $0x68] sm:$0xff]
      %v1399 = vld [vmem:[%s1384 + $0x70] sm:$0xff]
      %v1400 = vld [vmem:[%s1384 + $0x78] sm:$0xff]
      %1401 = vmatprep.subr.mxu0 0.0
      %1402 = vmatpush1.msra.mxu0 %v1385
      %1403 = vmatprep.subr.mxu0 0.0
      %1404 = vmatpush1.msra.mxu0 %v1386
      %1405 = vmatprep.subr.mxu0 0.0
      %1406 = vmatpush1.msra.mxu0 %v1387
      %1407 = vmatprep.subr.mxu0 0.0
      %1408 = vmatpush1.msra.mxu0 %v1388
      %1409 = vmatprep.subr.mxu0 0.0
      %1410 = vmatpush1.msra.mxu0 %v1389
      %1411 = vmatprep.subr.mxu0 0.0
      %1412 = vmatpush1.msra.mxu0 %v1390
      %1413 = vmatprep.subr.mxu0 0.0
      %1414 = vmatpush1.msra.mxu0 %v1391
      %1415 = vmatprep.subr.mxu0 0.0
      %1416 = vmatpush1.msra.mxu0 %v1392
      %1417 = vmatprep.subr.mxu0 0.0
      %1418 = vmatpush1.msra.mxu0 %v1393
      %1419 = vmatprep.subr.mxu0 0.0
      %1420 = vmatpush1.msra.mxu0 %v1394
      %1421 = vmatprep.subr.mxu0 0.0
      %1422 = vmatpush1.msra.mxu0 %v1395
      %1423 = vmatprep.subr.mxu0 0.0
      %1424 = vmatpush1.msra.mxu0 %v1396
      %1425 = vmatprep.subr.mxu0 0.0
      %1426 = vmatpush1.msra.mxu0 %v1397
      %1427 = vmatprep.subr.mxu0 0.0
      %1428 = vmatpush1.msra.mxu0 %v1398
      %1429 = vmatprep.subr.mxu0 0.0
      %1430 = vmatpush1.msra.mxu0 %v1399
      %1431 = vmatprep.subr.mxu0 0.0
      %1432 = vmatpush1.msra.mxu0 %v1400
      %1433 = vmatprep.subr.mxu0 0.0
      %1434 = vmatpush1.msra.mxu0 0.0
      %1435 = vmatprep.subr.mxu0 0.0
      %1436 = vmatpush1.msra.mxu0 0.0
      %1437 = vmatprep.subr.mxu0 0.0
      %1438 = vmatpush1.msra.mxu0 0.0
      %1439 = vmatprep.subr.mxu0 0.0
      %1440 = vmatpush1.msra.mxu0 0.0
      %1441 = vmatprep.subr.mxu0 0.0
      %1442 = vmatpush1.msra.mxu0 0.0
      %1443 = vmatprep.subr.mxu0 0.0
      %1444 = vmatpush1.msra.mxu0 0.0
      %1445 = vmatprep.subr.mxu0 0.0
      %1446 = vmatpush1.msra.mxu0 0.0
      %1447 = vmatprep.subr.mxu0 0.0
      %1448 = vmatpush1.msra.mxu0 0.0
      %1449 = vmatprep.subr.mxu0 0.0
      %1450 = vmatpush1.msra.mxu0 0.0
      %1451 = vmatprep.subr.mxu0 0.0
      %1452 = vmatpush1.msra.mxu0 0.0
      %1453 = vmatprep.subr.mxu0 0.0
      %1454 = vmatpush1.msra.mxu0 0.0
      %1455 = vmatprep.subr.mxu0 0.0
      %1456 = vmatpush1.msra.mxu0 0.0
      %1457 = vmatprep.subr.mxu0 0.0
      %1458 = vmatpush1.msra.mxu0 0.0
      %1459 = vmatprep.subr.mxu0 0.0
      %1460 = vmatpush1.msra.mxu0 0.0
      %1461 = vmatprep.subr.mxu0 0.0
      %1462 = vmatpush1.msra.mxu0 0.0
      %1463 = vmatprep.subr.mxu0 0.0
      %1464 = vmatpush1.msra.mxu0 0.0
      %1465 = vmatprep.mubr.f32.mxu0 0.0
      %1466 = vmatmul.mubr.f32.gmra.mrb[0].mxu0 %v1376
      %v1467 = vpop.f32.mrb[0].mxu0
      %v1468 = vadd.f32 0.0, %v1467
      %v1469 = vpop.f32.mrb[0].mxu0
      %1470 = vmatprep.mubr.f32.mxu0 0.0
      %1471 = vmatmul.mubr.f32.gmra.mrb[0].mxu0 %v1377
      %v1472 = vpop.f32.mrb[0].mxu0
      %v1473 = vadd.f32 0.0, %v1472
      %v1474 = vpop.f32.mrb[0].mxu0
      %1475 = vmatprep.mubr.f32.mxu0 0.0
      %1476 = vmatmul.mubr.f32.gmra.mrb[0].mxu0 %v1378
      %v1477 = vpop.f32.mrb[0].mxu0
      %v1478 = vadd.f32 0.0, %v1477
      %v1479 = vpop.f32.mrb[0].mxu0
      %1480 = vmatprep.mubr.f32.mxu0 0.0
      %1481 = vmatmul.mubr.f32.gmra.mrb[0].mxu0 %v1379
      %v1482 = vpop.f32.mrb[0].mxu0
      %v1483 = vadd.f32 0.0, %v1482
      %v1484 = vpop.f32.mrb[0].mxu0
      %1485 = vmatprep.mubr.f32.mxu0 0.0
      %1486 = vmatmul.mubr.f32.gmra.mrb[0].mxu0 %v1380
      %v1487 = vpop.f32.mrb[0].mxu0
      %v1488 = vadd.f32 0.0, %v1487
      %v1489 = vpop.f32.mrb[0].mxu0
      %1490 = vmatprep.mubr.f32.mxu0 0.0
      %1491 = vmatmul.mubr.f32.gmra.mrb[0].mxu0 %v1381
      %v1492 = vpop.f32.mrb[0].mxu0
      %v1493 = vadd.f32 0.0, %v1492
      %v1494 = vpop.f32.mrb[0].mxu0
      %1495 = vmatprep.mubr.f32.mxu0 0.0
      %1496 = vmatmul.mubr.f32.gmra.mrb[0].mxu0 %v1382
      %v1497 = vpop.f32.mrb[0].mxu0
      %v1498 = vadd.f32 0.0, %v1497
      %v1499 = vpop.f32.mrb[0].mxu0
      %1500 = vmatprep.mubr.f32.mxu0 0.0
      %1501 = vmatmul.mubr.f32.gmra.mrb[0].mxu0 %v1383
      %v1502 = vpop.f32.mrb[0].mxu0
      %v1503 = vadd.f32 0.0, %v1502
      %v1504 = vpop.f32.mrb[0].mxu0
      %1505 = vdwg.mxu0
      %v1506 = vadd.f32 %v1368, %v1468
      %v1507 = vadd.f32 %v1369, %v1473
      %v1508 = vadd.f32 %v1370, %v1478
      %v1509 = vadd.f32 %v1371, %v1483
      %v1510 = vadd.f32 %v1372, %v1488
      %v1511 = vadd.f32 %v1373, %v1493
      %v1512 = vadd.f32 %v1374, %v1498
      %v1513 = vadd.f32 %v1375, %v1503
      %v1514 = vld [vmem:[%s2] sm:$0x1]
      %v1516 = vlaneseq
      %v1517 = vshrl.u32 %v1516, 7
      %v1518 = vsub.s32 0, %v1517
      %v1519 = vrot.slane %v1514, %v1518
      %v1521 = vadd.f32 %v1506, %v1519
      %v1522 = vadd.f32 %v1507, %v1519
      %v1523 = vadd.f32 %v1508, %v1519
      %v1524 = vadd.f32 %v1509, %v1519
      %v1525 = vadd.f32 %v1510, %v1519
      %v1526 = vadd.f32 %v1511, %v1519
      %v1527 = vadd.f32 %v1512, %v1519
      %v1528 = vadd.f32 %v1513, %v1519
      %v1529 = vmax.f32 %v1521, 0.0
      %v1530 = vmax.f32 %v1522, 0.0
      %v1531 = vmax.f32 %v1523, 0.0
      %v1532 = vmax.f32 %v1524, 0.0
      %v1533 = vmax.f32 %v1525, 0.0
      %v1534 = vmax.f32 %v1526, 0.0
      %v1535 = vmax.f32 %v1527, 0.0
      %v1536 = vmax.f32 %v1528, 0.0
      %1537 = vst [vmem:[#allocation2] sm:$0xff] 0.0
      %1538 = vst [vmem:[#allocation2 + $0x8] sm:$0xff] 0.0
      %s1539 = scalar_lea.vmem [#allocation2], 144
      %1540 = vst [vmem:[%s1539] sm:$0xff] 0.0
      %1541 = vst [vmem:[%s1539 + $0x8] sm:$0xff] 0.0
      %1542 = vst [vmem:[#allocation2] sm:$0x1] 0.0
      %1543 = vst [vmem:[#allocation2 + $0x10] sm:$0x1] 0.0
      %1544 = vst [vmem:[#allocation2 + $0x20] sm:$0x1] 0.0
      %1545 = vst [vmem:[#allocation2 + $0x30] sm:$0x1] 0.0
      %1546 = vst [vmem:[#allocation2 + $0x40] sm:$0x1] 0.0
      %1547 = vst [vmem:[#allocation2 + $0x50] sm:$0x1] 0.0
      %1548 = vst [vmem:[#allocation2 + $0x60] sm:$0x1] 0.0
      %1549 = vst [vmem:[#allocation2 + $0x70] sm:$0x1] 0.0
      %1550 = vst [vmem:[#allocation2 + $0x80] sm:$0x1] 0.0
      %1551 = vst [vmem:[#allocation2 + $0x90] sm:$0x1] 0.0
      %1552 = vst [vmem:[#allocation2 + $0x9] sm:$0x7f] 0.0
      %1553 = vst [vmem:[#allocation2 + $0x19] sm:$0x7f] 0.0
      %1554 = vst [vmem:[#allocation2 + $0x29] sm:$0x7f] 0.0
      %1555 = vst [vmem:[#allocation2 + $0x39] sm:$0x7f] 0.0
      %1556 = vst [vmem:[#allocation2 + $0x49] sm:$0x7f] 0.0
      %1557 = vst [vmem:[#allocation2 + $0x59] sm:$0x7f] 0.0
      %1558 = vst [vmem:[#allocation2 + $0x69] sm:$0x7f] 0.0
      %1559 = vst [vmem:[#allocation2 + $0x79] sm:$0x7f] 0.0
      %1560 = vst [vmem:[#allocation2 + $0x89] sm:$0x7f] 0.0
      %1561 = vst [vmem:[#allocation2 + $0x99] sm:$0x7f] 0.0
      %s1562 = scalar_lea.vmem [#allocation2], 16
      %1563 = vst [vmem:[%s1562 + $0x1] sm:$0xff] %v1529
      %1564 = vst [vmem:[%s1562 + $0x11] sm:$0xff] %v1530
      %1565 = vst [vmem:[%s1562 + $0x21] sm:$0xff] %v1531
      %1566 = vst [vmem:[%s1562 + $0x31] sm:$0xff] %v1532
      %1567 = vst [vmem:[%s1562 + $0x41] sm:$0xff] %v1533
      %1568 = vst [vmem:[%s1562 + $0x51] sm:$0xff] %v1534
      %1569 = vst [vmem:[%s1562 + $0x61] sm:$0xff] %v1535
      %1570 = vst [vmem:[%s1562 + $0x71] sm:$0xff] %v1536
      %v1571 = vld [vmem:[#allocation2] sm:$0xff]
      %v1572 = vld [vmem:[#allocation2 + $0x10] sm:$0xff]
      %v1573 = vld [vmem:[#allocation2 + $0x20] sm:$0xff]
      %v1574 = vld [vmem:[#allocation2 + $0x30] sm:$0xff]
      %v1575 = vld [vmem:[#allocation2 + $0x40] sm:$0xff]
      %v1576 = vld [vmem:[#allocation2 + $0x50] sm:$0xff]
      %v1577 = vld [vmem:[#allocation2 + $0x60] sm:$0xff]
      %v1578 = vld [vmem:[#allocation2 + $0x70] sm:$0xff]
      %v1579 = vld [vmem:[%s3] sm:$0xff]
      %v1580 = vld [vmem:[%s3 + $0x8] sm:$0xff]
      %v1581 = vld [vmem:[%s3 + $0x10] sm:$0xff]
      %v1582 = vld [vmem:[%s3 + $0x18] sm:$0xff]
      %v1583 = vld [vmem:[%s3 + $0x20] sm:$0xff]
      %v1584 = vld [vmem:[%s3 + $0x28] sm:$0xff]
      %v1585 = vld [vmem:[%s3 + $0x30] sm:$0xff]
      %v1586 = vld [vmem:[%s3 + $0x38] sm:$0xff]
      %v1587 = vld [vmem:[%s3 + $0x40] sm:$0xff]
      %v1588 = vld [vmem:[%s3 + $0x48] sm:$0xff]
      %v1589 = vld [vmem:[%s3 + $0x50] sm:$0xff]
      %v1590 = vld [vmem:[%s3 + $0x58] sm:$0xff]
      %v1591 = vld [vmem:[%s3 + $0x60] sm:$0xff]
      %v1592 = vld [vmem:[%s3 + $0x68] sm:$0xff]
      %v1593 = vld [vmem:[%s3 + $0x70] sm:$0xff]
      %v1594 = vld [vmem:[%s3 + $0x78] sm:$0xff]
      %v1595 = vld [vmem:[#allocation2 + $0x1] sm:$0xff]
      %v1596 = vld [vmem:[#allocation2 + $0x11] sm:$0xff]
      %v1597 = vld [vmem:[#allocation2 + $0x21] sm:$0xff]
      %v1598 = vld [vmem:[#allocation2 + $0x31] sm:$0xff]
      %v1599 = vld [vmem:[#allocation2 + $0x41] sm:$0xff]
      %v1600 = vld [vmem:[#allocation2 + $0x51] sm:$0xff]
      %v1601 = vld [vmem:[#allocation2 + $0x61] sm:$0xff]
      %v1602 = vld [vmem:[#allocation2 + $0x71] sm:$0xff]
      %s1603 = scalar_lea.vmem %s3, 128
      %v1604 = vld [vmem:[%s1603] sm:$0xff]
      %v1605 = vld [vmem:[%s1603 + $0x8] sm:$0xff]
      %v1606 = vld [vmem:[%s1603 + $0x10] sm:$0xff]
      %v1607 = vld [vmem:[%s1603 + $0x18] sm:$0xff]
      %v1608 = vld [vmem:[%s1603 + $0x20] sm:$0xff]
      %v1609 = vld [vmem:[%s1603 + $0x28] sm:$0xff]
      %v1610 = vld [vmem:[%s1603 + $0x30] sm:$0xff]
      %v1611 = vld [vmem:[%s1603 + $0x38] sm:$0xff]
      %v1612 = vld [vmem:[%s1603 + $0x40] sm:$0xff]
      %v1613 = vld [vmem:[%s1603 + $0x48] sm:$0xff]
      %v1614 = vld [vmem:[%s1603 + $0x50] sm:$0xff]
      %v1615 = vld [vmem:[%s1603 + $0x58] sm:$0xff]
      %v1616 = vld [vmem:[%s1603 + $0x60] sm:$0xff]
      %v1617 = vld [vmem:[%s1603 + $0x68] sm:$0xff]
      %v1618 = vld [vmem:[%s1603 + $0x70] sm:$0xff]
      %v1619 = vld [vmem:[%s1603 + $0x78] sm:$0xff]
      %1620 = vmatprep.subr.mxu0 0.0
      %1621 = vmatpush1.msra.mxu0 %v1604
      %1622 = vmatprep.subr.mxu0 0.0
      %1623 = vmatpush1.msra.mxu0 %v1605
      %1624 = vmatprep.subr.mxu0 0.0
      %1625 = vmatpush1.msra.mxu0 %v1606
      %1626 = vmatprep.subr.mxu0 0.0
      %1627 = vmatpush1.msra.mxu0 %v1607
      %1628 = vmatprep.subr.mxu0 0.0
      %1629 = vmatpush1.msra.mxu0 %v1608
      %1630 = vmatprep.subr.mxu0 0.0
      %1631 = vmatpush1.msra.mxu0 %v1609
      %1632 = vmatprep.subr.mxu0 0.0
      %1633 = vmatpush1.msra.mxu0 %v1610
      %1634 = vmatprep.subr.mxu0 0.0
      %1635 = vmatpush1.msra.mxu0 %v1611
      %1636 = vmatprep.subr.mxu0 0.0
      %1637 = vmatpush1.msra.mxu0 %v1612
      %1638 = vmatprep.subr.mxu0 0.0
      %1639 = vmatpush1.msra.mxu0 %v1613
      %1640 = vmatprep.subr.mxu0 0.0
      %1641 = vmatpush1.msra.mxu0 %v1614
      %1642 = vmatprep.subr.mxu0 0.0
      %1643 = vmatpush1.msra.mxu0 %v1615
      %1644 = vmatprep.subr.mxu0 0.0
      %1645 = vmatpush1.msra.mxu0 %v1616
      %1646 = vmatprep.subr.mxu0 0.0
      %1647 = vmatpush1.msra.mxu0 %v1617
      %1648 = vmatprep.subr.mxu0 0.0
      %1649 = vmatpush1.msra.mxu0 %v1618
      %1650 = vmatprep.subr.mxu0 0.0
      %1651 = vmatpush1.msra.mxu0 %v1619
      %1652 = vmatprep.subr.mxu0 0.0
      %1653 = vmatpush1.msra.mxu0 0.0
      %1654 = vmatprep.subr.mxu0 0.0
      %1655 = vmatpush1.msra.mxu0 0.0
      %1656 = vmatprep.subr.mxu0 0.0
      %1657 = vmatpush1.msra.mxu0 0.0
      %1658 = vmatprep.subr.mxu0 0.0
      %1659 = vmatpush1.msra.mxu0 0.0
      %1660 = vmatprep.subr.mxu0 0.0
      %1661 = vmatpush1.msra.mxu0 0.0
      %1662 = vmatprep.subr.mxu0 0.0
      %1663 = vmatpush1.msra.mxu0 0.0
      %1664 = vmatprep.subr.mxu0 0.0
      %1665 = vmatpush1.msra.mxu0 0.0
      %1666 = vmatprep.subr.mxu0 0.0
      %1667 = vmatpush1.msra.mxu0 0.0
      %1668 = vmatprep.subr.mxu0 0.0
      %1669 = vmatpush1.msra.mxu0 0.0
      %1670 = vmatprep.subr.mxu0 0.0
      %1671 = vmatpush1.msra.mxu0 0.0
      %1672 = vmatprep.subr.mxu0 0.0
      %1673 = vmatpush1.msra.mxu0 0.0
      %1674 = vmatprep.subr.mxu0 0.0
      %1675 = vmatpush1.msra.mxu0 0.0
      %1676 = vmatprep.subr.mxu0 0.0
      %1677 = vmatpush1.msra.mxu0 0.0
      %1678 = vmatprep.subr.mxu0 0.0
      %1679 = vmatpush1.msra.mxu0 0.0
      %1680 = vmatprep.subr.mxu0 0.0
      %1681 = vmatpush1.msra.mxu0 0.0
      %1682 = vmatprep.subr.mxu0 0.0
      %1683 = vmatpush1.msra.mxu0 0.0
      %1684 = vmatprep.mubr.f32.mxu0 0.0
      %1685 = vmatmul.mubr.f32.gmra.mrb[0].mxu0 %v1595
      %v1686 = vpop.f32.mrb[0].mxu0
      %v1687 = vadd.f32 0.0, %v1686
      %v1688 = vpop.f32.mrb[0].mxu0
      %1689 = vmatprep.mubr.f32.mxu0 0.0
      %1690 = vmatmul.mubr.f32.gmra.mrb[0].mxu0 %v1596
      %v1691 = vpop.f32.mrb[0].mxu0
      %v1692 = vadd.f32 0.0, %v1691
      %v1693 = vpop.f32.mrb[0].mxu0
      %1694 = vmatprep.mubr.f32.mxu0 0.0
      %1695 = vmatmul.mubr.f32.gmra.mrb[0].mxu0 %v1597
      %v1696 = vpop.f32.mrb[0].mxu0
      %v1697 = vadd.f32 0.0, %v1696
      %v1698 = vpop.f32.mrb[0].mxu0
      %1699 = vmatprep.mubr.f32.mxu0 0.0
      %1700 = vmatmul.mubr.f32.gmra.mrb[0].mxu0 %v1598
      %v1701 = vpop.f32.mrb[0].mxu0
      %v1702 = vadd.f32 0.0, %v1701
      %v1703 = vpop.f32.mrb[0].mxu0
      %1704 = vmatprep.mubr.f32.mxu0 0.0
      %1705 = vmatmul.mubr.f32.gmra.mrb[0].mxu0 %v1599
      %v1706 = vpop.f32.mrb[0].mxu0
      %v1707 = vadd.f32 0.0, %v1706
      %v1708 = vpop.f32.mrb[0].mxu0
      %1709 = vmatprep.mubr.f32.mxu0 0.0
      %1710 = vmatmul.mubr.f32.gmra.mrb[0].mxu0 %v1600
      %v1711 = vpop.f32.mrb[0].mxu0
      %v1712 = vadd.f32 0.0, %v1711
      %v1713 = vpop.f32.mrb[0].mxu0
      %1714 = vmatprep.mubr.f32.mxu0 0.0
      %1715 = vmatmul.mubr.f32.gmra.mrb[0].mxu0 %v1601
      %v1716 = vpop.f32.mrb[0].mxu0
      %v1717 = vadd.f32 0.0, %v1716
      %v1718 = vpop.f32.mrb[0].mxu0
      %1719 = vmatprep.mubr.f32.mxu0 0.0
      %1720 = vmatmul.mubr.f32.gmra.mrb[0].mxu0 %v1602
      %v1721 = vpop.f32.mrb[0].mxu0
      %v1722 = vadd.f32 0.0, %v1721
      %v1723 = vpop.f32.mrb[0].mxu0
      %1724 = vdwg.mxu0
      %1725 = vmatprep.subr.mxu0 0.0
      %1726 = vmatpush1.msra.mxu0 %v1579
      %1727 = vmatprep.subr.mxu0 0.0
      %1728 = vmatpush1.msra.mxu0 %v1580
      %1729 = vmatprep.subr.mxu0 0.0
      %1730 = vmatpush1.msra.mxu0 %v1581
      %1731 = vmatprep.subr.mxu0 0.0
      %1732 = vmatpush1.msra.mxu0 %v1582
      %1733 = vmatprep.subr.mxu0 0.0
      %1734 = vmatpush1.msra.mxu0 %v1583
      %1735 = vmatprep.subr.mxu0 0.0
      %1736 = vmatpush1.msra.mxu0 %v1584
      %1737 = vmatprep.subr.mxu0 0.0
      %1738 = vmatpush1.msra.mxu0 %v1585
      %1739 = vmatprep.subr.mxu0 0.0
      %1740 = vmatpush1.msra.mxu0 %v1586
      %1741 = vmatprep.subr.mxu0 0.0
      %1742 = vmatpush1.msra.mxu0 %v1587
      %1743 = vmatprep.subr.mxu0 0.0
      %1744 = vmatpush1.msra.mxu0 %v1588
      %1745 = vmatprep.subr.mxu0 0.0
      %1746 = vmatpush1.msra.mxu0 %v1589
      %1747 = vmatprep.subr.mxu0 0.0
      %1748 = vmatpush1.msra.mxu0 %v1590
      %1749 = vmatprep.subr.mxu0 0.0
      %1750 = vmatpush1.msra.mxu0 %v1591
      %1751 = vmatprep.subr.mxu0 0.0
      %1752 = vmatpush1.msra.mxu0 %v1592
      %1753 = vmatprep.subr.mxu0 0.0
      %1754 = vmatpush1.msra.mxu0 %v1593
      %1755 = vmatprep.subr.mxu0 0.0
      %1756 = vmatpush1.msra.mxu0 %v1594
      %1757 = vmatprep.subr.mxu0 0.0
      %1758 = vmatpush1.msra.mxu0 0.0
      %1759 = vmatprep.subr.mxu0 0.0
      %1760 = vmatpush1.msra.mxu0 0.0
      %1761 = vmatprep.subr.mxu0 0.0
      %1762 = vmatpush1.msra.mxu0 0.0
      %1763 = vmatprep.subr.mxu0 0.0
      %1764 = vmatpush1.msra.mxu0 0.0
      %1765 = vmatprep.subr.mxu0 0.0
      %1766 = vmatpush1.msra.mxu0 0.0
      %1767 = vmatprep.subr.mxu0 0.0
      %1768 = vmatpush1.msra.mxu0 0.0
      %1769 = vmatprep.subr.mxu0 0.0
      %1770 = vmatpush1.msra.mxu0 0.0
      %1771 = vmatprep.subr.mxu0 0.0
      %1772 = vmatpush1.msra.mxu0 0.0
      %1773 = vmatprep.subr.mxu0 0.0
      %1774 = vmatpush1.msra.mxu0 0.0
      %1775 = vmatprep.subr.mxu0 0.0
      %1776 = vmatpush1.msra.mxu0 0.0
      %1777 = vmatprep.subr.mxu0 0.0
      %1778 = vmatpush1.msra.mxu0 0.0
      %1779 = vmatprep.subr.mxu0 0.0
      %1780 = vmatpush1.msra.mxu0 0.0
      %1781 = vmatprep.subr.mxu0 0.0
      %1782 = vmatpush1.msra.mxu0 0.0
      %1783 = vmatprep.subr.mxu0 0.0
      %1784 = vmatpush1.msra.mxu0 0.0
      %1785 = vmatprep.subr.mxu0 0.0
      %1786 = vmatpush1.msra.mxu0 0.0
      %1787 = vmatprep.subr.mxu0 0.0
      %1788 = vmatpush1.msra.mxu0 0.0
      %1789 = vmatprep.mubr.f32.mxu0 0.0
      %1790 = vmatmul.mubr.f32.gmra.mrb[0].mxu0 %v1571
      %v1791 = vpop.f32.mrb[0].mxu0
      %v1792 = vadd.f32 %v1687, %v1791
      %v1793 = vpop.f32.mrb[0].mxu0
      %1794 = vmatprep.mubr.f32.mxu0 0.0
      %1795 = vmatmul.mubr.f32.gmra.mrb[0].mxu0 %v1572
      %v1796 = vpop.f32.mrb[0].mxu0
      %v1797 = vadd.f32 %v1692, %v1796
      %v1798 = vpop.f32.mrb[0].mxu0
      %1799 = vmatprep.mubr.f32.mxu0 0.0
      %1800 = vmatmul.mubr.f32.gmra.mrb[0].mxu0 %v1573
      %v1801 = vpop.f32.mrb[0].mxu0
      %v1802 = vadd.f32 %v1697, %v1801
      %v1803 = vpop.f32.mrb[0].mxu0
      %1804 = vmatprep.mubr.f32.mxu0 0.0
      %1805 = vmatmul.mubr.f32.gmra.mrb[0].mxu0 %v1574
      %v1806 = vpop.f32.mrb[0].mxu0
      %v1807 = vadd.f32 %v1702, %v1806
      %v1808 = vpop.f32.mrb[0].mxu0
      %1809 = vmatprep.mubr.f32.mxu0 0.0
      %1810 = vmatmul.mubr.f32.gmra.mrb[0].mxu0 %v1575
      %v1811 = vpop.f32.mrb[0].mxu0
      %v1812 = vadd.f32 %v1707, %v1811
      %v1813 = vpop.f32.mrb[0].mxu0
      %1814 = vmatprep.mubr.f32.mxu0 0.0
      %1815 = vmatmul.mubr.f32.gmra.mrb[0].mxu0 %v1576
      %v1816 = vpop.f32.mrb[0].mxu0
      %v1817 = vadd.f32 %v1712, %v1816
      %v1818 = vpop.f32.mrb[0].mxu0
      %1819 = vmatprep.mubr.f32.mxu0 0.0
      %1820 = vmatmul.mubr.f32.gmra.mrb[0].mxu0 %v1577
      %v1821 = vpop.f32.mrb[0].mxu0
      %v1822 = vadd.f32 %v1717, %v1821
      %v1823 = vpop.f32.mrb[0].mxu0
      %1824 = vmatprep.mubr.f32.mxu0 0.0
      %1825 = vmatmul.mubr.f32.gmra.mrb[0].mxu0 %v1578
      %v1826 = vpop.f32.mrb[0].mxu0
      %v1827 = vadd.f32 %v1722, %v1826
      %v1828 = vpop.f32.mrb[0].mxu0
      %1829 = vdwg.mxu0
      %v1830 = vld [vmem:[#allocation2 + $0x2] sm:$0xff]
      %v1831 = vld [vmem:[#allocation2 + $0x12] sm:$0xff]
      %v1832 = vld [vmem:[#allocation2 + $0x22] sm:$0xff]
      %v1833 = vld [vmem:[#allocation2 + $0x32] sm:$0xff]
      %v1834 = vld [vmem:[#allocation2 + $0x42] sm:$0xff]
      %v1835 = vld [vmem:[#allocation2 + $0x52] sm:$0xff]
      %v1836 = vld [vmem:[#allocation2 + $0x62] sm:$0xff]
      %v1837 = vld [vmem:[#allocation2 + $0x72] sm:$0xff]
      %s1838 = scalar_lea.vmem %s3, 256
      %v1839 = vld [vmem:[%s1838] sm:$0xff]
      %v1840 = vld [vmem:[%s1838 + $0x8] sm:$0xff]
      %v1841 = vld [vmem:[%s1838 + $0x10] sm:$0xff]
      %v1842 = vld [vmem:[%s1838 + $0x18] sm:$0xff]
      %v1843 = vld [vmem:[%s1838 + $0x20] sm:$0xff]
      %v1844 = vld [vmem:[%s1838 + $0x28] sm:$0xff]
      %v1845 = vld [vmem:[%s1838 + $0x30] sm:$0xff]
      %v1846 = vld [vmem:[%s1838 + $0x38] sm:$0xff]
      %v1847 = vld [vmem:[%s1838 + $0x40] sm:$0xff]
      %v1848 = vld [vmem:[%s1838 + $0x48] sm:$0xff]
      %v1849 = vld [vmem:[%s1838 + $0x50] sm:$0xff]
      %v1850 = vld [vmem:[%s1838 + $0x58] sm:$0xff]
      %v1851 = vld [vmem:[%s1838 + $0x60] sm:$0xff]
      %v1852 = vld [vmem:[%s1838 + $0x68] sm:$0xff]
      %v1853 = vld [vmem:[%s1838 + $0x70] sm:$0xff]
      %v1854 = vld [vmem:[%s1838 + $0x78] sm:$0xff]
      %1855 = vmatprep.subr.mxu0 0.0
      %1856 = vmatpush1.msra.mxu0 %v1839
      %1857 = vmatprep.subr.mxu0 0.0
      %1858 = vmatpush1.msra.mxu0 %v1840
      %1859 = vmatprep.subr.mxu0 0.0
      %1860 = vmatpush1.msra.mxu0 %v1841
      %1861 = vmatprep.subr.mxu0 0.0
      %1862 = vmatpush1.msra.mxu0 %v1842
      %1863 = vmatprep.subr.mxu0 0.0
      %1864 = vmatpush1.msra.mxu0 %v1843
      %1865 = vmatprep.subr.mxu0 0.0
      %1866 = vmatpush1.msra.mxu0 %v1844
      %1867 = vmatprep.subr.mxu0 0.0
      %1868 = vmatpush1.msra.mxu0 %v1845
      %1869 = vmatprep.subr.mxu0 0.0
      %1870 = vmatpush1.msra.mxu0 %v1846
      %1871 = vmatprep.subr.mxu0 0.0
      %1872 = vmatpush1.msra.mxu0 %v1847
      %1873 = vmatprep.subr.mxu0 0.0
      %1874 = vmatpush1.msra.mxu0 %v1848
      %1875 = vmatprep.subr.mxu0 0.0
      %1876 = vmatpush1.msra.mxu0 %v1849
      %1877 = vmatprep.subr.mxu0 0.0
      %1878 = vmatpush1.msra.mxu0 %v1850
      %1879 = vmatprep.subr.mxu0 0.0
      %1880 = vmatpush1.msra.mxu0 %v1851
      %1881 = vmatprep.subr.mxu0 0.0
      %1882 = vmatpush1.msra.mxu0 %v1852
      %1883 = vmatprep.subr.mxu0 0.0
      %1884 = vmatpush1.msra.mxu0 %v1853
      %1885 = vmatprep.subr.mxu0 0.0
      %1886 = vmatpush1.msra.mxu0 %v1854
      %1887 = vmatprep.subr.mxu0 0.0
      %1888 = vmatpush1.msra.mxu0 0.0
      %1889 = vmatprep.subr.mxu0 0.0
      %1890 = vmatpush1.msra.mxu0 0.0
      %1891 = vmatprep.subr.mxu0 0.0
      %1892 = vmatpush1.msra.mxu0 0.0
      %1893 = vmatprep.subr.mxu0 0.0
      %1894 = vmatpush1.msra.mxu0 0.0
      %1895 = vmatprep.subr.mxu0 0.0
      %1896 = vmatpush1.msra.mxu0 0.0
      %1897 = vmatprep.subr.mxu0 0.0
      %1898 = vmatpush1.msra.mxu0 0.0
      %1899 = vmatprep.subr.mxu0 0.0
      %1900 = vmatpush1.msra.mxu0 0.0
      %1901 = vmatprep.subr.mxu0 0.0
      %1902 = vmatpush1.msra.mxu0 0.0
      %1903 = vmatprep.subr.mxu0 0.0
      %1904 = vmatpush1.msra.mxu0 0.0
      %1905 = vmatprep.subr.mxu0 0.0
      %1906 = vmatpush1.msra.mxu0 0.0
      %1907 = vmatprep.subr.mxu0 0.0
      %1908 = vmatpush1.msra.mxu0 0.0
      %1909 = vmatprep.subr.mxu0 0.0
      %1910 = vmatpush1.msra.mxu0 0.0
      %1911 = vmatprep.subr.mxu0 0.0
      %1912 = vmatpush1.msra.mxu0 0.0
      %1913 = vmatprep.subr.mxu0 0.0
      %1914 = vmatpush1.msra.mxu0 0.0
      %1915 = vmatprep.subr.mxu0 0.0
      %1916 = vmatpush1.msra.mxu0 0.0
      %1917 = vmatprep.subr.mxu0 0.0
      %1918 = vmatpush1.msra.mxu0 0.0
      %1919 = vmatprep.mubr.f32.mxu0 0.0
      %1920 = vmatmul.mubr.f32.gmra.mrb[0].mxu0 %v1830
      %v1921 = vpop.f32.mrb[0].mxu0
      %v1922 = vadd.f32 0.0, %v1921
      %v1923 = vpop.f32.mrb[0].mxu0
      %1924 = vmatprep.mubr.f32.mxu0 0.0
      %1925 = vmatmul.mubr.f32.gmra.mrb[0].mxu0 %v1831
      %v1926 = vpop.f32.mrb[0].mxu0
      %v1927 = vadd.f32 0.0, %v1926
      %v1928 = vpop.f32.mrb[0].mxu0
      %1929 = vmatprep.mubr.f32.mxu0 0.0
      %1930 = vmatmul.mubr.f32.gmra.mrb[0].mxu0 %v1832
      %v1931 = vpop.f32.mrb[0].mxu0
      %v1932 = vadd.f32 0.0, %v1931
      %v1933 = vpop.f32.mrb[0].mxu0
      %1934 = vmatprep.mubr.f32.mxu0 0.0
      %1935 = vmatmul.mubr.f32.gmra.mrb[0].mxu0 %v1833
      %v1936 = vpop.f32.mrb[0].mxu0
      %v1937 = vadd.f32 0.0, %v1936
      %v1938 = vpop.f32.mrb[0].mxu0
      %1939 = vmatprep.mubr.f32.mxu0 0.0
      %1940 = vmatmul.mubr.f32.gmra.mrb[0].mxu0 %v1834
      %v1941 = vpop.f32.mrb[0].mxu0
      %v1942 = vadd.f32 0.0, %v1941
      %v1943 = vpop.f32.mrb[0].mxu0
      %1944 = vmatprep.mubr.f32.mxu0 0.0
      %1945 = vmatmul.mubr.f32.gmra.mrb[0].mxu0 %v1835
      %v1946 = vpop.f32.mrb[0].mxu0
      %v1947 = vadd.f32 0.0, %v1946
      %v1948 = vpop.f32.mrb[0].mxu0
      %1949 = vmatprep.mubr.f32.mxu0 0.0
      %1950 = vmatmul.mubr.f32.gmra.mrb[0].mxu0 %v1836
      %v1951 = vpop.f32.mrb[0].mxu0
      %v1952 = vadd.f32 0.0, %v1951
      %v1953 = vpop.f32.mrb[0].mxu0
      %1954 = vmatprep.mubr.f32.mxu0 0.0
      %1955 = vmatmul.mubr.f32.gmra.mrb[0].mxu0 %v1837
      %v1956 = vpop.f32.mrb[0].mxu0
      %v1957 = vadd.f32 0.0, %v1956
      %v1958 = vpop.f32.mrb[0].mxu0
      %1959 = vdwg.mxu0
      %v1960 = vadd.f32 %v1792, %v1922
      %v1961 = vadd.f32 %v1797, %v1927
      %v1962 = vadd.f32 %v1802, %v1932
      %v1963 = vadd.f32 %v1807, %v1937
      %v1964 = vadd.f32 %v1812, %v1942
      %v1965 = vadd.f32 %v1817, %v1947
      %v1966 = vadd.f32 %v1822, %v1952
      %v1967 = vadd.f32 %v1827, %v1957
      %v1968 = vld [vmem:[%s1562] sm:$0xff]
      %v1969 = vld [vmem:[%s1562 + $0x10] sm:$0xff]
      %v1970 = vld [vmem:[%s1562 + $0x20] sm:$0xff]
      %v1971 = vld [vmem:[%s1562 + $0x30] sm:$0xff]
      %v1972 = vld [vmem:[%s1562 + $0x40] sm:$0xff]
      %v1973 = vld [vmem:[%s1562 + $0x50] sm:$0xff]
      %v1974 = vld [vmem:[%s1562 + $0x60] sm:$0xff]
      %v1975 = vld [vmem:[%s1562 + $0x70] sm:$0xff]
      %s1976 = scalar_lea.vmem %s3, 384
      %v1977 = vld [vmem:[%s1976] sm:$0xff]
      %v1978 = vld [vmem:[%s1976 + $0x8] sm:$0xff]
      %v1979 = vld [vmem:[%s1976 + $0x10] sm:$0xff]
      %v1980 = vld [vmem:[%s1976 + $0x18] sm:$0xff]
      %v1981 = vld [vmem:[%s1976 + $0x20] sm:$0xff]
      %v1982 = vld [vmem:[%s1976 + $0x28] sm:$0xff]
      %v1983 = vld [vmem:[%s1976 + $0x30] sm:$0xff]
      %v1984 = vld [vmem:[%s1976 + $0x38] sm:$0xff]
      %v1985 = vld [vmem:[%s1976 + $0x40] sm:$0xff]
      %v1986 = vld [vmem:[%s1976 + $0x48] sm:$0xff]
      %v1987 = vld [vmem:[%s1976 + $0x50] sm:$0xff]
      %v1988 = vld [vmem:[%s1976 + $0x58] sm:$0xff]
      %v1989 = vld [vmem:[%s1976 + $0x60] sm:$0xff]
      %v1990 = vld [vmem:[%s1976 + $0x68] sm:$0xff]
      %v1991 = vld [vmem:[%s1976 + $0x70] sm:$0xff]
      %v1992 = vld [vmem:[%s1976 + $0x78] sm:$0xff]
      %1993 = vmatprep.subr.mxu0 0.0
      %1994 = vmatpush1.msra.mxu0 %v1977
      %1995 = vmatprep.subr.mxu0 0.0
      %1996 = vmatpush1.msra.mxu0 %v1978
      %1997 = vmatprep.subr.mxu0 0.0
      %1998 = vmatpush1.msra.mxu0 %v1979
      %1999 = vmatprep.subr.mxu0 0.0
      %2000 = vmatpush1.msra.mxu0 %v1980
      %2001 = vmatprep.subr.mxu0 0.0
      %2002 = vmatpush1.msra.mxu0 %v1981
      %2003 = vmatprep.subr.mxu0 0.0
      %2004 = vmatpush1.msra.mxu0 %v1982
      %2005 = vmatprep.subr.mxu0 0.0
      %2006 = vmatpush1.msra.mxu0 %v1983
      %2007 = vmatprep.subr.mxu0 0.0
      %2008 = vmatpush1.msra.mxu0 %v1984
      %2009 = vmatprep.subr.mxu0 0.0
      %2010 = vmatpush1.msra.mxu0 %v1985
      %2011 = vmatprep.subr.mxu0 0.0
      %2012 = vmatpush1.msra.mxu0 %v1986
      %2013 = vmatprep.subr.mxu0 0.0
      %2014 = vmatpush1.msra.mxu0 %v1987
      %2015 = vmatprep.subr.mxu0 0.0
      %2016 = vmatpush1.msra.mxu0 %v1988
      %2017 = vmatprep.subr.mxu0 0.0
      %2018 = vmatpush1.msra.mxu0 %v1989
      %2019 = vmatprep.subr.mxu0 0.0
      %2020 = vmatpush1.msra.mxu0 %v1990
      %2021 = vmatprep.subr.mxu0 0.0
      %2022 = vmatpush1.msra.mxu0 %v1991
      %2023 = vmatprep.subr.mxu0 0.0
      %2024 = vmatpush1.msra.mxu0 %v1992
      %2025 = vmatprep.subr.mxu0 0.0
      %2026 = vmatpush1.msra.mxu0 0.0
      %2027 = vmatprep.subr.mxu0 0.0
      %2028 = vmatpush1.msra.mxu0 0.0
      %2029 = vmatprep.subr.mxu0 0.0
      %2030 = vmatpush1.msra.mxu0 0.0
      %2031 = vmatprep.subr.mxu0 0.0
      %2032 = vmatpush1.msra.mxu0 0.0
      %2033 = vmatprep.subr.mxu0 0.0
      %2034 = vmatpush1.msra.mxu0 0.0
      %2035 = vmatprep.subr.mxu0 0.0
      %2036 = vmatpush1.msra.mxu0 0.0
      %2037 = vmatprep.subr.mxu0 0.0
      %2038 = vmatpush1.msra.mxu0 0.0
      %2039 = vmatprep.subr.mxu0 0.0
      %2040 = vmatpush1.msra.mxu0 0.0
      %2041 = vmatprep.subr.mxu0 0.0
      %2042 = vmatpush1.msra.mxu0 0.0
      %2043 = vmatprep.subr.mxu0 0.0
      %2044 = vmatpush1.msra.mxu0 0.0
      %2045 = vmatprep.subr.mxu0 0.0
      %2046 = vmatpush1.msra.mxu0 0.0
      %2047 = vmatprep.subr.mxu0 0.0
      %2048 = vmatpush1.msra.mxu0 0.0
      %2049 = vmatprep.subr.mxu0 0.0
      %2050 = vmatpush1.msra.mxu0 0.0
      %2051 = vmatprep.subr.mxu0 0.0
      %2052 = vmatpush1.msra.mxu0 0.0
      %2053 = vmatprep.subr.mxu0 0.0
      %2054 = vmatpush1.msra.mxu0 0.0
      %2055 = vmatprep.subr.mxu0 0.0
      %2056 = vmatpush1.msra.mxu0 0.0
      %2057 = vmatprep.mubr.f32.mxu0 0.0
      %2058 = vmatmul.mubr.f32.gmra.mrb[0].mxu0 %v1968
      %v2059 = vpop.f32.mrb[0].mxu0
      %v2060 = vadd.f32 0.0, %v2059
      %v2061 = vpop.f32.mrb[0].mxu0
      %2062 = vmatprep.mubr.f32.mxu0 0.0
      %2063 = vmatmul.mubr.f32.gmra.mrb[0].mxu0 %v1969
      %v2064 = vpop.f32.mrb[0].mxu0
      %v2065 = vadd.f32 0.0, %v2064
      %v2066 = vpop.f32.mrb[0].mxu0
      %2067 = vmatprep.mubr.f32.mxu0 0.0
      %2068 = vmatmul.mubr.f32.gmra.mrb[0].mxu0 %v1970
      %v2069 = vpop.f32.mrb[0].mxu0
      %v2070 = vadd.f32 0.0, %v2069
      %v2071 = vpop.f32.mrb[0].mxu0
      %2072 = vmatprep.mubr.f32.mxu0 0.0
      %2073 = vmatmul.mubr.f32.gmra.mrb[0].mxu0 %v1971
      %v2074 = vpop.f32.mrb[0].mxu0
      %v2075 = vadd.f32 0.0, %v2074
      %v2076 = vpop.f32.mrb[0].mxu0
      %2077 = vmatprep.mubr.f32.mxu0 0.0
      %2078 = vmatmul.mubr.f32.gmra.mrb[0].mxu0 %v1972
      %v2079 = vpop.f32.mrb[0].mxu0
      %v2080 = vadd.f32 0.0, %v2079
      %v2081 = vpop.f32.mrb[0].mxu0
      %2082 = vmatprep.mubr.f32.mxu0 0.0
      %2083 = vmatmul.mubr.f32.gmra.mrb[0].mxu0 %v1973
      %v2084 = vpop.f32.mrb[0].mxu0
      %v2085 = vadd.f32 0.0, %v2084
      %v2086 = vpop.f32.mrb[0].mxu0
      %2087 = vmatprep.mubr.f32.mxu0 0.0
      %2088 = vmatmul.mubr.f32.gmra.mrb[0].mxu0 %v1974
      %v2089 = vpop.f32.mrb[0].mxu0
      %v2090 = vadd.f32 0.0, %v2089
      %v2091 = vpop.f32.mrb[0].mxu0
      %2092 = vmatprep.mubr.f32.mxu0 0.0
      %2093 = vmatmul.mubr.f32.gmra.mrb[0].mxu0 %v1975
      %v2094 = vpop.f32.mrb[0].mxu0
      %v2095 = vadd.f32 0.0, %v2094
      %v2096 = vpop.f32.mrb[0].mxu0
      %2097 = vdwg.mxu0
      %v2098 = vadd.f32 %v1960, %v2060
      %v2099 = vadd.f32 %v1961, %v2065
      %v2100 = vadd.f32 %v1962, %v2070
      %v2101 = vadd.f32 %v1963, %v2075
      %v2102 = vadd.f32 %v1964, %v2080
      %v2103 = vadd.f32 %v1965, %v2085
      %v2104 = vadd.f32 %v1966, %v2090
      %v2105 = vadd.f32 %v1967, %v2095
      %v2106 = vld [vmem:[%s1562 + $0x1] sm:$0xff]
      %v2107 = vld [vmem:[%s1562 + $0x11] sm:$0xff]
      %v2108 = vld [vmem:[%s1562 + $0x21] sm:$0xff]
      %v2109 = vld [vmem:[%s1562 + $0x31] sm:$0xff]
      %v2110 = vld [vmem:[%s1562 + $0x41] sm:$0xff]
      %v2111 = vld [vmem:[%s1562 + $0x51] sm:$0xff]
      %v2112 = vld [vmem:[%s1562 + $0x61] sm:$0xff]
      %v2113 = vld [vmem:[%s1562 + $0x71] sm:$0xff]
      %s2114 = scalar_lea.vmem %s3, 512
      %v2115 = vld [vmem:[%s2114] sm:$0xff]
      %v2116 = vld [vmem:[%s2114 + $0x8] sm:$0xff]
      %v2117 = vld [vmem:[%s2114 + $0x10] sm:$0xff]
      %v2118 = vld [vmem:[%s2114 + $0x18] sm:$0xff]
      %v2119 = vld [vmem:[%s2114 + $0x20] sm:$0xff]
      %v2120 = vld [vmem:[%s2114 + $0x28] sm:$0xff]
      %v2121 = vld [vmem:[%s2114 + $0x30] sm:$0xff]
      %v2122 = vld [vmem:[%s2114 + $0x38] sm:$0xff]
      %v2123 = vld [vmem:[%s2114 + $0x40] sm:$0xff]
      %v2124 = vld [vmem:[%s2114 + $0x48] sm:$0xff]
      %v2125 = vld [vmem:[%s2114 + $0x50] sm:$0xff]
      %v2126 = vld [vmem:[%s2114 + $0x58] sm:$0xff]
      %v2127 = vld [vmem:[%s2114 + $0x60] sm:$0xff]
      %v2128 = vld [vmem:[%s2114 + $0x68] sm:$0xff]
      %v2129 = vld [vmem:[%s2114 + $0x70] sm:$0xff]
      %v2130 = vld [vmem:[%s2114 + $0x78] sm:$0xff]
      %2131 = vmatprep.subr.mxu0 0.0
      %2132 = vmatpush1.msra.mxu0 %v2115
      %2133 = vmatprep.subr.mxu0 0.0
      %2134 = vmatpush1.msra.mxu0 %v2116
      %2135 = vmatprep.subr.mxu0 0.0
      %2136 = vmatpush1.msra.mxu0 %v2117
      %2137 = vmatprep.subr.mxu0 0.0
      %2138 = vmatpush1.msra.mxu0 %v2118
      %2139 = vmatprep.subr.mxu0 0.0
      %2140 = vmatpush1.msra.mxu0 %v2119
      %2141 = vmatprep.subr.mxu0 0.0
      %2142 = vmatpush1.msra.mxu0 %v2120
      %2143 = vmatprep.subr.mxu0 0.0
      %2144 = vmatpush1.msra.mxu0 %v2121
      %2145 = vmatprep.subr.mxu0 0.0
      %2146 = vmatpush1.msra.mxu0 %v2122
      %2147 = vmatprep.subr.mxu0 0.0
      %2148 = vmatpush1.msra.mxu0 %v2123
      %2149 = vmatprep.subr.mxu0 0.0
      %2150 = vmatpush1.msra.mxu0 %v2124
      %2151 = vmatprep.subr.mxu0 0.0
      %2152 = vmatpush1.msra.mxu0 %v2125
      %2153 = vmatprep.subr.mxu0 0.0
      %2154 = vmatpush1.msra.mxu0 %v2126
      %2155 = vmatprep.subr.mxu0 0.0
      %2156 = vmatpush1.msra.mxu0 %v2127
      %2157 = vmatprep.subr.mxu0 0.0
      %2158 = vmatpush1.msra.mxu0 %v2128
      %2159 = vmatprep.subr.mxu0 0.0
      %2160 = vmatpush1.msra.mxu0 %v2129
      %2161 = vmatprep.subr.mxu0 0.0
      %2162 = vmatpush1.msra.mxu0 %v2130
      %2163 = vmatprep.subr.mxu0 0.0
      %2164 = vmatpush1.msra.mxu0 0.0
      %2165 = vmatprep.subr.mxu0 0.0
      %2166 = vmatpush1.msra.mxu0 0.0
      %2167 = vmatprep.subr.mxu0 0.0
      %2168 = vmatpush1.msra.mxu0 0.0
      %2169 = vmatprep.subr.mxu0 0.0
      %2170 = vmatpush1.msra.mxu0 0.0
      %2171 = vmatprep.subr.mxu0 0.0
      %2172 = vmatpush1.msra.mxu0 0.0
      %2173 = vmatprep.subr.mxu0 0.0
      %2174 = vmatpush1.msra.mxu0 0.0
      %2175 = vmatprep.subr.mxu0 0.0
      %2176 = vmatpush1.msra.mxu0 0.0
      %2177 = vmatprep.subr.mxu0 0.0
      %2178 = vmatpush1.msra.mxu0 0.0
      %2179 = vmatprep.subr.mxu0 0.0
      %2180 = vmatpush1.msra.mxu0 0.0
      %2181 = vmatprep.subr.mxu0 0.0
      %2182 = vmatpush1.msra.mxu0 0.0
      %2183 = vmatprep.subr.mxu0 0.0
      %2184 = vmatpush1.msra.mxu0 0.0
      %2185 = vmatprep.subr.mxu0 0.0
      %2186 = vmatpush1.msra.mxu0 0.0
      %2187 = vmatprep.subr.mxu0 0.0
      %2188 = vmatpush1.msra.mxu0 0.0
      %2189 = vmatprep.subr.mxu0 0.0
      %2190 = vmatpush1.msra.mxu0 0.0
      %2191 = vmatprep.subr.mxu0 0.0
      %2192 = vmatpush1.msra.mxu0 0.0
      %2193 = vmatprep.subr.mxu0 0.0
      %2194 = vmatpush1.msra.mxu0 0.0
      %2195 = vmatprep.mubr.f32.mxu0 0.0
      %2196 = vmatmul.mubr.f32.gmra.mrb[0].mxu0 %v2106
      %v2197 = vpop.f32.mrb[0].mxu0
      %v2198 = vadd.f32 0.0, %v2197
      %v2199 = vpop.f32.mrb[0].mxu0
      %2200 = vmatprep.mubr.f32.mxu0 0.0
      %2201 = vmatmul.mubr.f32.gmra.mrb[0].mxu0 %v2107
      %v2202 = vpop.f32.mrb[0].mxu0
      %v2203 = vadd.f32 0.0, %v2202
      %v2204 = vpop.f32.mrb[0].mxu0
      %2205 = vmatprep.mubr.f32.mxu0 0.0
      %2206 = vmatmul.mubr.f32.gmra.mrb[0].mxu0 %v2108
      %v2207 = vpop.f32.mrb[0].mxu0
      %v2208 = vadd.f32 0.0, %v2207
      %v2209 = vpop.f32.mrb[0].mxu0
      %2210 = vmatprep.mubr.f32.mxu0 0.0
      %2211 = vmatmul.mubr.f32.gmra.mrb[0].mxu0 %v2109
      %v2212 = vpop.f32.mrb[0].mxu0
      %v2213 = vadd.f32 0.0, %v2212
      %v2214 = vpop.f32.mrb[0].mxu0
      %2215 = vmatprep.mubr.f32.mxu0 0.0
      %2216 = vmatmul.mubr.f32.gmra.mrb[0].mxu0 %v2110
      %v2217 = vpop.f32.mrb[0].mxu0
      %v2218 = vadd.f32 0.0, %v2217
      %v2219 = vpop.f32.mrb[0].mxu0
      %2220 = vmatprep.mubr.f32.mxu0 0.0
      %2221 = vmatmul.mubr.f32.gmra.mrb[0].mxu0 %v2111
      %v2222 = vpop.f32.mrb[0].mxu0
      %v2223 = vadd.f32 0.0, %v2222
      %v2224 = vpop.f32.mrb[0].mxu0
      %2225 = vmatprep.mubr.f32.mxu0 0.0
      %2226 = vmatmul.mubr.f32.gmra.mrb[0].mxu0 %v2112
      %v2227 = vpop.f32.mrb[0].mxu0
      %v2228 = vadd.f32 0.0, %v2227
      %v2229 = vpop.f32.mrb[0].mxu0
      %2230 = vmatprep.mubr.f32.mxu0 0.0
      %2231 = vmatmul.mubr.f32.gmra.mrb[0].mxu0 %v2113
      %v2232 = vpop.f32.mrb[0].mxu0
      %v2233 = vadd.f32 0.0, %v2232
      %v2234 = vpop.f32.mrb[0].mxu0
      %2235 = vdwg.mxu0
      %v2236 = vadd.f32 %v2098, %v2198
      %v2237 = vadd.f32 %v2099, %v2203
      %v2238 = vadd.f32 %v2100, %v2208
      %v2239 = vadd.f32 %v2101, %v2213
      %v2240 = vadd.f32 %v2102, %v2218
      %v2241 = vadd.f32 %v2103, %v2223
      %v2242 = vadd.f32 %v2104, %v2228
      %v2243 = vadd.f32 %v2105, %v2233
      %v2244 = vld [vmem:[%s1562 + $0x2] sm:$0xff]
      %v2245 = vld [vmem:[%s1562 + $0x12] sm:$0xff]
      %v2246 = vld [vmem:[%s1562 + $0x22] sm:$0xff]
      %v2247 = vld [vmem:[%s1562 + $0x32] sm:$0xff]
      %v2248 = vld [vmem:[%s1562 + $0x42] sm:$0xff]
      %v2249 = vld [vmem:[%s1562 + $0x52] sm:$0xff]
      %v2250 = vld [vmem:[%s1562 + $0x62] sm:$0xff]
      %v2251 = vld [vmem:[%s1562 + $0x72] sm:$0xff]
      %s2252 = scalar_lea.vmem %s3, 640
      %v2253 = vld [vmem:[%s2252] sm:$0xff]
      %v2254 = vld [vmem:[%s2252 + $0x8] sm:$0xff]
      %v2255 = vld [vmem:[%s2252 + $0x10] sm:$0xff]
      %v2256 = vld [vmem:[%s2252 + $0x18] sm:$0xff]
      %v2257 = vld [vmem:[%s2252 + $0x20] sm:$0xff]
      %v2258 = vld [vmem:[%s2252 + $0x28] sm:$0xff]
      %v2259 = vld [vmem:[%s2252 + $0x30] sm:$0xff]
      %v2260 = vld [vmem:[%s2252 + $0x38] sm:$0xff]
      %v2261 = vld [vmem:[%s2252 + $0x40] sm:$0xff]
      %v2262 = vld [vmem:[%s2252 + $0x48] sm:$0xff]
      %v2263 = vld [vmem:[%s2252 + $0x50] sm:$0xff]
      %v2264 = vld [vmem:[%s2252 + $0x58] sm:$0xff]
      %v2265 = vld [vmem:[%s2252 + $0x60] sm:$0xff]
      %v2266 = vld [vmem:[%s2252 + $0x68] sm:$0xff]
      %v2267 = vld [vmem:[%s2252 + $0x70] sm:$0xff]
      %v2268 = vld [vmem:[%s2252 + $0x78] sm:$0xff]
      %2269 = vmatprep.subr.mxu0 0.0
      %2270 = vmatpush1.msra.mxu0 %v2253
      %2271 = vmatprep.subr.mxu0 0.0
      %2272 = vmatpush1.msra.mxu0 %v2254
      %2273 = vmatprep.subr.mxu0 0.0
      %2274 = vmatpush1.msra.mxu0 %v2255
      %2275 = vmatprep.subr.mxu0 0.0
      %2276 = vmatpush1.msra.mxu0 %v2256
      %2277 = vmatprep.subr.mxu0 0.0
      %2278 = vmatpush1.msra.mxu0 %v2257
      %2279 = vmatprep.subr.mxu0 0.0
      %2280 = vmatpush1.msra.mxu0 %v2258
      %2281 = vmatprep.subr.mxu0 0.0
      %2282 = vmatpush1.msra.mxu0 %v2259
      %2283 = vmatprep.subr.mxu0 0.0
      %2284 = vmatpush1.msra.mxu0 %v2260
      %2285 = vmatprep.subr.mxu0 0.0
      %2286 = vmatpush1.msra.mxu0 %v2261
      %2287 = vmatprep.subr.mxu0 0.0
      %2288 = vmatpush1.msra.mxu0 %v2262
      %2289 = vmatprep.subr.mxu0 0.0
      %2290 = vmatpush1.msra.mxu0 %v2263
      %2291 = vmatprep.subr.mxu0 0.0
      %2292 = vmatpush1.msra.mxu0 %v2264
      %2293 = vmatprep.subr.mxu0 0.0
      %2294 = vmatpush1.msra.mxu0 %v2265
      %2295 = vmatprep.subr.mxu0 0.0
      %2296 = vmatpush1.msra.mxu0 %v2266
      %2297 = vmatprep.subr.mxu0 0.0
      %2298 = vmatpush1.msra.mxu0 %v2267
      %2299 = vmatprep.subr.mxu0 0.0
      %2300 = vmatpush1.msra.mxu0 %v2268
      %2301 = vmatprep.subr.mxu0 0.0
      %2302 = vmatpush1.msra.mxu0 0.0
      %2303 = vmatprep.subr.mxu0 0.0
      %2304 = vmatpush1.msra.mxu0 0.0
      %2305 = vmatprep.subr.mxu0 0.0
      %2306 = vmatpush1.msra.mxu0 0.0
      %2307 = vmatprep.subr.mxu0 0.0
      %2308 = vmatpush1.msra.mxu0 0.0
      %2309 = vmatprep.subr.mxu0 0.0
      %2310 = vmatpush1.msra.mxu0 0.0
      %2311 = vmatprep.subr.mxu0 0.0
      %2312 = vmatpush1.msra.mxu0 0.0
      %2313 = vmatprep.subr.mxu0 0.0
      %2314 = vmatpush1.msra.mxu0 0.0
      %2315 = vmatprep.subr.mxu0 0.0
      %2316 = vmatpush1.msra.mxu0 0.0
      %2317 = vmatprep.subr.mxu0 0.0
      %2318 = vmatpush1.msra.mxu0 0.0
      %2319 = vmatprep.subr.mxu0 0.0
      %2320 = vmatpush1.msra.mxu0 0.0
      %2321 = vmatprep.subr.mxu0 0.0
      %2322 = vmatpush1.msra.mxu0 0.0
      %2323 = vmatprep.subr.mxu0 0.0
      %2324 = vmatpush1.msra.mxu0 0.0
      %2325 = vmatprep.subr.mxu0 0.0
      %2326 = vmatpush1.msra.mxu0 0.0
      %2327 = vmatprep.subr.mxu0 0.0
      %2328 = vmatpush1.msra.mxu0 0.0
      %2329 = vmatprep.subr.mxu0 0.0
      %2330 = vmatpush1.msra.mxu0 0.0
      %2331 = vmatprep.subr.mxu0 0.0
      %2332 = vmatpush1.msra.mxu0 0.0
      %2333 = vmatprep.mubr.f32.mxu0 0.0
      %2334 = vmatmul.mubr.f32.gmra.mrb[0].mxu0 %v2244
      %v2335 = vpop.f32.mrb[0].mxu0
      %v2336 = vadd.f32 0.0, %v2335
      %v2337 = vpop.f32.mrb[0].mxu0
      %2338 = vmatprep.mubr.f32.mxu0 0.0
      %2339 = vmatmul.mubr.f32.gmra.mrb[0].mxu0 %v2245
      %v2340 = vpop.f32.mrb[0].mxu0
      %v2341 = vadd.f32 0.0, %v2340
      %v2342 = vpop.f32.mrb[0].mxu0
      %2343 = vmatprep.mubr.f32.mxu0 0.0
      %2344 = vmatmul.mubr.f32.gmra.mrb[0].mxu0 %v2246
      %v2345 = vpop.f32.mrb[0].mxu0
      %v2346 = vadd.f32 0.0, %v2345
      %v2347 = vpop.f32.mrb[0].mxu0
      %2348 = vmatprep.mubr.f32.mxu0 0.0
      %2349 = vmatmul.mubr.f32.gmra.mrb[0].mxu0 %v2247
      %v2350 = vpop.f32.mrb[0].mxu0
      %v2351 = vadd.f32 0.0, %v2350
      %v2352 = vpop.f32.mrb[0].mxu0
      %2353 = vmatprep.mubr.f32.mxu0 0.0
      %2354 = vmatmul.mubr.f32.gmra.mrb[0].mxu0 %v2248
      %v2355 = vpop.f32.mrb[0].mxu0
      %v2356 = vadd.f32 0.0, %v2355
      %v2357 = vpop.f32.mrb[0].mxu0
      %2358 = vmatprep.mubr.f32.mxu0 0.0
      %2359 = vmatmul.mubr.f32.gmra.mrb[0].mxu0 %v2249
      %v2360 = vpop.f32.mrb[0].mxu0
      %v2361 = vadd.f32 0.0, %v2360
      %v2362 = vpop.f32.mrb[0].mxu0
      %2363 = vmatprep.mubr.f32.mxu0 0.0
      %2364 = vmatmul.mubr.f32.gmra.mrb[0].mxu0 %v2250
      %v2365 = vpop.f32.mrb[0].mxu0
      %v2366 = vadd.f32 0.0, %v2365
      %v2367 = vpop.f32.mrb[0].mxu0
      %2368 = vmatprep.mubr.f32.mxu0 0.0
      %2369 = vmatmul.mubr.f32.gmra.mrb[0].mxu0 %v2251
      %v2370 = vpop.f32.mrb[0].mxu0
      %v2371 = vadd.f32 0.0, %v2370
      %v2372 = vpop.f32.mrb[0].mxu0
      %2373 = vdwg.mxu0
      %v2374 = vadd.f32 %v2236, %v2336
      %v2375 = vadd.f32 %v2237, %v2341
      %v2376 = vadd.f32 %v2238, %v2346
      %v2377 = vadd.f32 %v2239, %v2351
      %v2378 = vadd.f32 %v2240, %v2356
      %v2379 = vadd.f32 %v2241, %v2361
      %v2380 = vadd.f32 %v2242, %v2366
      %v2381 = vadd.f32 %v2243, %v2371
      %s2382 = scalar_lea.vmem [#allocation2], 32
      %v2383 = vld [vmem:[%s2382] sm:$0xff]
      %v2384 = vld [vmem:[%s2382 + $0x10] sm:$0xff]
      %v2385 = vld [vmem:[%s2382 + $0x20] sm:$0xff]
      %v2386 = vld [vmem:[%s2382 + $0x30] sm:$0xff]
      %v2387 = vld [vmem:[%s2382 + $0x40] sm:$0xff]
      %v2388 = vld [vmem:[%s2382 + $0x50] sm:$0xff]
      %v2389 = vld [vmem:[%s2382 + $0x60] sm:$0xff]
      %v2390 = vld [vmem:[%s2382 + $0x70] sm:$0xff]
      %s2391 = scalar_lea.vmem %s3, 768
      %v2392 = vld [vmem:[%s2391] sm:$0xff]
      %v2393 = vld [vmem:[%s2391 + $0x8] sm:$0xff]
      %v2394 = vld [vmem:[%s2391 + $0x10] sm:$0xff]
      %v2395 = vld [vmem:[%s2391 + $0x18] sm:$0xff]
      %v2396 = vld [vmem:[%s2391 + $0x20] sm:$0xff]
      %v2397 = vld [vmem:[%s2391 + $0x28] sm:$0xff]
      %v2398 = vld [vmem:[%s2391 + $0x30] sm:$0xff]
      %v2399 = vld [vmem:[%s2391 + $0x38] sm:$0xff]
      %v2400 = vld [vmem:[%s2391 + $0x40] sm:$0xff]
      %v2401 = vld [vmem:[%s2391 + $0x48] sm:$0xff]
      %v2402 = vld [vmem:[%s2391 + $0x50] sm:$0xff]
      %v2403 = vld [vmem:[%s2391 + $0x58] sm:$0xff]
      %v2404 = vld [vmem:[%s2391 + $0x60] sm:$0xff]
      %v2405 = vld [vmem:[%s2391 + $0x68] sm:$0xff]
      %v2406 = vld [vmem:[%s2391 + $0x70] sm:$0xff]
      %v2407 = vld [vmem:[%s2391 + $0x78] sm:$0xff]
      %2408 = vmatprep.subr.mxu0 0.0
      %2409 = vmatpush1.msra.mxu0 %v2392
      %2410 = vmatprep.subr.mxu0 0.0
      %2411 = vmatpush1.msra.mxu0 %v2393
      %2412 = vmatprep.subr.mxu0 0.0
      %2413 = vmatpush1.msra.mxu0 %v2394
      %2414 = vmatprep.subr.mxu0 0.0
      %2415 = vmatpush1.msra.mxu0 %v2395
      %2416 = vmatprep.subr.mxu0 0.0
      %2417 = vmatpush1.msra.mxu0 %v2396
      %2418 = vmatprep.subr.mxu0 0.0
      %2419 = vmatpush1.msra.mxu0 %v2397
      %2420 = vmatprep.subr.mxu0 0.0
      %2421 = vmatpush1.msra.mxu0 %v2398
      %2422 = vmatprep.subr.mxu0 0.0
      %2423 = vmatpush1.msra.mxu0 %v2399
      %2424 = vmatprep.subr.mxu0 0.0
      %2425 = vmatpush1.msra.mxu0 %v2400
      %2426 = vmatprep.subr.mxu0 0.0
      %2427 = vmatpush1.msra.mxu0 %v2401
      %2428 = vmatprep.subr.mxu0 0.0
      %2429 = vmatpush1.msra.mxu0 %v2402
      %2430 = vmatprep.subr.mxu0 0.0
      %2431 = vmatpush1.msra.mxu0 %v2403
      %2432 = vmatprep.subr.mxu0 0.0
      %2433 = vmatpush1.msra.mxu0 %v2404
      %2434 = vmatprep.subr.mxu0 0.0
      %2435 = vmatpush1.msra.mxu0 %v2405
      %2436 = vmatprep.subr.mxu0 0.0
      %2437 = vmatpush1.msra.mxu0 %v2406
      %2438 = vmatprep.subr.mxu0 0.0
      %2439 = vmatpush1.msra.mxu0 %v2407
      %2440 = vmatprep.subr.mxu0 0.0
      %2441 = vmatpush1.msra.mxu0 0.0
      %2442 = vmatprep.subr.mxu0 0.0
      %2443 = vmatpush1.msra.mxu0 0.0
      %2444 = vmatprep.subr.mxu0 0.0
      %2445 = vmatpush1.msra.mxu0 0.0
      %2446 = vmatprep.subr.mxu0 0.0
      %2447 = vmatpush1.msra.mxu0 0.0
      %2448 = vmatprep.subr.mxu0 0.0
      %2449 = vmatpush1.msra.mxu0 0.0
      %2450 = vmatprep.subr.mxu0 0.0
      %2451 = vmatpush1.msra.mxu0 0.0
      %2452 = vmatprep.subr.mxu0 0.0
      %2453 = vmatpush1.msra.mxu0 0.0
      %2454 = vmatprep.subr.mxu0 0.0
      %2455 = vmatpush1.msra.mxu0 0.0
      %2456 = vmatprep.subr.mxu0 0.0
      %2457 = vmatpush1.msra.mxu0 0.0
      %2458 = vmatprep.subr.mxu0 0.0
      %2459 = vmatpush1.msra.mxu0 0.0
      %2460 = vmatprep.subr.mxu0 0.0
      %2461 = vmatpush1.msra.mxu0 0.0
      %2462 = vmatprep.subr.mxu0 0.0
      %2463 = vmatpush1.msra.mxu0 0.0
      %2464 = vmatprep.subr.mxu0 0.0
      %2465 = vmatpush1.msra.mxu0 0.0
      %2466 = vmatprep.subr.mxu0 0.0
      %2467 = vmatpush1.msra.mxu0 0.0
      %2468 = vmatprep.subr.mxu0 0.0
      %2469 = vmatpush1.msra.mxu0 0.0
      %2470 = vmatprep.subr.mxu0 0.0
      %2471 = vmatpush1.msra.mxu0 0.0
      %2472 = vmatprep.mubr.f32.mxu0 0.0
      %2473 = vmatmul.mubr.f32.gmra.mrb[0].mxu0 %v2383
      %v2474 = vpop.f32.mrb[0].mxu0
      %v2475 = vadd.f32 0.0, %v2474
      %v2476 = vpop.f32.mrb[0].mxu0
      %2477 = vmatprep.mubr.f32.mxu0 0.0
      %2478 = vmatmul.mubr.f32.gmra.mrb[0].mxu0 %v2384
      %v2479 = vpop.f32.mrb[0].mxu0
      %v2480 = vadd.f32 0.0, %v2479
      %v2481 = vpop.f32.mrb[0].mxu0
      %2482 = vmatprep.mubr.f32.mxu0 0.0
      %2483 = vmatmul.mubr.f32.gmra.mrb[0].mxu0 %v2385
      %v2484 = vpop.f32.mrb[0].mxu0
      %v2485 = vadd.f32 0.0, %v2484
      %v2486 = vpop.f32.mrb[0].mxu0
      %2487 = vmatprep.mubr.f32.mxu0 0.0
      %2488 = vmatmul.mubr.f32.gmra.mrb[0].mxu0 %v2386
      %v2489 = vpop.f32.mrb[0].mxu0
      %v2490 = vadd.f32 0.0, %v2489
      %v2491 = vpop.f32.mrb[0].mxu0
      %2492 = vmatprep.mubr.f32.mxu0 0.0
      %2493 = vmatmul.mubr.f32.gmra.mrb[0].mxu0 %v2387
      %v2494 = vpop.f32.mrb[0].mxu0
      %v2495 = vadd.f32 0.0, %v2494
      %v2496 = vpop.f32.mrb[0].mxu0
      %2497 = vmatprep.mubr.f32.mxu0 0.0
      %2498 = vmatmul.mubr.f32.gmra.mrb[0].mxu0 %v2388
      %v2499 = vpop.f32.mrb[0].mxu0
      %v2500 = vadd.f32 0.0, %v2499
      %v2501 = vpop.f32.mrb[0].mxu0
      %2502 = vmatprep.mubr.f32.mxu0 0.0
      %2503 = vmatmul.mubr.f32.gmra.mrb[0].mxu0 %v2389
      %v2504 = vpop.f32.mrb[0].mxu0
      %v2505 = vadd.f32 0.0, %v2504
      %v2506 = vpop.f32.mrb[0].mxu0
      %2507 = vmatprep.mubr.f32.mxu0 0.0
      %2508 = vmatmul.mubr.f32.gmra.mrb[0].mxu0 %v2390
      %v2509 = vpop.f32.mrb[0].mxu0
      %v2510 = vadd.f32 0.0, %v2509
      %v2511 = vpop.f32.mrb[0].mxu0
      %2512 = vdwg.mxu0
      %v2513 = vadd.f32 %v2374, %v2475
      %v2514 = vadd.f32 %v2375, %v2480
      %v2515 = vadd.f32 %v2376, %v2485
      %v2516 = vadd.f32 %v2377, %v2490
      %v2517 = vadd.f32 %v2378, %v2495
      %v2518 = vadd.f32 %v2379, %v2500
      %v2519 = vadd.f32 %v2380, %v2505
      %v2520 = vadd.f32 %v2381, %v2510
      %v2521 = vld [vmem:[%s2382 + $0x1] sm:$0xff]
      %v2522 = vld [vmem:[%s2382 + $0x11] sm:$0xff]
      %v2523 = vld [vmem:[%s2382 + $0x21] sm:$0xff]
      %v2524 = vld [vmem:[%s2382 + $0x31] sm:$0xff]
      %v2525 = vld [vmem:[%s2382 + $0x41] sm:$0xff]
      %v2526 = vld [vmem:[%s2382 + $0x51] sm:$0xff]
      %v2527 = vld [vmem:[%s2382 + $0x61] sm:$0xff]
      %v2528 = vld [vmem:[%s2382 + $0x71] sm:$0xff]
      %s2529 = scalar_lea.vmem %s3, 896
      %v2530 = vld [vmem:[%s2529] sm:$0xff]
      %v2531 = vld [vmem:[%s2529 + $0x8] sm:$0xff]
      %v2532 = vld [vmem:[%s2529 + $0x10] sm:$0xff]
      %v2533 = vld [vmem:[%s2529 + $0x18] sm:$0xff]
      %v2534 = vld [vmem:[%s2529 + $0x20] sm:$0xff]
      %v2535 = vld [vmem:[%s2529 + $0x28] sm:$0xff]
      %v2536 = vld [vmem:[%s2529 + $0x30] sm:$0xff]
      %v2537 = vld [vmem:[%s2529 + $0x38] sm:$0xff]
      %v2538 = vld [vmem:[%s2529 + $0x40] sm:$0xff]
      %v2539 = vld [vmem:[%s2529 + $0x48] sm:$0xff]
      %v2540 = vld [vmem:[%s2529 + $0x50] sm:$0xff]
      %v2541 = vld [vmem:[%s2529 + $0x58] sm:$0xff]
      %v2542 = vld [vmem:[%s2529 + $0x60] sm:$0xff]
      %v2543 = vld [vmem:[%s2529 + $0x68] sm:$0xff]
      %v2544 = vld [vmem:[%s2529 + $0x70] sm:$0xff]
      %v2545 = vld [vmem:[%s2529 + $0x78] sm:$0xff]
      %2546 = vmatprep.subr.mxu0 0.0
      %2547 = vmatpush1.msra.mxu0 %v2530
      %2548 = vmatprep.subr.mxu0 0.0
      %2549 = vmatpush1.msra.mxu0 %v2531
      %2550 = vmatprep.subr.mxu0 0.0
      %2551 = vmatpush1.msra.mxu0 %v2532
      %2552 = vmatprep.subr.mxu0 0.0
      %2553 = vmatpush1.msra.mxu0 %v2533
      %2554 = vmatprep.subr.mxu0 0.0
      %2555 = vmatpush1.msra.mxu0 %v2534
      %2556 = vmatprep.subr.mxu0 0.0
      %2557 = vmatpush1.msra.mxu0 %v2535
      %2558 = vmatprep.subr.mxu0 0.0
      %2559 = vmatpush1.msra.mxu0 %v2536
      %2560 = vmatprep.subr.mxu0 0.0
      %2561 = vmatpush1.msra.mxu0 %v2537
      %2562 = vmatprep.subr.mxu0 0.0
      %2563 = vmatpush1.msra.mxu0 %v2538
      %2564 = vmatprep.subr.mxu0 0.0
      %2565 = vmatpush1.msra.mxu0 %v2539
      %2566 = vmatprep.subr.mxu0 0.0
      %2567 = vmatpush1.msra.mxu0 %v2540
      %2568 = vmatprep.subr.mxu0 0.0
      %2569 = vmatpush1.msra.mxu0 %v2541
      %2570 = vmatprep.subr.mxu0 0.0
      %2571 = vmatpush1.msra.mxu0 %v2542
      %2572 = vmatprep.subr.mxu0 0.0
      %2573 = vmatpush1.msra.mxu0 %v2543
      %2574 = vmatprep.subr.mxu0 0.0
      %2575 = vmatpush1.msra.mxu0 %v2544
      %2576 = vmatprep.subr.mxu0 0.0
      %2577 = vmatpush1.msra.mxu0 %v2545
      %2578 = vmatprep.subr.mxu0 0.0
      %2579 = vmatpush1.msra.mxu0 0.0
      %2580 = vmatprep.subr.mxu0 0.0
      %2581 = vmatpush1.msra.mxu0 0.0
      %2582 = vmatprep.subr.mxu0 0.0
      %2583 = vmatpush1.msra.mxu0 0.0
      %2584 = vmatprep.subr.mxu0 0.0
      %2585 = vmatpush1.msra.mxu0 0.0
      %2586 = vmatprep.subr.mxu0 0.0
      %2587 = vmatpush1.msra.mxu0 0.0
      %2588 = vmatprep.subr.mxu0 0.0
      %2589 = vmatpush1.msra.mxu0 0.0
      %2590 = vmatprep.subr.mxu0 0.0
      %2591 = vmatpush1.msra.mxu0 0.0
      %2592 = vmatprep.subr.mxu0 0.0
      %2593 = vmatpush1.msra.mxu0 0.0
      %2594 = vmatprep.subr.mxu0 0.0
      %2595 = vmatpush1.msra.mxu0 0.0
      %2596 = vmatprep.subr.mxu0 0.0
      %2597 = vmatpush1.msra.mxu0 0.0
      %2598 = vmatprep.subr.mxu0 0.0
      %2599 = vmatpush1.msra.mxu0 0.0
      %2600 = vmatprep.subr.mxu0 0.0
      %2601 = vmatpush1.msra.mxu0 0.0
      %2602 = vmatprep.subr.mxu0 0.0
      %2603 = vmatpush1.msra.mxu0 0.0
      %2604 = vmatprep.subr.mxu0 0.0
      %2605 = vmatpush1.msra.mxu0 0.0
      %2606 = vmatprep.subr.mxu0 0.0
      %2607 = vmatpush1.msra.mxu0 0.0
      %2608 = vmatprep.subr.mxu0 0.0
      %2609 = vmatpush1.msra.mxu0 0.0
      %2610 = vmatprep.mubr.f32.mxu0 0.0
      %2611 = vmatmul.mubr.f32.gmra.mrb[0].mxu0 %v2521
      %v2612 = vpop.f32.mrb[0].mxu0
      %v2613 = vadd.f32 0.0, %v2612
      %v2614 = vpop.f32.mrb[0].mxu0
      %2615 = vmatprep.mubr.f32.mxu0 0.0
      %2616 = vmatmul.mubr.f32.gmra.mrb[0].mxu0 %v2522
      %v2617 = vpop.f32.mrb[0].mxu0
      %v2618 = vadd.f32 0.0, %v2617
      %v2619 = vpop.f32.mrb[0].mxu0
      %2620 = vmatprep.mubr.f32.mxu0 0.0
      %2621 = vmatmul.mubr.f32.gmra.mrb[0].mxu0 %v2523
      %v2622 = vpop.f32.mrb[0].mxu0
      %v2623 = vadd.f32 0.0, %v2622
      %v2624 = vpop.f32.mrb[0].mxu0
      %2625 = vmatprep.mubr.f32.mxu0 0.0
      %2626 = vmatmul.mubr.f32.gmra.mrb[0].mxu0 %v2524
      %v2627 = vpop.f32.mrb[0].mxu0
      %v2628 = vadd.f32 0.0, %v2627
      %v2629 = vpop.f32.mrb[0].mxu0
      %2630 = vmatprep.mubr.f32.mxu0 0.0
      %2631 = vmatmul.mubr.f32.gmra.mrb[0].mxu0 %v2525
      %v2632 = vpop.f32.mrb[0].mxu0
      %v2633 = vadd.f32 0.0, %v2632
      %v2634 = vpop.f32.mrb[0].mxu0
      %2635 = vmatprep.mubr.f32.mxu0 0.0
      %2636 = vmatmul.mubr.f32.gmra.mrb[0].mxu0 %v2526
      %v2637 = vpop.f32.mrb[0].mxu0
      %v2638 = vadd.f32 0.0, %v2637
      %v2639 = vpop.f32.mrb[0].mxu0
      %2640 = vmatprep.mubr.f32.mxu0 0.0
      %2641 = vmatmul.mubr.f32.gmra.mrb[0].mxu0 %v2527
      %v2642 = vpop.f32.mrb[0].mxu0
      %v2643 = vadd.f32 0.0, %v2642
      %v2644 = vpop.f32.mrb[0].mxu0
      %2645 = vmatprep.mubr.f32.mxu0 0.0
      %2646 = vmatmul.mubr.f32.gmra.mrb[0].mxu0 %v2528
      %v2647 = vpop.f32.mrb[0].mxu0
      %v2648 = vadd.f32 0.0, %v2647
      %v2649 = vpop.f32.mrb[0].mxu0
      %2650 = vdwg.mxu0
      %v2651 = vadd.f32 %v2513, %v2613
      %v2652 = vadd.f32 %v2514, %v2618
      %v2653 = vadd.f32 %v2515, %v2623
      %v2654 = vadd.f32 %v2516, %v2628
      %v2655 = vadd.f32 %v2517, %v2633
      %v2656 = vadd.f32 %v2518, %v2638
      %v2657 = vadd.f32 %v2519, %v2643
      %v2658 = vadd.f32 %v2520, %v2648
      %v2659 = vld [vmem:[%s2382 + $0x2] sm:$0xff]
      %v2660 = vld [vmem:[%s2382 + $0x12] sm:$0xff]
      %v2661 = vld [vmem:[%s2382 + $0x22] sm:$0xff]
      %v2662 = vld [vmem:[%s2382 + $0x32] sm:$0xff]
      %v2663 = vld [vmem:[%s2382 + $0x42] sm:$0xff]
      %v2664 = vld [vmem:[%s2382 + $0x52] sm:$0xff]
      %v2665 = vld [vmem:[%s2382 + $0x62] sm:$0xff]
      %v2666 = vld [vmem:[%s2382 + $0x72] sm:$0xff]
      %s2667 = scalar_lea.vmem %s3, 1024
      %v2668 = vld [vmem:[%s2667] sm:$0xff]
      %v2669 = vld [vmem:[%s2667 + $0x8] sm:$0xff]
      %v2670 = vld [vmem:[%s2667 + $0x10] sm:$0xff]
      %v2671 = vld [vmem:[%s2667 + $0x18] sm:$0xff]
      %v2672 = vld [vmem:[%s2667 + $0x20] sm:$0xff]
      %v2673 = vld [vmem:[%s2667 + $0x28] sm:$0xff]
      %v2674 = vld [vmem:[%s2667 + $0x30] sm:$0xff]
      %v2675 = vld [vmem:[%s2667 + $0x38] sm:$0xff]
      %v2676 = vld [vmem:[%s2667 + $0x40] sm:$0xff]
      %v2677 = vld [vmem:[%s2667 + $0x48] sm:$0xff]
      %v2678 = vld [vmem:[%s2667 + $0x50] sm:$0xff]
      %v2679 = vld [vmem:[%s2667 + $0x58] sm:$0xff]
      %v2680 = vld [vmem:[%s2667 + $0x60] sm:$0xff]
      %v2681 = vld [vmem:[%s2667 + $0x68] sm:$0xff]
      %v2682 = vld [vmem:[%s2667 + $0x70] sm:$0xff]
      %v2683 = vld [vmem:[%s2667 + $0x78] sm:$0xff]
      %2684 = vmatprep.subr.mxu0 0.0
      %2685 = vmatpush1.msra.mxu0 %v2668
      %2686 = vmatprep.subr.mxu0 0.0
      %2687 = vmatpush1.msra.mxu0 %v2669
      %2688 = vmatprep.subr.mxu0 0.0
      %2689 = vmatpush1.msra.mxu0 %v2670
      %2690 = vmatprep.subr.mxu0 0.0
      %2691 = vmatpush1.msra.mxu0 %v2671
      %2692 = vmatprep.subr.mxu0 0.0
      %2693 = vmatpush1.msra.mxu0 %v2672
      %2694 = vmatprep.subr.mxu0 0.0
      %2695 = vmatpush1.msra.mxu0 %v2673
      %2696 = vmatprep.subr.mxu0 0.0
      %2697 = vmatpush1.msra.mxu0 %v2674
      %2698 = vmatprep.subr.mxu0 0.0
      %2699 = vmatpush1.msra.mxu0 %v2675
      %2700 = vmatprep.subr.mxu0 0.0
      %2701 = vmatpush1.msra.mxu0 %v2676
      %2702 = vmatprep.subr.mxu0 0.0
      %2703 = vmatpush1.msra.mxu0 %v2677
      %2704 = vmatprep.subr.mxu0 0.0
      %2705 = vmatpush1.msra.mxu0 %v2678
      %2706 = vmatprep.subr.mxu0 0.0
      %2707 = vmatpush1.msra.mxu0 %v2679
      %2708 = vmatprep.subr.mxu0 0.0
      %2709 = vmatpush1.msra.mxu0 %v2680
      %2710 = vmatprep.subr.mxu0 0.0
      %2711 = vmatpush1.msra.mxu0 %v2681
      %2712 = vmatprep.subr.mxu0 0.0
      %2713 = vmatpush1.msra.mxu0 %v2682
      %2714 = vmatprep.subr.mxu0 0.0
      %2715 = vmatpush1.msra.mxu0 %v2683
      %2716 = vmatprep.subr.mxu0 0.0
      %2717 = vmatpush1.msra.mxu0 0.0
      %2718 = vmatprep.subr.mxu0 0.0
      %2719 = vmatpush1.msra.mxu0 0.0
      %2720 = vmatprep.subr.mxu0 0.0
      %2721 = vmatpush1.msra.mxu0 0.0
      %2722 = vmatprep.subr.mxu0 0.0
      %2723 = vmatpush1.msra.mxu0 0.0
      %2724 = vmatprep.subr.mxu0 0.0
      %2725 = vmatpush1.msra.mxu0 0.0
      %2726 = vmatprep.subr.mxu0 0.0
      %2727 = vmatpush1.msra.mxu0 0.0
      %2728 = vmatprep.subr.mxu0 0.0
      %2729 = vmatpush1.msra.mxu0 0.0
      %2730 = vmatprep.subr.mxu0 0.0
      %2731 = vmatpush1.msra.mxu0 0.0
      %2732 = vmatprep.subr.mxu0 0.0
      %2733 = vmatpush1.msra.mxu0 0.0
      %2734 = vmatprep.subr.mxu0 0.0
      %2735 = vmatpush1.msra.mxu0 0.0
      %2736 = vmatprep.subr.mxu0 0.0
      %2737 = vmatpush1.msra.mxu0 0.0
      %2738 = vmatprep.subr.mxu0 0.0
      %2739 = vmatpush1.msra.mxu0 0.0
      %2740 = vmatprep.subr.mxu0 0.0
      %2741 = vmatpush1.msra.mxu0 0.0
      %2742 = vmatprep.subr.mxu0 0.0
      %2743 = vmatpush1.msra.mxu0 0.0
      %2744 = vmatprep.subr.mxu0 0.0
      %2745 = vmatpush1.msra.mxu0 0.0
      %2746 = vmatprep.subr.mxu0 0.0
      %2747 = vmatpush1.msra.mxu0 0.0
      %2748 = vmatprep.mubr.f32.mxu0 0.0
      %2749 = vmatmul.mubr.f32.gmra.mrb[0].mxu0 %v2659
      %v2750 = vpop.f32.mrb[0].mxu0
      %v2751 = vadd.f32 0.0, %v2750
      %v2752 = vpop.f32.mrb[0].mxu0
      %2753 = vmatprep.mubr.f32.mxu0 0.0
      %2754 = vmatmul.mubr.f32.gmra.mrb[0].mxu0 %v2660
      %v2755 = vpop.f32.mrb[0].mxu0
      %v2756 = vadd.f32 0.0, %v2755
      %v2757 = vpop.f32.mrb[0].mxu0
      %2758 = vmatprep.mubr.f32.mxu0 0.0
      %2759 = vmatmul.mubr.f32.gmra.mrb[0].mxu0 %v2661
      %v2760 = vpop.f32.mrb[0].mxu0
      %v2761 = vadd.f32 0.0, %v2760
      %v2762 = vpop.f32.mrb[0].mxu0
      %2763 = vmatprep.mubr.f32.mxu0 0.0
      %2764 = vmatmul.mubr.f32.gmra.mrb[0].mxu0 %v2662
      %v2765 = vpop.f32.mrb[0].mxu0
      %v2766 = vadd.f32 0.0, %v2765
      %v2767 = vpop.f32.mrb[0].mxu0
      %2768 = vmatprep.mubr.f32.mxu0 0.0
      %2769 = vmatmul.mubr.f32.gmra.mrb[0].mxu0 %v2663
      %v2770 = vpop.f32.mrb[0].mxu0
      %v2771 = vadd.f32 0.0, %v2770
      %v2772 = vpop.f32.mrb[0].mxu0
      %2773 = vmatprep.mubr.f32.mxu0 0.0
      %2774 = vmatmul.mubr.f32.gmra.mrb[0].mxu0 %v2664
      %v2775 = vpop.f32.mrb[0].mxu0
      %v2776 = vadd.f32 0.0, %v2775
      %v2777 = vpop.f32.mrb[0].mxu0
      %2778 = vmatprep.mubr.f32.mxu0 0.0
      %2779 = vmatmul.mubr.f32.gmra.mrb[0].mxu0 %v2665
      %v2780 = vpop.f32.mrb[0].mxu0
      %v2781 = vadd.f32 0.0, %v2780
      %v2782 = vpop.f32.mrb[0].mxu0
      %2783 = vmatprep.mubr.f32.mxu0 0.0
      %2784 = vmatmul.mubr.f32.gmra.mrb[0].mxu0 %v2666
      %v2785 = vpop.f32.mrb[0].mxu0
      %v2786 = vadd.f32 0.0, %v2785
      %v2787 = vpop.f32.mrb[0].mxu0
      %2788 = vdwg.mxu0
      %v2789 = vadd.f32 %v2651, %v2751
      %v2790 = vadd.f32 %v2652, %v2756
      %v2791 = vadd.f32 %v2653, %v2761
      %v2792 = vadd.f32 %v2654, %v2766
      %v2793 = vadd.f32 %v2655, %v2771
      %v2794 = vadd.f32 %v2656, %v2776
      %v2795 = vadd.f32 %v2657, %v2781
      %v2796 = vadd.f32 %v2658, %v2786
      %v2797 = vld [vmem:[%s4] sm:$0x1]
      %v2799 = vlaneseq
      %v2800 = vshrl.u32 %v2799, 7
      %v2801 = vsub.s32 0, %v2800
      %v2802 = vrot.slane %v2797, %v2801
      %v2804 = vadd.f32 %v2789, %v2802
      %v2805 = vadd.f32 %v2790, %v2802
      %v2806 = vadd.f32 %v2791, %v2802
      %v2807 = vadd.f32 %v2792, %v2802
      %v2808 = vadd.f32 %v2793, %v2802
      %v2809 = vadd.f32 %v2794, %v2802
      %v2810 = vadd.f32 %v2795, %v2802
      %v2811 = vadd.f32 %v2796, %v2802
      %v2812 = vld [vmem:[%s821] sm:$0xff]
      %v2813 = vld [vmem:[%s821 + $0x10] sm:$0xff]
      %v2814 = vld [vmem:[%s821 + $0x20] sm:$0xff]
      %v2815 = vld [vmem:[%s821 + $0x30] sm:$0xff]
      %v2816 = vld [vmem:[%s821 + $0x40] sm:$0xff]
      %v2817 = vld [vmem:[%s821 + $0x50] sm:$0xff]
      %v2818 = vld [vmem:[%s821 + $0x60] sm:$0xff]
      %v2819 = vld [vmem:[%s821 + $0x70] sm:$0xff]
      %v2820 = vld [vmem:[%s5] sm:$0xff]
      %v2821 = vld [vmem:[%s5 + $0x8] sm:$0xff]
      %v2822 = vld [vmem:[%s5 + $0x10] sm:$0xff]
      %v2823 = vld [vmem:[%s5 + $0x18] sm:$0xff]
      %v2824 = vld [vmem:[%s5 + $0x20] sm:$0xff]
      %v2825 = vld [vmem:[%s5 + $0x28] sm:$0xff]
      %v2826 = vld [vmem:[%s5 + $0x30] sm:$0xff]
      %v2827 = vld [vmem:[%s5 + $0x38] sm:$0xff]
      %v2828 = vld [vmem:[%s5 + $0x40] sm:$0xff]
      %v2829 = vld [vmem:[%s5 + $0x48] sm:$0xff]
      %v2830 = vld [vmem:[%s5 + $0x50] sm:$0xff]
      %v2831 = vld [vmem:[%s5 + $0x58] sm:$0xff]
      %v2832 = vld [vmem:[%s5 + $0x60] sm:$0xff]
      %v2833 = vld [vmem:[%s5 + $0x68] sm:$0xff]
      %v2834 = vld [vmem:[%s5 + $0x70] sm:$0xff]
      %v2835 = vld [vmem:[%s5 + $0x78] sm:$0xff]
      %v2836 = vld [vmem:[%s6] sm:$0x1]
      %v2838 = vlaneseq
      %v2839 = vshrl.u32 %v2838, 7
      %v2840 = vsub.s32 0, %v2839
      %v2841 = vrot.slane %v2836, %v2840
      %2843 = vmatprep.subr.mxu0 0.0
      %2844 = vmatpush1.msra.mxu0 %v2820
      %2845 = vmatprep.subr.mxu0 0.0
      %2846 = vmatpush1.msra.mxu0 %v2821
      %2847 = vmatprep.subr.mxu0 0.0
      %2848 = vmatpush1.msra.mxu0 %v2822
      %2849 = vmatprep.subr.mxu0 0.0
      %2850 = vmatpush1.msra.mxu0 %v2823
      %2851 = vmatprep.subr.mxu0 0.0
      %2852 = vmatpush1.msra.mxu0 %v2824
      %2853 = vmatprep.subr.mxu0 0.0
      %2854 = vmatpush1.msra.mxu0 %v2825
      %2855 = vmatprep.subr.mxu0 0.0
      %2856 = vmatpush1.msra.mxu0 %v2826
      %2857 = vmatprep.subr.mxu0 0.0
      %2858 = vmatpush1.msra.mxu0 %v2827
      %2859 = vmatprep.subr.mxu0 0.0
      %2860 = vmatpush1.msra.mxu0 %v2828
      %2861 = vmatprep.subr.mxu0 0.0
      %2862 = vmatpush1.msra.mxu0 %v2829
      %2863 = vmatprep.subr.mxu0 0.0
      %2864 = vmatpush1.msra.mxu0 %v2830
      %2865 = vmatprep.subr.mxu0 0.0
      %2866 = vmatpush1.msra.mxu0 %v2831
      %2867 = vmatprep.subr.mxu0 0.0
      %2868 = vmatpush1.msra.mxu0 %v2832
      %2869 = vmatprep.subr.mxu0 0.0
      %2870 = vmatpush1.msra.mxu0 %v2833
      %2871 = vmatprep.subr.mxu0 0.0
      %2872 = vmatpush1.msra.mxu0 %v2834
      %2873 = vmatprep.subr.mxu0 0.0
      %2874 = vmatpush1.msra.mxu0 %v2835
      %2875 = vmatprep.subr.mxu0 0.0
      %2876 = vmatpush1.msra.mxu0 0.0
      %2877 = vmatprep.subr.mxu0 0.0
      %2878 = vmatpush1.msra.mxu0 0.0
      %2879 = vmatprep.subr.mxu0 0.0
      %2880 = vmatpush1.msra.mxu0 0.0
      %2881 = vmatprep.subr.mxu0 0.0
      %2882 = vmatpush1.msra.mxu0 0.0
      %2883 = vmatprep.subr.mxu0 0.0
      %2884 = vmatpush1.msra.mxu0 0.0
      %2885 = vmatprep.subr.mxu0 0.0
      %2886 = vmatpush1.msra.mxu0 0.0
      %2887 = vmatprep.subr.mxu0 0.0
      %2888 = vmatpush1.msra.mxu0 0.0
      %2889 = vmatprep.subr.mxu0 0.0
      %2890 = vmatpush1.msra.mxu0 0.0
      %2891 = vmatprep.subr.mxu0 0.0
      %2892 = vmatpush1.msra.mxu0 0.0
      %2893 = vmatprep.subr.mxu0 0.0
      %2894 = vmatpush1.msra.mxu0 0.0
      %2895 = vmatprep.subr.mxu0 0.0
      %2896 = vmatpush1.msra.mxu0 0.0
      %2897 = vmatprep.subr.mxu0 0.0
      %2898 = vmatpush1.msra.mxu0 0.0
      %2899 = vmatprep.subr.mxu0 0.0
      %2900 = vmatpush1.msra.mxu0 0.0
      %2901 = vmatprep.subr.mxu0 0.0
      %2902 = vmatpush1.msra.mxu0 0.0
      %2903 = vmatprep.subr.mxu0 0.0
      %2904 = vmatpush1.msra.mxu0 0.0
      %2905 = vmatprep.subr.mxu0 0.0
      %2906 = vmatpush1.msra.mxu0 0.0
      %2907 = vmatprep.mubr.f32.mxu0 0.0
      %2908 = vmatmul.mubr.f32.gmra.mrb[0].mxu0 %v2812
      %v2909 = vpop.f32.mrb[0].mxu0
      %v2910 = vadd.f32 %v2841, %v2909
      %v2911 = vpop.f32.mrb[0].mxu0
      %2912 = vmatprep.mubr.f32.mxu0 0.0
      %2913 = vmatmul.mubr.f32.gmra.mrb[0].mxu0 %v2813
      %v2914 = vpop.f32.mrb[0].mxu0
      %v2915 = vadd.f32 %v2841, %v2914
      %v2916 = vpop.f32.mrb[0].mxu0
      %2917 = vmatprep.mubr.f32.mxu0 0.0
      %2918 = vmatmul.mubr.f32.gmra.mrb[0].mxu0 %v2814
      %v2919 = vpop.f32.mrb[0].mxu0
      %v2920 = vadd.f32 %v2841, %v2919
      %v2921 = vpop.f32.mrb[0].mxu0
      %2922 = vmatprep.mubr.f32.mxu0 0.0
      %2923 = vmatmul.mubr.f32.gmra.mrb[0].mxu0 %v2815
      %v2924 = vpop.f32.mrb[0].mxu0
      %v2925 = vadd.f32 %v2841, %v2924
      %v2926 = vpop.f32.mrb[0].mxu0
      %2927 = vmatprep.mubr.f32.mxu0 0.0
      %2928 = vmatmul.mubr.f32.gmra.mrb[0].mxu0 %v2816
      %v2929 = vpop.f32.mrb[0].mxu0
      %v2930 = vadd.f32 %v2841, %v2929
      %v2931 = vpop.f32.mrb[0].mxu0
      %2932 = vmatprep.mubr.f32.mxu0 0.0
      %2933 = vmatmul.mubr.f32.gmra.mrb[0].mxu0 %v2817
      %v2934 = vpop.f32.mrb[0].mxu0
      %v2935 = vadd.f32 %v2841, %v2934
      %v2936 = vpop.f32.mrb[0].mxu0
      %2937 = vmatprep.mubr.f32.mxu0 0.0
      %2938 = vmatmul.mubr.f32.gmra.mrb[0].mxu0 %v2818
      %v2939 = vpop.f32.mrb[0].mxu0
      %v2940 = vadd.f32 %v2841, %v2939
      %v2941 = vpop.f32.mrb[0].mxu0
      %2942 = vmatprep.mubr.f32.mxu0 0.0
      %2943 = vmatmul.mubr.f32.gmra.mrb[0].mxu0 %v2819
      %v2944 = vpop.f32.mrb[0].mxu0
      %v2945 = vadd.f32 %v2841, %v2944
      %v2946 = vpop.f32.mrb[0].mxu0
      %2947 = vdwg.mxu0
      %v2948 = vadd.f32 %v2804, %v2910
      %v2949 = vadd.f32 %v2805, %v2915
      %v2950 = vadd.f32 %v2806, %v2920
      %v2951 = vadd.f32 %v2807, %v2925
      %v2952 = vadd.f32 %v2808, %v2930
      %v2953 = vadd.f32 %v2809, %v2935
      %v2954 = vadd.f32 %v2810, %v2940
      %v2955 = vadd.f32 %v2811, %v2945
      %v2956 = vmax.f32 %v2948, 0.0
      %v2957 = vmax.f32 %v2949, 0.0
      %v2958 = vmax.f32 %v2950, 0.0
      %v2959 = vmax.f32 %v2951, 0.0
      %v2960 = vmax.f32 %v2952, 0.0
      %v2961 = vmax.f32 %v2953, 0.0
      %v2962 = vmax.f32 %v2954, 0.0
      %v2963 = vmax.f32 %v2955, 0.0
      %2964 = vst [vmem:[%s283] sm:$0xff] %v2956
      %2965 = vst [vmem:[%s283 + $0x8] sm:$0xff] %v2957
      %2966 = vst [vmem:[%s283 + $0x10] sm:$0xff] %v2958
      %2967 = vst [vmem:[%s283 + $0x18] sm:$0xff] %v2959
      %2968 = vst [vmem:[%s283 + $0x20] sm:$0xff] %v2960
      %2969 = vst [vmem:[%s283 + $0x28] sm:$0xff] %v2961
      %2970 = vst [vmem:[%s283 + $0x30] sm:$0xff] %v2962
      %2971 = vst [vmem:[%s283 + $0x38] sm:$0xff] %v2963
      %p2972 = scmp.lt.s32.totalorder %s18, 1
      %s2973 = scalar_select %p2972, %s18, 1
      %s2974 = smul.addr %s2973, 8
      %s2975 = smul.addr %s2974, 8
      %s2976 = scalar_lea.vmem %s7, %s2975
      // Predicated region
      $region49: #{residual_block_forward.1} parent=47 // pred_check
        %p2977 = pneg %p188
      $region50: #{residual_block_forward.1} parent=47 // pred_check_branch
        %2979 = sbr.rel (%p2977) target = $region52
      $region51: #{residual_block_forward.1} parent=47 // pred_region
        _
      $region52: #{residual_block_forward.1} parent=47 // pred_fallthru
        _
    $region48: #{residual_block_forward.1} parent=5 // pred_fallthru
      _
    %p2980 = scmp.le.s32.totalorder 2, %s13
    // Predicated region
    $region53: #{residual_block_forward.1} parent=5 // pred_check
      %p2981 = pneg %p2980
    $region54: #{residual_block_forward.1} parent=5 // pred_check_branch
      %2983 = sbr.rel (%p2981) target = $region56
    $region55: #{residual_block_forward.1} parent=5 // pred_region
      %s2984 = ssub.s32 %s13, 2
      // Predicated region
      $region57: #{residual_block_forward.1} parent=55 // pred_check
        %p2985 = pneg %p194
      $region58: #{residual_block_forward.1} parent=55 // pred_check_branch
        %2987 = sbr.rel (%p2985) target = $region60
      $region59: #{residual_block_forward.1} parent=55 // pred_region
        %p2988 = scmp.lt.s32.totalorder %s19, 1
        %s2989 = scalar_select %p2988, %s19, 1
        %s2990 = smul.addr %s2989, 8
        %s2991 = smul.addr %s2990, 8
        %s2992 = scalar_lea.vmem %s7, %s2991
      $region60: #{residual_block_forward.1} parent=55 // pred_fallthru
        _
    $region56: #{residual_block_forward.1} parent=5 // pred_fallthru
      _
  $region6: #{residual_block_forward.1} parent=0 // loop_footer
    %s17 = sadd.s32 1, %s13
  $region7: #{residual_block_forward.1} parent=0 // loop_footer_branch
    %12 = sbr.rel target = $region3
  $region8: #{residual_block_forward.1} parent=0 // loop_exit
    _

</llo_original>
